<compile_context>
chip_gen: v7x
topology: tpu7x:2x2x1
jax: 0.10.0
libtpu: 0.0.40
codegen_flags: <defaults>
</compile_context>

<pallas_src>
import math
import functools

import jax
import jax.numpy as jnp
from jax.experimental import pallas as pl
from jax.experimental.pallas import tpu as pltpu

MXU_DTYPE = jnp.bfloat16          # matmul operand dtype (accumulation is always f32)
LN_EPS = 1e-5                     # torch.nn.LayerNorm default
MASK_FILL = -1e10                 # matches masked_fill(mask == 0, -1e10)


def _vmem_limit_bytes():
    """Scoped-VMEM budget per generation: ~3/4 of physical, capped at 96 MiB
    (v5e/v6e: 128 MiB -> 96 MiB; v7x: 64 MiB -> 48 MiB)."""
    try:
        cap = pltpu.get_tpu_info().vmem_capacity_bytes
        return int(min(cap * 3 // 4, 96 * 1024 * 1024))
    except Exception:
        return 48 * 1024 * 1024


VMEM_LIMIT = _vmem_limit_bytes()


def _cparams(n_parallel_axes):
    return pltpu.CompilerParams(
        dimension_semantics=("parallel",) * n_parallel_axes,
        vmem_limit_bytes=VMEM_LIMIT)


def _pick_tile(n, multiple, cap):
    """Largest multiple-of-`multiple` tile <= cap that evenly divides n (else n)."""
    if n <= cap:
        return n
    t = cap - (cap % multiple)
    while t >= multiple:
        if n % t == 0:
            return t
        t -= multiple
    # TODO(synk): no clean divisor -> whole dim; switch to cdiv grid + masked tail tile.
    return n


# ----------------------- fused attention sub-layer -----------------------
# out = LayerNorm(xq + (MHA(xq, xkv, xkv) @ Wo + bo))

def _attn_sublayer_body(xq_ref, xkv_ref, mask_ref, wq_ref, bq_ref, wkv_ref,
                        bkv_ref, wo_ref, bo_ref, g_ref, beta_ref,
                        o_ref, attn_ref, ctx_ref, *, n_heads, inv_scale, eps,
                        exact_softmax):
    xq = xq_ref[0]                       # (tq, D) f32 -- query rows; also the residual
    xkv = xkv_ref[0]                     # (Lk, D) f32
    keep = mask_ref[0, 0] != 0           # (tq or 1, Lk) bool; broadcasts over rows/heads

    D = xq.shape[-1]
    dh = D // n_heads

    # fused projections: q = xq @ Wq, [k|v] = xkv @ [Wk|Wv]  (bf16 MXU, f32 acc)
    q = jnp.dot(xq.astype(MXU_DTYPE), wq_ref[...],
                preferred_element_type=jnp.float32) + bq_ref[...]
    kv = jnp.dot(xkv.astype(MXU_DTYPE), wkv_ref[...],
                 preferred_element_type=jnp.float32) + bkv_ref[...]
    k = kv[:, :D]
    v = kv[:, D:]
    q = q * inv_scale                    # fold 1/sqrt(head_dim) once into q

    for h in range(n_heads):             # static unroll over heads (in-VMEM slices)
        sl = slice(h * dh, (h + 1) * dh)
        e = jnp.einsum('qd,kd->qk', q[:, sl].astype(MXU_DTYPE),
                       k[:, sl].astype(MXU_DTYPE),
                       preferred_element_type=jnp.float32)        # (tq, Lk) f32
        e = jnp.where(keep, e, MASK_FILL)                         # exact masked_fill
        m = jnp.max(e, axis=-1, keepdims=True)
        p = jnp.exp(e - m)
        s = jnp.sum(p, axis=-1, keepdims=True)
        if exact_softmax:
            attn = p / s                                          # exact (probs are emitted)
        else:
            attn = p * pl.reciprocal(s, approx=True)              # EUP reciprocal

        if attn_ref is not None:
            attn_ref[0, h] = attn

        # write per-head context into VMEM scratch (no list + concat / lane relayout)
        ctx_ref[:, sl] = jnp.dot(attn.astype(MXU_DTYPE), v[:, sl].astype(MXU_DTYPE),
                                 preferred_element_type=jnp.float32)

    proj = jnp.dot(ctx_ref[...].astype(MXU_DTYPE), wo_ref[...],
                   preferred_element_type=jnp.float32) + bo_ref[...]

    # residual + LayerNorm (biased variance, as in torch), all in f32
    z = xq + proj
    mean = jnp.mean(z, axis=-1, keepdims=True)
    var = jnp.mean((z - mean) ** 2, axis=-1, keepdims=True)
    zn = (z - mean) * jax.lax.rsqrt(var + eps)
    o_ref[0] = zn * g_ref[...] + beta_ref[...]


def _attn_kernel(xq_ref, xkv_ref, mask_ref, wq_ref, bq_ref, wkv_ref, bkv_ref,
                 wo_ref, bo_ref, g_ref, beta_ref, o_ref, ctx_ref, *,
                 n_heads, inv_scale, eps):
    _attn_sublayer_body(xq_ref, xkv_ref, mask_ref, wq_ref, bq_ref, wkv_ref,
                        bkv_ref, wo_ref, bo_ref, g_ref, beta_ref, o_ref,
                        None, ctx_ref, n_heads=n_heads, inv_scale=inv_scale,
                        eps=eps, exact_softmax=False)


def _attn_kernel_with_probs(xq_ref, xkv_ref, mask_ref, wq_ref, bq_ref, wkv_ref,
                            bkv_ref, wo_ref, bo_ref, g_ref, beta_ref,
                            o_ref, attn_ref, ctx_ref, *, n_heads, inv_scale, eps):
    _attn_sublayer_body(xq_ref, xkv_ref, mask_ref, wq_ref, bq_ref, wkv_ref,
                        bkv_ref, wo_ref, bo_ref, g_ref, beta_ref, o_ref,
                        attn_ref, ctx_ref, n_heads=n_heads, inv_scale=inv_scale,
                        eps=eps, exact_softmax=True)


def attention_sublayer(xq, xkv, keep_mask, p, gamma, beta, n_heads,
                       return_attn=False):
    """Fused MHA + output projection + residual + LayerNorm.

    Grid = (batch, query-row tiles); both axes parallel.  keep_mask is a bf16 {0,1}
    tensor of shape (B, 1, Lq, Lk) or (B, 1, 1, Lk) (broadcast over rows in-kernel).
    """
    B, Lq, D = xq.shape
    Lk = xkv.shape[1]
    inv_scale = 1.0 / math.sqrt(D // n_heads)

    tq = _pick_tile(Lq, 16, 256)          # multiple of 16 (bf16 mask sublane) or full Lq
    nq = Lq // tq
    mq = keep_mask.shape[2]               # Lq (trg mask) or 1 (src mask)

    if mq == 1:
        mask_spec = pl.BlockSpec((1, 1, 1, Lk), lambda b, qi: (b, 0, 0, 0))
    else:
        mask_spec = pl.BlockSpec((1, 1, tq, Lk), lambda b, qi: (b, 0, qi, 0))

    in_specs = [
        pl.BlockSpec((1, tq, D), lambda b, qi: (b, qi, 0)),     # xq (query + residual)
        pl.BlockSpec((1, Lk, D), lambda b, qi: (b, 0, 0)),      # xkv (constant over qi)
        mask_spec,                                              # bf16 keep-mask
        pl.BlockSpec((D, D), lambda b, qi: (0, 0)),             # Wq (bf16)
        pl.BlockSpec((1, D), lambda b, qi: (0, 0)),             # bq
        pl.BlockSpec((D, 2 * D), lambda b, qi: (0, 0)),         # [Wk|Wv] (bf16)
        pl.BlockSpec((1, 2 * D), lambda b, qi: (0, 0)),         # [bk|bv]
        pl.BlockSpec((D, D), lambda b, qi: (0, 0)),             # Wo (bf16)
        pl.BlockSpec((1, D), lambda b, qi: (0, 0)),             # bo
        pl.BlockSpec((1, D), lambda b, qi: (0, 0)),             # LN gamma
        pl.BlockSpec((1, D), lambda b, qi: (0, 0)),             # LN beta
    ]
    args = (xq, xkv, keep_mask, p['wq'], p['bq'], p['wkv'], p['bkv'],
            p['wo'], p['bo'], gamma, beta)

    out_block = pl.BlockSpec((1, tq, D), lambda b, qi: (b, qi, 0))
    out_shape = jax.ShapeDtypeStruct((B, Lq, D), jnp.float32)
    scratch = [pltpu.VMEM((tq, D), jnp.float32)]                # per-tile head-merged ctx

    if return_attn:
        kernel = functools.partial(_attn_kernel_with_probs, n_heads=n_heads,
                                   inv_scale=inv_scale, eps=LN_EPS)
        out, attn = pl.pallas_call(
            kernel,
            grid=(B, nq),
            in_specs=in_specs,
            out_specs=(out_block,
                       pl.BlockSpec((1, n_heads, tq, Lk), lambda b, qi: (b, 0, qi, 0))),
            out_shape=(out_shape,
                       jax.ShapeDtypeStruct((B, n_heads, Lq, Lk), jnp.float32)),
            scratch_shapes=scratch,
            compiler_params=_cparams(2),
        )(*args)
        return out, attn

    kernel = functools.partial(_attn_kernel, n_heads=n_heads,
                               inv_scale=inv_scale, eps=LN_EPS)
    out = pl.pallas_call(
        kernel,
        grid=(B, nq),
        in_specs=in_specs,
        out_specs=out_block,
        out_shape=out_shape,
        scratch_shapes=scratch,
        compiler_params=_cparams(2),
    )(*args)
    return out, None


# ----------------------- fused FFN sub-layer -----------------------
# out = LayerNorm(x + fc2(relu(fc1(x))))

def _fused_ffn_kernel(x_ref, w1_ref, b1_ref, w2_ref, b2_ref, g_ref, beta_ref,
                      o_ref, *, eps):
    x = x_ref[...]                                               # (tm, D) f32
    h = jnp.dot(x.astype(MXU_DTYPE), w1_ref[...],
                preferred_element_type=jnp.float32) + b1_ref[...]
    h = jnp.maximum(h, 0.0)                                      # relu (f32)
    y = jnp.dot(h.astype(MXU_DTYPE), w2_ref[...],
                preferred_element_type=jnp.float32) + b2_ref[...]
    z = x + y                                                    # residual
    mean = jnp.mean(z, axis=-1, keepdims=True)
    var = jnp.mean((z - mean) ** 2, axis=-1, keepdims=True)
    zn = (z - mean) * jax.lax.rsqrt(var + eps)
    o_ref[...] = zn * g_ref[...] + beta_ref[...]


def ffn_sublayer(x, lp):
    B, L, D = x.shape
    M = B * L
    P = lp['ff_w1'].shape[1]
    x2 = x.reshape(M, D)
    tm = _pick_tile(M, 8, 512)
    # weight blocks use constant indices -> fetched once for the whole grid
    out = pl.pallas_call(
        functools.partial(_fused_ffn_kernel, eps=LN_EPS),
        grid=(M // tm,),
        in_specs=[pl.BlockSpec((tm, D), lambda i: (i, 0)),
                  pl.BlockSpec((D, P), lambda i: (0, 0)),
                  pl.BlockSpec((1, P), lambda i: (0, 0)),
                  pl.BlockSpec((P, D), lambda i: (0, 0)),
                  pl.BlockSpec((1, D), lambda i: (0, 0)),
                  pl.BlockSpec((1, D), lambda i: (0, 0)),
                  pl.BlockSpec((1, D), lambda i: (0, 0))],
        out_specs=pl.BlockSpec((tm, D), lambda i: (i, 0)),
        out_shape=jax.ShapeDtypeStruct((M, D), jnp.float32),
        compiler_params=_cparams(1),
    )(x2, lp['ff_w1'], lp['ff_b1'], lp['ff_w2'], lp['ff_b2'],
      lp['ln3_g'], lp['ln3_b'])
    return out.reshape(B, L, D)


# ----------------------- final vocab projection -----------------------
# Grid = (vocab tiles, row tiles) with rows innermost so each DxN weight tile is
# streamed from HBM once and reused across all row tiles.

def _out_proj_kernel(x_ref, w_ref, b_ref, o_ref):
    o_ref[...] = jnp.dot(x_ref[...].astype(MXU_DTYPE), w_ref[...],
                         preferred_element_type=jnp.float32) + b_ref[...]


def output_projection(x2d, w, b):
    M, D = x2d.shape
    N = w.shape[1]                        # already padded to a multiple of 128
    tm = _pick_tile(M, 8, 512)
    tn = _pick_tile(N, 128, 2048)
    return pl.pallas_call(
        _out_proj_kernel,
        grid=(N // tn, M // tm),          # row axis is innermost (fastest)
        in_specs=[pl.BlockSpec((tm, D), lambda j, i: (i, 0)),
                  pl.BlockSpec((D, tn), lambda j, i: (0, j)),    # constant over inner loop
                  pl.BlockSpec((1, tn), lambda j, i: (0, j))],
        out_specs=pl.BlockSpec((tm, tn), lambda j, i: (i, j)),
        out_shape=jax.ShapeDtypeStruct((M, N), jnp.float32),
        compiler_params=_cparams(2),
    )(x2d, w, b)


# ----------------------- model glue -----------------------

def decoder_forward(trg_tokens, enc_src, trg_mask, src_mask, params, n_heads,
                    vocab_size):
    B, Lt = trg_tokens.shape
    D = params['tok_emb'].shape[1]

    # TODO(synk): embedding-table gather + scale + pos-add stay in plain JAX (XLA fuses
    # them with the gather; not worth a separate pallas_call launch).
    tok = jnp.take(params['tok_emb'], trg_tokens, axis=0)               # (B, Lt, D)
    pos = jnp.take(params['pos_emb'], jnp.arange(Lt), axis=0)           # (Lt, D)
    x = tok * math.sqrt(D) + pos[None]

    # compact bf16 {0,1} keep-masks in their natural shapes (no head / row broadcast)
    if trg_mask.ndim == 3:
        trg_mask = trg_mask[:, None]
    if src_mask.ndim == 3:
        src_mask = src_mask[:, None]
    trg_keep = (trg_mask != 0).astype(jnp.bfloat16)                     # (B,1,Lt,Lt)
    src_keep = (src_mask != 0).astype(jnp.bfloat16)                     # (B,1,1,Ls)

    attention = None
    n_layers = len(params['layers'])
    for li, lp in enumerate(params['layers']):
        # self-attention + residual + LN1 (no attention-prob writeback)
        x, _ = attention_sublayer(x, x, trg_keep, lp['sa'],
                                  lp['ln1_g'], lp['ln1_b'], n_heads,
                                  return_attn=False)
        # cross-attention + residual + LN2 (probs only for the last layer, exact softmax)
        want_attn = (li == n_layers - 1)
        x, attn = attention_sublayer(x, enc_src, src_keep, lp['ea'],
                                     lp['ln2_g'], lp['ln2_b'], n_heads,
                                     return_attn=want_attn)
        if want_attn:
            attention = attn
        # FFN + residual + LN3
        x = ffn_sublayer(x, lp)

    logits = output_projection(x.reshape(B * Lt, D),
                               params['fc_out_w'], params['fc_out_b'])
    logits = logits[:, :vocab_size]          # drop lane-padding columns (plain JAX slice)
    return logits.reshape(B, Lt, vocab_size), attention


# ----------------------- params -----------------------

def init_params(key, output_dim, hid_dim, n_layers, n_heads, pf_dim, max_length):
    """Torch-layout parameters (Linear weights stored as (in, out))."""
    def dense(k, fin, fout):
        kw, kb = jax.random.split(k)
        bound = 1.0 / math.sqrt(fin)
        w = jax.random.uniform(kw, (fin, fout), jnp.float32, -bound, bound)
        b = jax.random.uniform(kb, (fout,), jnp.float32, -bound, bound)
        return w, b

    keys = jax.random.split(key, 3 + n_layers)
    params = {
        'tok_emb': jax.random.normal(keys[0], (output_dim, hid_dim), jnp.float32),
        'pos_emb': jax.random.normal(keys[1], (max_length, hid_dim), jnp.float32),
    }
    params['fc_out_w'], params['fc_out_b'] = dense(keys[2], hid_dim, output_dim)

    layers = []
    for l in range(n_layers):
        lk = jax.random.split(keys[3 + l], 10)
        sa, ea = {}, {}
        sa['wq'], sa['bq'] = dense(lk[0], hid_dim, hid_dim)
        sa['wk'], sa['bk'] = dense(lk[1], hid_dim, hid_dim)
        sa['wv'], sa['bv'] = dense(lk[2], hid_dim, hid_dim)
        sa['wo'], sa['bo'] = dense(lk[3], hid_dim, hid_dim)
        ea['wq'], ea['bq'] = dense(lk[4], hid_dim, hid_dim)
        ea['wk'], ea['bk'] = dense(lk[5], hid_dim, hid_dim)
        ea['wv'], ea['bv'] = dense(lk[6], hid_dim, hid_dim)
        ea['wo'], ea['bo'] = dense(lk[7], hid_dim, hid_dim)
        ffw1, ffb1 = dense(lk[8], hid_dim, pf_dim)
        ffw2, ffb2 = dense(lk[9], pf_dim, hid_dim)
        layers.append({
            'sa': sa, 'ea': ea,
            'ff_w1': ffw1, 'ff_b1': ffb1, 'ff_w2': ffw2, 'ff_b2': ffb2,
            'ln1_g': jnp.ones((hid_dim,), jnp.float32), 'ln1_b': jnp.zeros((hid_dim,), jnp.float32),
            'ln2_g': jnp.ones((hid_dim,), jnp.float32), 'ln2_b': jnp.zeros((hid_dim,), jnp.float32),
            'ln3_g': jnp.ones((hid_dim,), jnp.float32), 'ln3_b': jnp.zeros((hid_dim,), jnp.float32),
        })
    params['layers'] = layers
    return params


def _prep_mha(p):
    return {
        'wq': p['wq'].astype(MXU_DTYPE),
        'bq': p['bq'].reshape(1, -1),
        'wkv': jnp.concatenate([p['wk'], p['wv']], axis=1).astype(MXU_DTYPE),
        'bkv': jnp.concatenate([p['bk'], p['bv']], axis=0).reshape(1, -1),
        'wo': p['wo'].astype(MXU_DTYPE),
        'bo': p['bo'].reshape(1, -1),
    }


def _pad_last_dim(a, mult=128):
    pad = (-a.shape[-1]) % mult
    if pad:
        a = jnp.pad(a, [(0, 0)] * (a.ndim - 1) + [(0, pad)])
    return a


def prepare_params(raw):
    """One-time conversion to the fused-kernel layout: K/V weights concatenated,
    matmul weights bf16, biases / LN params 2-D f32, vocab padded to 128 lanes."""
    prepared = {
        'tok_emb': raw['tok_emb'],
        'pos_emb': raw['pos_emb'],
        'fc_out_w': _pad_last_dim(raw['fc_out_w'].astype(MXU_DTYPE)),
        'fc_out_b': _pad_last_dim(raw['fc_out_b'].reshape(1, -1)),
        'layers': [],
    }
    for lp in raw['layers']:
        prepared['layers'].append({
            'sa': _prep_mha(lp['sa']),
            'ea': _prep_mha(lp['ea']),
            'ff_w1': lp['ff_w1'].astype(MXU_DTYPE),
            'ff_b1': lp['ff_b1'].reshape(1, -1),
            'ff_w2': lp['ff_w2'].astype(MXU_DTYPE),
            'ff_b2': lp['ff_b2'].reshape(1, -1),
            'ln1_g': lp['ln1_g'].reshape(1, -1), 'ln1_b': lp['ln1_b'].reshape(1, -1),
            'ln2_g': lp['ln2_g'].reshape(1, -1), 'ln2_b': lp['ln2_b'].reshape(1, -1),
            'ln3_g': lp['ln3_g'].reshape(1, -1), 'ln3_b': lp['ln3_b'].reshape(1, -1),
        })
    return prepared


if __name__ == "__main__":
    # small, forward-consistent shapes
    B, Lt, Ls = 2, 8, 8
    output_dim = 50     # target vocab
    hid_dim = 32
    n_layers = 2
    n_heads = 4
    pf_dim = 64
    max_length = 16

    root = jax.random.PRNGKey(0)
    kp, kt, ke = jax.random.split(root, 3)

    raw_params = init_params(kp, output_dim, hid_dim, n_layers, n_heads, pf_dim, max_length)
    params = prepare_params(raw_params)

    trg = jax.random.randint(kt, (B, Lt), 0, output_dim)                     # token ids
    enc_src = jax.random.normal(ke, (B, Ls, hid_dim), jnp.float32)           # encoder output
    trg_mask = jnp.broadcast_to(jnp.tril(jnp.ones((Lt, Lt), jnp.int32))[None, None],
                                (B, 1, Lt, Lt))                              # causal mask
    src_mask = jnp.ones((B, 1, 1, Ls), jnp.int32)                            # no padding

    fwd = jax.jit(decoder_forward, static_argnames=('n_heads', 'vocab_size'))
    out, attention = fwd(trg, enc_src, trg_mask, src_mask, params,
                         n_heads=n_heads, vocab_size=output_dim)
    jax.block_until_ready((out, attention))
    assert out.shape == (B, Lt, output_dim)
    assert attention.shape == (B, n_heads, Lt, Ls)
    print("KERNEL_OK")
</pallas_src>

<mosaic_0001>
module attributes {stable_mosaic.version = 11 : i64} {
  func.func @_attn_kernel(%arg0: i32, %arg1: i32, %arg2: memref<1x8x32xf32, #tpu.memory_space<vmem>>, %arg3: memref<1x8x32xf32, #tpu.memory_space<vmem>>, %arg4: memref<1x1x8x8xbf16, #tpu.memory_space<vmem>>, %arg5: memref<32x32xbf16, #tpu.memory_space<vmem>>, %arg6: memref<1x32xf32, #tpu.memory_space<vmem>>, %arg7: memref<32x64xbf16, #tpu.memory_space<vmem>>, %arg8: memref<1x64xf32, #tpu.memory_space<vmem>>, %arg9: memref<32x32xbf16, #tpu.memory_space<vmem>>, %arg10: memref<1x32xf32, #tpu.memory_space<vmem>>, %arg11: memref<1x32xf32, #tpu.memory_space<vmem>>, %arg12: memref<1x32xf32, #tpu.memory_space<vmem>>, %arg13: memref<1x8x32xf32, #tpu.memory_space<vmem>>, %arg14: memref<8x32xf32, #tpu.memory_space<vmem>>) attributes {dimension_semantics = [#tpu.dimension_semantics<parallel>, #tpu.dimension_semantics<parallel>], iteration_bounds = array<i64: 2, 1>, scalar_prefetch = 0 : i64, scratch_operands = 1 : i64, tpu.core_type = #tpu.core_type<tc>, window_params = [{transform_indices = @transform_0, window_bounds = array<i64: 1, 8, 32>}, {transform_indices = @transform_1, window_bounds = array<i64: 1, 8, 32>}, {transform_indices = @transform_2, window_bounds = array<i64: 1, 1, 8, 8>}, {pipeline_mode = #tpu.pipeline_mode<synchronous>, transform_indices = @transform_3, window_bounds = array<i64: 32, 32>}, {pipeline_mode = #tpu.pipeline_mode<synchronous>, transform_indices = @transform_4, window_bounds = array<i64: 1, 32>}, {pipeline_mode = #tpu.pipeline_mode<synchronous>, transform_indices = @transform_5, window_bounds = array<i64: 32, 64>}, {pipeline_mode = #tpu.pipeline_mode<synchronous>, transform_indices = @transform_6, window_bounds = array<i64: 1, 64>}, {pipeline_mode = #tpu.pipeline_mode<synchronous>, transform_indices = @transform_7, window_bounds = array<i64: 32, 32>}, {pipeline_mode = #tpu.pipeline_mode<synchronous>, transform_indices = @transform_8, window_bounds = array<i64: 1, 32>}, {pipeline_mode = #tpu.pipeline_mode<synchronous>, transform_indices = @transform_9, window_bounds = array<i64: 1, 32>}, {pipeline_mode = #tpu.pipeline_mode<synchronous>, transform_indices = @transform_10, window_bounds = array<i64: 1, 32>}, {transform_indices = @transform_11, window_bounds = array<i64: 1, 8, 32>}]} {
    %c0 = arith.constant 0 : index
    %c0_0 = arith.constant 0 : index
    %c0_1 = arith.constant 0 : index
    %0 = vector.load %arg2[%c0, %c0_0, %c0_1] : memref<1x8x32xf32, #tpu.memory_space<vmem>>, vector<1x8x32xf32>
    %1 = vector.shape_cast %0 : vector<1x8x32xf32> to vector<8x32xf32>
    %c0_2 = arith.constant 0 : index
    %c0_3 = arith.constant 0 : index
    %c0_4 = arith.constant 0 : index
    %2 = vector.load %arg3[%c0_2, %c0_3, %c0_4] : memref<1x8x32xf32, #tpu.memory_space<vmem>>, vector<1x8x32xf32>
    %3 = vector.shape_cast %2 : vector<1x8x32xf32> to vector<8x32xf32>
    %c0_5 = arith.constant 0 : index
    %c0_6 = arith.constant 0 : index
    %c0_7 = arith.constant 0 : index
    %c0_8 = arith.constant 0 : index
    %4 = vector.load %arg4[%c0_5, %c0_6, %c0_7, %c0_8] : memref<1x1x8x8xbf16, #tpu.memory_space<vmem>>, vector<1x1x8x8xbf16>
    %5 = vector.shape_cast %4 : vector<1x1x8x8xbf16> to vector<8x8xbf16>
    %cst = arith.constant 0.000000e+00 : bf16
    %6 = vector.broadcast %cst : bf16 to vector<8x8xbf16>
    %7 = arith.cmpf one, %5, %6 : vector<8x8xbf16>
    %8 = arith.truncf %1 : vector<8x32xf32> to vector<8x32xbf16>
    %c0_9 = arith.constant 0 : index
    %c0_10 = arith.constant 0 : index
    %9 = vector.load %arg5[%c0_9, %c0_10] : memref<32x32xbf16, #tpu.memory_space<vmem>>, vector<32x32xbf16>
    %cst_11 = arith.constant dense<0.000000e+00> : vector<8x32xf32>
    %10 = tpu.matmul %8, %9, %cst_11 {dimension_numbers = #tpu.dot_dimension_numbers<[1], [0], [0], [1], [0, 0, 1, 1], [], []>} : vector<8x32xbf16>, vector<32x32xbf16>, vector<8x32xf32> -> vector<8x32xf32>
    %c0_12 = arith.constant 0 : index
    %c0_13 = arith.constant 0 : index
    %11 = vector.load %arg6[%c0_12, %c0_13] : memref<1x32xf32, #tpu.memory_space<vmem>>, vector<1x32xf32>
    %12 = vector.broadcast %11 : vector<1x32xf32> to vector<8x32xf32>
    %13 = arith.addf %10, %12 : vector<8x32xf32>
    %14 = arith.truncf %3 : vector<8x32xf32> to vector<8x32xbf16>
    %c0_14 = arith.constant 0 : index
    %c0_15 = arith.constant 0 : index
    %15 = vector.load %arg7[%c0_14, %c0_15] : memref<32x64xbf16, #tpu.memory_space<vmem>>, vector<32x64xbf16>
    %cst_16 = arith.constant dense<0.000000e+00> : vector<8x64xf32>
    %16 = tpu.matmul %14, %15, %cst_16 {dimension_numbers = #tpu.dot_dimension_numbers<[1], [0], [0], [1], [0, 0, 1, 1], [], []>} : vector<8x32xbf16>, vector<32x64xbf16>, vector<8x64xf32> -> vector<8x64xf32>
    %c0_17 = arith.constant 0 : index
    %c0_18 = arith.constant 0 : index
    %17 = vector.load %arg8[%c0_17, %c0_18] : memref<1x64xf32, #tpu.memory_space<vmem>>, vector<1x64xf32>
    %18 = vector.broadcast %17 : vector<1x64xf32> to vector<8x64xf32>
    %19 = arith.addf %16, %18 : vector<8x64xf32>
    %20 = vector.extract_strided_slice %19 {offsets = [0, 0], sizes = [8, 32], strides = [1, 1]} : vector<8x64xf32> to vector<8x32xf32>
    %21 = vector.extract_strided_slice %19 {offsets = [0, 32], sizes = [8, 32], strides = [1, 1]} : vector<8x64xf32> to vector<8x32xf32>
    %cst_19 = arith.constant 0.353553385 : f32
    %22 = vector.broadcast %cst_19 : f32 to vector<8x32xf32>
    %23 = arith.mulf %13, %22 : vector<8x32xf32>
    %24 = vector.extract_strided_slice %23 {offsets = [0, 0], sizes = [8, 8], strides = [1, 1]} : vector<8x32xf32> to vector<8x8xf32>
    %25 = arith.truncf %24 : vector<8x8xf32> to vector<8x8xbf16>
    %26 = vector.extract_strided_slice %20 {offsets = [0, 0], sizes = [8, 8], strides = [1, 1]} : vector<8x32xf32> to vector<8x8xf32>
    %27 = arith.truncf %26 : vector<8x8xf32> to vector<8x8xbf16>
    "tpu.trace_start"() <{level = 10 : i32, message = "qd,kd->qk"}> : () -> ()
    %cst_20 = arith.constant dense<0.000000e+00> : vector<8x8xf32>
    %28 = tpu.matmul %25, %27, %cst_20 {dimension_numbers = #tpu.dot_dimension_numbers<[1], [1], [0], [0], [0, 0, 1, 0], [], []>} : vector<8x8xbf16>, vector<8x8xbf16>, vector<8x8xf32> -> vector<8x8xf32>
    %cst_21 = arith.constant -1.000000e+10 : f32
    "tpu.trace_stop"() : () -> ()
    %29 = vector.broadcast %cst_21 : f32 to vector<8x8xf32>
    %30 = arith.select %7, %28, %29 : vector<8x8xi1>, vector<8x8xf32>
    %cst_22 = arith.constant dense<0xFF800000> : vector<8xf32>
    %31 = vector.multi_reduction <maximumf>, %30, %cst_22 [1] : vector<8x8xf32> to vector<8xf32>
    %32 = vector.shape_cast %31 : vector<8xf32> to vector<8x1xf32>
    %33 = vector.broadcast %32 : vector<8x1xf32> to vector<8x8xf32>
    %34 = arith.subf %30, %33 : vector<8x8xf32>
    %35 = math.exp %34 : vector<8x8xf32>
    %cst_23 = arith.constant dense<0.000000e+00> : vector<8xf32>
    %36 = vector.multi_reduction <add>, %35, %cst_23 [1] : vector<8x8xf32> to vector<8xf32>
    %37 = vector.shape_cast %36 : vector<8xf32> to vector<8x1xf32>
    %38 = tpu.reciprocal %37 {approx = true} : vector<8x1xf32> -> vector<8x1xf32>
    %39 = vector.broadcast %38 : vector<8x1xf32> to vector<8x8xf32>
    %40 = arith.mulf %35, %39 : vector<8x8xf32>
    %41 = arith.truncf %40 : vector<8x8xf32> to vector<8x8xbf16>
    %42 = vector.extract_strided_slice %21 {offsets = [0, 0], sizes = [8, 8], strides = [1, 1]} : vector<8x32xf32> to vector<8x8xf32>
    %43 = arith.truncf %42 : vector<8x8xf32> to vector<8x8xbf16>
    %cst_24 = arith.constant dense<0.000000e+00> : vector<8x8xf32>
    %44 = tpu.matmul %41, %43, %cst_24 {dimension_numbers = #tpu.dot_dimension_numbers<[1], [0], [0], [1], [0, 0, 1, 1], [], []>} : vector<8x8xbf16>, vector<8x8xbf16>, vector<8x8xf32> -> vector<8x8xf32>
    %c0_25 = arith.constant 0 : index
    %c0_26 = arith.constant 0 : index
    %45 = vector.load %arg14[%c0_25, %c0_26] : memref<8x32xf32, #tpu.memory_space<vmem>>, vector<8x8xf32>
    tpu.vector_store %arg14[%c0_25, %c0_26], %44 {strides = array<i32>} : memref<8x32xf32, #tpu.memory_space<vmem>>, vector<8x8xf32>,
    %46 = vector.extract_strided_slice %23 {offsets = [0, 8], sizes = [8, 8], strides = [1, 1]} : vector<8x32xf32> to vector<8x8xf32>
    %47 = arith.truncf %46 : vector<8x8xf32> to vector<8x8xbf16>
    %48 = vector.extract_strided_slice %20 {offsets = [0, 8], sizes = [8, 8], strides = [1, 1]} : vector<8x32xf32> to vector<8x8xf32>
    %49 = arith.truncf %48 : vector<8x8xf32> to vector<8x8xbf16>
    "tpu.trace_start"() <{level = 10 : i32, message = "qd,kd->qk"}> : () -> ()
    %cst_27 = arith.constant dense<0.000000e+00> : vector<8x8xf32>
    %50 = tpu.matmul %47, %49, %cst_27 {dimension_numbers = #tpu.dot_dimension_numbers<[1], [1], [0], [0], [0, 0, 1, 0], [], []>} : vector<8x8xbf16>, vector<8x8xbf16>, vector<8x8xf32> -> vector<8x8xf32>
    %cst_28 = arith.constant -1.000000e+10 : f32
    "tpu.trace_stop"() : () -> ()
    %51 = vector.broadcast %cst_28 : f32 to vector<8x8xf32>
    %52 = arith.select %7, %50, %51 : vector<8x8xi1>, vector<8x8xf32>
    %cst_29 = arith.constant dense<0xFF800000> : vector<8xf32>
    %53 = vector.multi_reduction <maximumf>, %52, %cst_29 [1] : vector<8x8xf32> to vector<8xf32>
    %54 = vector.shape_cast %53 : vector<8xf32> to vector<8x1xf32>
    %55 = vector.broadcast %54 : vector<8x1xf32> to vector<8x8xf32>
    %56 = arith.subf %52, %55 : vector<8x8xf32>
    %57 = math.exp %56 : vector<8x8xf32>
    %cst_30 = arith.constant dense<0.000000e+00> : vector<8xf32>
    %58 = vector.multi_reduction <add>, %57, %cst_30 [1] : vector<8x8xf32> to vector<8xf32>
    %59 = vector.shape_cast %58 : vector<8xf32> to vector<8x1xf32>
    %60 = tpu.reciprocal %59 {approx = true} : vector<8x1xf32> -> vector<8x1xf32>
    %61 = vector.broadcast %60 : vector<8x1xf32> to vector<8x8xf32>
    %62 = arith.mulf %57, %61 : vector<8x8xf32>
    %63 = arith.truncf %62 : vector<8x8xf32> to vector<8x8xbf16>
    %64 = vector.extract_strided_slice %21 {offsets = [0, 8], sizes = [8, 8], strides = [1, 1]} : vector<8x32xf32> to vector<8x8xf32>
    %65 = arith.truncf %64 : vector<8x8xf32> to vector<8x8xbf16>
    %cst_31 = arith.constant dense<0.000000e+00> : vector<8x8xf32>
    %66 = tpu.matmul %63, %65, %cst_31 {dimension_numbers = #tpu.dot_dimension_numbers<[1], [0], [0], [1], [0, 0, 1, 1], [], []>} : vector<8x8xbf16>, vector<8x8xbf16>, vector<8x8xf32> -> vector<8x8xf32>
    %c0_32 = arith.constant 0 : index
    %c8 = arith.constant 8 : index
    %67 = vector.load %arg14[%c0_32, %c8] : memref<8x32xf32, #tpu.memory_space<vmem>>, vector<8x8xf32>
    tpu.vector_store %arg14[%c0_32, %c8], %66 {strides = array<i32>} : memref<8x32xf32, #tpu.memory_space<vmem>>, vector<8x8xf32>,
    %68 = vector.extract_strided_slice %23 {offsets = [0, 16], sizes = [8, 8], strides = [1, 1]} : vector<8x32xf32> to vector<8x8xf32>
    %69 = arith.truncf %68 : vector<8x8xf32> to vector<8x8xbf16>
    %70 = vector.extract_strided_slice %20 {offsets = [0, 16], sizes = [8, 8], strides = [1, 1]} : vector<8x32xf32> to vector<8x8xf32>
    %71 = arith.truncf %70 : vector<8x8xf32> to vector<8x8xbf16>
    "tpu.trace_start"() <{level = 10 : i32, message = "qd,kd->qk"}> : () -> ()
    %cst_33 = arith.constant dense<0.000000e+00> : vector<8x8xf32>
    %72 = tpu.matmul %69, %71, %cst_33 {dimension_numbers = #tpu.dot_dimension_numbers<[1], [1], [0], [0], [0, 0, 1, 0], [], []>} : vector<8x8xbf16>, vector<8x8xbf16>, vector<8x8xf32> -> vector<8x8xf32>
    %cst_34 = arith.constant -1.000000e+10 : f32
    "tpu.trace_stop"() : () -> ()
    %73 = vector.broadcast %cst_34 : f32 to vector<8x8xf32>
    %74 = arith.select %7, %72, %73 : vector<8x8xi1>, vector<8x8xf32>
    %cst_35 = arith.constant dense<0xFF800000> : vector<8xf32>
    %75 = vector.multi_reduction <maximumf>, %74, %cst_35 [1] : vector<8x8xf32> to vector<8xf32>
    %76 = vector.shape_cast %75 : vector<8xf32> to vector<8x1xf32>
    %77 = vector.broadcast %76 : vector<8x1xf32> to vector<8x8xf32>
    %78 = arith.subf %74, %77 : vector<8x8xf32>
    %79 = math.exp %78 : vector<8x8xf32>
    %cst_36 = arith.constant dense<0.000000e+00> : vector<8xf32>
    %80 = vector.multi_reduction <add>, %79, %cst_36 [1] : vector<8x8xf32> to vector<8xf32>
    %81 = vector.shape_cast %80 : vector<8xf32> to vector<8x1xf32>
    %82 = tpu.reciprocal %81 {approx = true} : vector<8x1xf32> -> vector<8x1xf32>
    %83 = vector.broadcast %82 : vector<8x1xf32> to vector<8x8xf32>
    %84 = arith.mulf %79, %83 : vector<8x8xf32>
    %85 = arith.truncf %84 : vector<8x8xf32> to vector<8x8xbf16>
    %86 = vector.extract_strided_slice %21 {offsets = [0, 16], sizes = [8, 8], strides = [1, 1]} : vector<8x32xf32> to vector<8x8xf32>
    %87 = arith.truncf %86 : vector<8x8xf32> to vector<8x8xbf16>
    %cst_37 = arith.constant dense<0.000000e+00> : vector<8x8xf32>
    %88 = tpu.matmul %85, %87, %cst_37 {dimension_numbers = #tpu.dot_dimension_numbers<[1], [0], [0], [1], [0, 0, 1, 1], [], []>} : vector<8x8xbf16>, vector<8x8xbf16>, vector<8x8xf32> -> vector<8x8xf32>
    %c0_38 = arith.constant 0 : index
    %c16 = arith.constant 16 : index
    %89 = vector.load %arg14[%c0_38, %c16] : memref<8x32xf32, #tpu.memory_space<vmem>>, vector<8x8xf32>
    tpu.vector_store %arg14[%c0_38, %c16], %88 {strides = array<i32>} : memref<8x32xf32, #tpu.memory_space<vmem>>, vector<8x8xf32>,
    %90 = vector.extract_strided_slice %23 {offsets = [0, 24], sizes = [8, 8], strides = [1, 1]} : vector<8x32xf32> to vector<8x8xf32>
    %91 = arith.truncf %90 : vector<8x8xf32> to vector<8x8xbf16>
    %92 = vector.extract_strided_slice %20 {offsets = [0, 24], sizes = [8, 8], strides = [1, 1]} : vector<8x32xf32> to vector<8x8xf32>
    %93 = arith.truncf %92 : vector<8x8xf32> to vector<8x8xbf16>
    "tpu.trace_start"() <{level = 10 : i32, message = "qd,kd->qk"}> : () -> ()
    %cst_39 = arith.constant dense<0.000000e+00> : vector<8x8xf32>
    %94 = tpu.matmul %91, %93, %cst_39 {dimension_numbers = #tpu.dot_dimension_numbers<[1], [1], [0], [0], [0, 0, 1, 0], [], []>} : vector<8x8xbf16>, vector<8x8xbf16>, vector<8x8xf32> -> vector<8x8xf32>
    %cst_40 = arith.constant -1.000000e+10 : f32
    "tpu.trace_stop"() : () -> ()
    %95 = vector.broadcast %cst_40 : f32 to vector<8x8xf32>
    %96 = arith.select %7, %94, %95 : vector<8x8xi1>, vector<8x8xf32>
    %cst_41 = arith.constant dense<0xFF800000> : vector<8xf32>
    %97 = vector.multi_reduction <maximumf>, %96, %cst_41 [1] : vector<8x8xf32> to vector<8xf32>
    %98 = vector.shape_cast %97 : vector<8xf32> to vector<8x1xf32>
    %99 = vector.broadcast %98 : vector<8x1xf32> to vector<8x8xf32>
    %100 = arith.subf %96, %99 : vector<8x8xf32>
    %101 = math.exp %100 : vector<8x8xf32>
    %cst_42 = arith.constant dense<0.000000e+00> : vector<8xf32>
    %102 = vector.multi_reduction <add>, %101, %cst_42 [1] : vector<8x8xf32> to vector<8xf32>
    %103 = vector.shape_cast %102 : vector<8xf32> to vector<8x1xf32>
    %104 = tpu.reciprocal %103 {approx = true} : vector<8x1xf32> -> vector<8x1xf32>
    %105 = vector.broadcast %104 : vector<8x1xf32> to vector<8x8xf32>
    %106 = arith.mulf %101, %105 : vector<8x8xf32>
    %107 = arith.truncf %106 : vector<8x8xf32> to vector<8x8xbf16>
    %108 = vector.extract_strided_slice %21 {offsets = [0, 24], sizes = [8, 8], strides = [1, 1]} : vector<8x32xf32> to vector<8x8xf32>
    %109 = arith.truncf %108 : vector<8x8xf32> to vector<8x8xbf16>
    %cst_43 = arith.constant dense<0.000000e+00> : vector<8x8xf32>
    %110 = tpu.matmul %107, %109, %cst_43 {dimension_numbers = #tpu.dot_dimension_numbers<[1], [0], [0], [1], [0, 0, 1, 1], [], []>} : vector<8x8xbf16>, vector<8x8xbf16>, vector<8x8xf32> -> vector<8x8xf32>
    %c0_44 = arith.constant 0 : index
    %c24 = arith.constant 24 : index
    %111 = vector.load %arg14[%c0_44, %c24] : memref<8x32xf32, #tpu.memory_space<vmem>>, vector<8x8xf32>
    tpu.vector_store %arg14[%c0_44, %c24], %110 {strides = array<i32>} : memref<8x32xf32, #tpu.memory_space<vmem>>, vector<8x8xf32>,
    %c0_45 = arith.constant 0 : index
    %c0_46 = arith.constant 0 : index
    %112 = vector.load %arg14[%c0_45, %c0_46] : memref<8x32xf32, #tpu.memory_space<vmem>>, vector<8x32xf32>
    %113 = arith.truncf %112 : vector<8x32xf32> to vector<8x32xbf16>
    %c0_47 = arith.constant 0 : index
    %c0_48 = arith.constant 0 : index
    %114 = vector.load %arg9[%c0_47, %c0_48] : memref<32x32xbf16, #tpu.memory_space<vmem>>, vector<32x32xbf16>
    %cst_49 = arith.constant dense<0.000000e+00> : vector<8x32xf32>
    %115 = tpu.matmul %113, %114, %cst_49 {dimension_numbers = #tpu.dot_dimension_numbers<[1], [0], [0], [1], [0, 0, 1, 1], [], []>} : vector<8x32xbf16>, vector<32x32xbf16>, vector<8x32xf32> -> vector<8x32xf32>
    %c0_50 = arith.constant 0 : index
    %c0_51 = arith.constant 0 : index
    %116 = vector.load %arg10[%c0_50, %c0_51] : memref<1x32xf32, #tpu.memory_space<vmem>>, vector<1x32xf32>
    %117 = vector.broadcast %116 : vector<1x32xf32> to vector<8x32xf32>
    %118 = arith.addf %115, %117 : vector<8x32xf32>
    %119 = arith.addf %1, %118 : vector<8x32xf32>
    %cst_52 = arith.constant dense<0.000000e+00> : vector<8xf32>
    %120 = vector.multi_reduction <add>, %119, %cst_52 [1] : vector<8x32xf32> to vector<8xf32>
    %121 = vector.shape_cast %120 : vector<8xf32> to vector<8x1xf32>
    %cst_53 = arith.constant 3.200000e+01 : f32
    %122 = vector.broadcast %cst_53 : f32 to vector<8x1xf32>
    %123 = arith.divf %121, %122 : vector<8x1xf32>
    %124 = vector.broadcast %123 : vector<8x1xf32> to vector<8x32xf32>
    %125 = arith.subf %119, %124 : vector<8x32xf32>
    %126 = arith.mulf %125, %125 : vector<8x32xf32>
    %cst_54 = arith.constant dense<0.000000e+00> : vector<8xf32>
    %127 = vector.multi_reduction <add>, %126, %cst_54 [1] : vector<8x32xf32> to vector<8xf32>
    %128 = vector.shape_cast %127 : vector<8xf32> to vector<8x1xf32>
    %cst_55 = arith.constant 3.200000e+01 : f32
    %129 = vector.broadcast %cst_55 : f32 to vector<8x1xf32>
    %130 = arith.divf %128, %129 : vector<8x1xf32>
    %131 = vector.broadcast %123 : vector<8x1xf32> to vector<8x32xf32>
    %132 = arith.subf %119, %131 : vector<8x32xf32>
    %cst_56 = arith.constant 9.99999974E-6 : f32
    %133 = vector.broadcast %cst_56 : f32 to vector<8x1xf32>
    %134 = arith.addf %130, %133 : vector<8x1xf32>
    %135 = math.rsqrt %134 : vector<8x1xf32>
    %136 = vector.broadcast %135 : vector<8x1xf32> to vector<8x32xf32>
    %137 = arith.mulf %132, %136 : vector<8x32xf32>
    %c0_57 = arith.constant 0 : index
    %c0_58 = arith.constant 0 : index
    %138 = vector.load %arg11[%c0_57, %c0_58] : memref<1x32xf32, #tpu.memory_space<vmem>>, vector<1x32xf32>
    %139 = vector.broadcast %138 : vector<1x32xf32> to vector<8x32xf32>
    %140 = arith.mulf %137, %139 : vector<8x32xf32>
    %c0_59 = arith.constant 0 : index
    %c0_60 = arith.constant 0 : index
    %141 = vector.load %arg12[%c0_59, %c0_60] : memref<1x32xf32, #tpu.memory_space<vmem>>, vector<1x32xf32>
    %142 = vector.broadcast %141 : vector<1x32xf32> to vector<8x32xf32>
    %143 = arith.addf %140, %142 : vector<8x32xf32>
    %c0_61 = arith.constant 0 : index
    %c0_62 = arith.constant 0 : index
    %c0_63 = arith.constant 0 : index
    %144 = vector.load %arg13[%c0_61, %c0_62, %c0_63] : memref<1x8x32xf32, #tpu.memory_space<vmem>>, vector<1x8x32xf32>
    %145 = vector.shape_cast %144 : vector<1x8x32xf32> to vector<8x32xf32>
    %146 = vector.shape_cast %143 : vector<8x32xf32> to vector<1x8x32xf32>
    tpu.vector_store %arg13[%c0_61, %c0_62, %c0_63], %146 {strides = array<i32>} : memref<1x8x32xf32, #tpu.memory_space<vmem>>, vector<1x8x32xf32>,
    return
  }
  func.func @transform_0(%arg0: i32, %arg1: i32) -> (i32, i32, i32) {
    %c0_i32 = arith.constant 0 : i32
    %c0_i32_0 = arith.constant 0 : i32
    return %arg0, %arg1, %c0_i32 : i32, i32, i32
  }
  func.func @transform_1(%arg0: i32, %arg1: i32) -> (i32, i32, i32) {
    %c0_i32 = arith.constant 0 : i32
    %c0_i32_0 = arith.constant 0 : i32
    %c0_i32_1 = arith.constant 0 : i32
    return %arg0, %c0_i32, %c0_i32_0 : i32, i32, i32
  }
  func.func @transform_2(%arg0: i32, %arg1: i32) -> (i32, i32, i32, i32) {
    %c0_i32 = arith.constant 0 : i32
    %c0_i32_0 = arith.constant 0 : i32
    %c0_i32_1 = arith.constant 0 : i32
    return %arg0, %c0_i32, %arg1, %c0_i32_0 : i32, i32, i32, i32
  }
  func.func @transform_3(%arg0: i32, %arg1: i32) -> (i32, i32) {
    %c0_i32 = arith.constant 0 : i32
    %c0_i32_0 = arith.constant 0 : i32
    %c0_i32_1 = arith.constant 0 : i32
    return %c0_i32, %c0_i32_0 : i32, i32
  }
  func.func @transform_4(%arg0: i32, %arg1: i32) -> (i32, i32) {
    %c0_i32 = arith.constant 0 : i32
    %c0_i32_0 = arith.constant 0 : i32
    %c0_i32_1 = arith.constant 0 : i32
    return %c0_i32, %c0_i32_0 : i32, i32
  }
  func.func @transform_5(%arg0: i32, %arg1: i32) -> (i32, i32) {
    %c0_i32 = arith.constant 0 : i32
    %c0_i32_0 = arith.constant 0 : i32
    %c0_i32_1 = arith.constant 0 : i32
    return %c0_i32, %c0_i32_0 : i32, i32
  }
  func.func @transform_6(%arg0: i32, %arg1: i32) -> (i32, i32) {
    %c0_i32 = arith.constant 0 : i32
    %c0_i32_0 = arith.constant 0 : i32
    %c0_i32_1 = arith.constant 0 : i32
    return %c0_i32, %c0_i32_0 : i32, i32
  }
  func.func @transform_7(%arg0: i32, %arg1: i32) -> (i32, i32) {
    %c0_i32 = arith.constant 0 : i32
    %c0_i32_0 = arith.constant 0 : i32
    %c0_i32_1 = arith.constant 0 : i32
    return %c0_i32, %c0_i32_0 : i32, i32
  }
  func.func @transform_8(%arg0: i32, %arg1: i32) -> (i32, i32) {
    %c0_i32 = arith.constant 0 : i32
    %c0_i32_0 = arith.constant 0 : i32
    %c0_i32_1 = arith.constant 0 : i32
    return %c0_i32, %c0_i32_0 : i32, i32
  }
  func.func @transform_9(%arg0: i32, %arg1: i32) -> (i32, i32) {
    %c0_i32 = arith.constant 0 : i32
    %c0_i32_0 = arith.constant 0 : i32
    %c0_i32_1 = arith.constant 0 : i32
    return %c0_i32, %c0_i32_0 : i32, i32
  }
  func.func @transform_10(%arg0: i32, %arg1: i32) -> (i32, i32) {
    %c0_i32 = arith.constant 0 : i32
    %c0_i32_0 = arith.constant 0 : i32
    %c0_i32_1 = arith.constant 0 : i32
    return %c0_i32, %c0_i32_0 : i32, i32
  }
  func.func @transform_11(%arg0: i32, %arg1: i32) -> (i32, i32, i32) {
    %c0_i32 = arith.constant 0 : i32
    %c0_i32_0 = arith.constant 0 : i32
    return %arg0, %arg1, %c0_i32 : i32, i32, i32
  }
}

module attributes {stable_mosaic.version = 11 : i64} {
  func.func @_fused_ffn_kernel(%arg0: i32, %arg1: memref<16x32xf32, #tpu.memory_space<vmem>>, %arg2: memref<32x64xbf16, #tpu.memory_space<vmem>>, %arg3: memref<1x64xf32, #tpu.memory_space<vmem>>, %arg4: memref<64x32xbf16, #tpu.memory_space<vmem>>, %arg5: memref<1x32xf32, #tpu.memory_space<vmem>>, %arg6: memref<1x32xf32, #tpu.memory_space<vmem>>, %arg7: memref<1x32xf32, #tpu.memory_space<vmem>>, %arg8: memref<16x32xf32, #tpu.memory_space<vmem>>) attributes {dimension_semantics = [#tpu.dimension_semantics<parallel>], iteration_bounds = array<i64: 1>, scalar_prefetch = 0 : i64, scratch_operands = 0 : i64, tpu.core_type = #tpu.core_type<tc>, window_params = [{transform_indices = @transform_0, window_bounds = array<i64: 16, 32>}, {pipeline_mode = #tpu.pipeline_mode<synchronous>, transform_indices = @transform_1, window_bounds = array<i64: 32, 64>}, {pipeline_mode = #tpu.pipeline_mode<synchronous>, transform_indices = @transform_2, window_bounds = array<i64: 1, 64>}, {pipeline_mode = #tpu.pipeline_mode<synchronous>, transform_indices = @transform_3, window_bounds = array<i64: 64, 32>}, {pipeline_mode = #tpu.pipeline_mode<synchronous>, transform_indices = @transform_4, window_bounds = array<i64: 1, 32>}, {pipeline_mode = #tpu.pipeline_mode<synchronous>, transform_indices = @transform_5, window_bounds = array<i64: 1, 32>}, {pipeline_mode = #tpu.pipeline_mode<synchronous>, transform_indices = @transform_6, window_bounds = array<i64: 1, 32>}, {transform_indices = @transform_7, window_bounds = array<i64: 16, 32>}]} {
    %c0 = arith.constant 0 : index
    %c0_0 = arith.constant 0 : index
    %0 = vector.load %arg1[%c0, %c0_0] : memref<16x32xf32, #tpu.memory_space<vmem>>, vector<16x32xf32>
    %1 = arith.truncf %0 : vector<16x32xf32> to vector<16x32xbf16>
    %c0_1 = arith.constant 0 : index
    %c0_2 = arith.constant 0 : index
    %2 = vector.load %arg2[%c0_1, %c0_2] : memref<32x64xbf16, #tpu.memory_space<vmem>>, vector<32x64xbf16>
    %cst = arith.constant dense<0.000000e+00> : vector<16x64xf32>
    %3 = tpu.matmul %1, %2, %cst {dimension_numbers = #tpu.dot_dimension_numbers<[1], [0], [0], [1], [0, 0, 1, 1], [], []>} : vector<16x32xbf16>, vector<32x64xbf16>, vector<16x64xf32> -> vector<16x64xf32>
    %c0_3 = arith.constant 0 : index
    %c0_4 = arith.constant 0 : index
    %4 = vector.load %arg3[%c0_3, %c0_4] : memref<1x64xf32, #tpu.memory_space<vmem>>, vector<1x64xf32>
    %5 = vector.broadcast %4 : vector<1x64xf32> to vector<16x64xf32>
    %6 = arith.addf %3, %5 : vector<16x64xf32>
    %cst_5 = arith.constant 0.000000e+00 : f32
    %7 = vector.broadcast %cst_5 : f32 to vector<16x64xf32>
    %8 = arith.maximumf %6, %7 : vector<16x64xf32>
    %9 = arith.truncf %8 : vector<16x64xf32> to vector<16x64xbf16>
    %c0_6 = arith.constant 0 : index
    %c0_7 = arith.constant 0 : index
    %10 = vector.load %arg4[%c0_6, %c0_7] : memref<64x32xbf16, #tpu.memory_space<vmem>>, vector<64x32xbf16>
    %cst_8 = arith.constant dense<0.000000e+00> : vector<16x32xf32>
    %11 = tpu.matmul %9, %10, %cst_8 {dimension_numbers = #tpu.dot_dimension_numbers<[1], [0], [0], [1], [0, 0, 1, 1], [], []>} : vector<16x64xbf16>, vector<64x32xbf16>, vector<16x32xf32> -> vector<16x32xf32>
    %c0_9 = arith.constant 0 : index
    %c0_10 = arith.constant 0 : index
    %12 = vector.load %arg5[%c0_9, %c0_10] : memref<1x32xf32, #tpu.memory_space<vmem>>, vector<1x32xf32>
    %13 = vector.broadcast %12 : vector<1x32xf32> to vector<16x32xf32>
    %14 = arith.addf %11, %13 : vector<16x32xf32>
    %15 = arith.addf %0, %14 : vector<16x32xf32>
    %cst_11 = arith.constant dense<0.000000e+00> : vector<16xf32>
    %16 = vector.multi_reduction <add>, %15, %cst_11 [1] : vector<16x32xf32> to vector<16xf32>
    %17 = vector.shape_cast %16 : vector<16xf32> to vector<16x1xf32>
    %cst_12 = arith.constant 3.200000e+01 : f32
    %18 = vector.broadcast %cst_12 : f32 to vector<16x1xf32>
    %19 = arith.divf %17, %18 : vector<16x1xf32>
    %20 = vector.broadcast %19 : vector<16x1xf32> to vector<16x32xf32>
    %21 = arith.subf %15, %20 : vector<16x32xf32>
    %22 = arith.mulf %21, %21 : vector<16x32xf32>
    %cst_13 = arith.constant dense<0.000000e+00> : vector<16xf32>
    %23 = vector.multi_reduction <add>, %22, %cst_13 [1] : vector<16x32xf32> to vector<16xf32>
    %24 = vector.shape_cast %23 : vector<16xf32> to vector<16x1xf32>
    %cst_14 = arith.constant 3.200000e+01 : f32
    %25 = vector.broadcast %cst_14 : f32 to vector<16x1xf32>
    %26 = arith.divf %24, %25 : vector<16x1xf32>
    %27 = vector.broadcast %19 : vector<16x1xf32> to vector<16x32xf32>
    %28 = arith.subf %15, %27 : vector<16x32xf32>
    %cst_15 = arith.constant 9.99999974E-6 : f32
    %29 = vector.broadcast %cst_15 : f32 to vector<16x1xf32>
    %30 = arith.addf %26, %29 : vector<16x1xf32>
    %31 = math.rsqrt %30 : vector<16x1xf32>
    %32 = vector.broadcast %31 : vector<16x1xf32> to vector<16x32xf32>
    %33 = arith.mulf %28, %32 : vector<16x32xf32>
    %c0_16 = arith.constant 0 : index
    %c0_17 = arith.constant 0 : index
    %34 = vector.load %arg6[%c0_16, %c0_17] : memref<1x32xf32, #tpu.memory_space<vmem>>, vector<1x32xf32>
    %35 = vector.broadcast %34 : vector<1x32xf32> to vector<16x32xf32>
    %36 = arith.mulf %33, %35 : vector<16x32xf32>
    %c0_18 = arith.constant 0 : index
    %c0_19 = arith.constant 0 : index
    %37 = vector.load %arg7[%c0_18, %c0_19] : memref<1x32xf32, #tpu.memory_space<vmem>>, vector<1x32xf32>
    %38 = vector.broadcast %37 : vector<1x32xf32> to vector<16x32xf32>
    %39 = arith.addf %36, %38 : vector<16x32xf32>
    %c0_20 = arith.constant 0 : index
    %c0_21 = arith.constant 0 : index
    %40 = vector.load %arg8[%c0_20, %c0_21] : memref<16x32xf32, #tpu.memory_space<vmem>>, vector<16x32xf32>
    tpu.vector_store %arg8[%c0_20, %c0_21], %39 {strides = array<i32>} : memref<16x32xf32, #tpu.memory_space<vmem>>, vector<16x32xf32>,
    return
  }
  func.func @transform_0(%arg0: i32) -> (i32, i32) {
    %c0_i32 = arith.constant 0 : i32
    %c0_i32_0 = arith.constant 0 : i32
    return %arg0, %c0_i32 : i32, i32
  }
  func.func @transform_1(%arg0: i32) -> (i32, i32) {
    %c0_i32 = arith.constant 0 : i32
    %c0_i32_0 = arith.constant 0 : i32
    %c0_i32_1 = arith.constant 0 : i32
    return %c0_i32, %c0_i32_0 : i32, i32
  }
  func.func @transform_2(%arg0: i32) -> (i32, i32) {
    %c0_i32 = arith.constant 0 : i32
    %c0_i32_0 = arith.constant 0 : i32
    %c0_i32_1 = arith.constant 0 : i32
    return %c0_i32, %c0_i32_0 : i32, i32
  }
  func.func @transform_3(%arg0: i32) -> (i32, i32) {
    %c0_i32 = arith.constant 0 : i32
    %c0_i32_0 = arith.constant 0 : i32
    %c0_i32_1 = arith.constant 0 : i32
    return %c0_i32, %c0_i32_0 : i32, i32
  }
  func.func @transform_4(%arg0: i32) -> (i32, i32) {
    %c0_i32 = arith.constant 0 : i32
    %c0_i32_0 = arith.constant 0 : i32
    %c0_i32_1 = arith.constant 0 : i32
    return %c0_i32, %c0_i32_0 : i32, i32
  }
  func.func @transform_5(%arg0: i32) -> (i32, i32) {
    %c0_i32 = arith.constant 0 : i32
    %c0_i32_0 = arith.constant 0 : i32
    %c0_i32_1 = arith.constant 0 : i32
    return %c0_i32, %c0_i32_0 : i32, i32
  }
  func.func @transform_6(%arg0: i32) -> (i32, i32) {
    %c0_i32 = arith.constant 0 : i32
    %c0_i32_0 = arith.constant 0 : i32
    %c0_i32_1 = arith.constant 0 : i32
    return %c0_i32, %c0_i32_0 : i32, i32
  }
  func.func @transform_7(%arg0: i32) -> (i32, i32) {
    %c0_i32 = arith.constant 0 : i32
    %c0_i32_0 = arith.constant 0 : i32
    return %arg0, %c0_i32 : i32, i32
  }
}

module attributes {stable_mosaic.version = 11 : i64} {
  func.func @_attn_kernel(%arg0: i32, %arg1: i32, %arg2: memref<1x8x32xf32, #tpu.memory_space<vmem>>, %arg3: memref<1x8x32xf32, #tpu.memory_space<vmem>>, %arg4: memref<1x1x1x8xbf16, #tpu.memory_space<vmem>>, %arg5: memref<32x32xbf16, #tpu.memory_space<vmem>>, %arg6: memref<1x32xf32, #tpu.memory_space<vmem>>, %arg7: memref<32x64xbf16, #tpu.memory_space<vmem>>, %arg8: memref<1x64xf32, #tpu.memory_space<vmem>>, %arg9: memref<32x32xbf16, #tpu.memory_space<vmem>>, %arg10: memref<1x32xf32, #tpu.memory_space<vmem>>, %arg11: memref<1x32xf32, #tpu.memory_space<vmem>>, %arg12: memref<1x32xf32, #tpu.memory_space<vmem>>, %arg13: memref<1x8x32xf32, #tpu.memory_space<vmem>>, %arg14: memref<8x32xf32, #tpu.memory_space<vmem>>) attributes {dimension_semantics = [#tpu.dimension_semantics<parallel>, #tpu.dimension_semantics<parallel>], iteration_bounds = array<i64: 2, 1>, scalar_prefetch = 0 : i64, scratch_operands = 1 : i64, tpu.core_type = #tpu.core_type<tc>, window_params = [{transform_indices = @transform_0, window_bounds = array<i64: 1, 8, 32>}, {transform_indices = @transform_1, window_bounds = array<i64: 1, 8, 32>}, {transform_indices = @transform_2, window_bounds = array<i64: 1, 1, 1, 8>}, {pipeline_mode = #tpu.pipeline_mode<synchronous>, transform_indices = @transform_3, window_bounds = array<i64: 32, 32>}, {pipeline_mode = #tpu.pipeline_mode<synchronous>, transform_indices = @transform_4, window_bounds = array<i64: 1, 32>}, {pipeline_mode = #tpu.pipeline_mode<synchronous>, transform_indices = @transform_5, window_bounds = array<i64: 32, 64>}, {pipeline_mode = #tpu.pipeline_mode<synchronous>, transform_indices = @transform_6, window_bounds = array<i64: 1, 64>}, {pipeline_mode = #tpu.pipeline_mode<synchronous>, transform_indices = @transform_7, window_bounds = array<i64: 32, 32>}, {pipeline_mode = #tpu.pipeline_mode<synchronous>, transform_indices = @transform_8, window_bounds = array<i64: 1, 32>}, {pipeline_mode = #tpu.pipeline_mode<synchronous>, transform_indices = @transform_9, window_bounds = array<i64: 1, 32>}, {pipeline_mode = #tpu.pipeline_mode<synchronous>, transform_indices = @transform_10, window_bounds = array<i64: 1, 32>}, {transform_indices = @transform_11, window_bounds = array<i64: 1, 8, 32>}]} {
    %c0 = arith.constant 0 : index
    %c0_0 = arith.constant 0 : index
    %c0_1 = arith.constant 0 : index
    %0 = vector.load %arg2[%c0, %c0_0, %c0_1] : memref<1x8x32xf32, #tpu.memory_space<vmem>>, vector<1x8x32xf32>
    %1 = vector.shape_cast %0 : vector<1x8x32xf32> to vector<8x32xf32>
    %c0_2 = arith.constant 0 : index
    %c0_3 = arith.constant 0 : index
    %c0_4 = arith.constant 0 : index
    %2 = vector.load %arg3[%c0_2, %c0_3, %c0_4] : memref<1x8x32xf32, #tpu.memory_space<vmem>>, vector<1x8x32xf32>
    %3 = vector.shape_cast %2 : vector<1x8x32xf32> to vector<8x32xf32>
    %c0_5 = arith.constant 0 : index
    %c0_6 = arith.constant 0 : index
    %c0_7 = arith.constant 0 : index
    %c0_8 = arith.constant 0 : index
    %4 = vector.load %arg4[%c0_5, %c0_6, %c0_7, %c0_8] : memref<1x1x1x8xbf16, #tpu.memory_space<vmem>>, vector<1x1x1x8xbf16>
    %5 = vector.shape_cast %4 : vector<1x1x1x8xbf16> to vector<1x8xbf16>
    %cst = arith.constant 0.000000e+00 : bf16
    %6 = vector.broadcast %cst : bf16 to vector<1x8xbf16>
    %7 = arith.cmpf one, %5, %6 : vector<1x8xbf16>
    %8 = arith.truncf %1 : vector<8x32xf32> to vector<8x32xbf16>
    %c0_9 = arith.constant 0 : index
    %c0_10 = arith.constant 0 : index
    %9 = vector.load %arg5[%c0_9, %c0_10] : memref<32x32xbf16, #tpu.memory_space<vmem>>, vector<32x32xbf16>
    %cst_11 = arith.constant dense<0.000000e+00> : vector<8x32xf32>
    %10 = tpu.matmul %8, %9, %cst_11 {dimension_numbers = #tpu.dot_dimension_numbers<[1], [0], [0], [1], [0, 0, 1, 1], [], []>} : vector<8x32xbf16>, vector<32x32xbf16>, vector<8x32xf32> -> vector<8x32xf32>
    %c0_12 = arith.constant 0 : index
    %c0_13 = arith.constant 0 : index
    %11 = vector.load %arg6[%c0_12, %c0_13] : memref<1x32xf32, #tpu.memory_space<vmem>>, vector<1x32xf32>
    %12 = vector.broadcast %11 : vector<1x32xf32> to vector<8x32xf32>
    %13 = arith.addf %10, %12 : vector<8x32xf32>
    %14 = arith.truncf %3 : vector<8x32xf32> to vector<8x32xbf16>
    %c0_14 = arith.constant 0 : index
    %c0_15 = arith.constant 0 : index
    %15 = vector.load %arg7[%c0_14, %c0_15] : memref<32x64xbf16, #tpu.memory_space<vmem>>, vector<32x64xbf16>
    %cst_16 = arith.constant dense<0.000000e+00> : vector<8x64xf32>
    %16 = tpu.matmul %14, %15, %cst_16 {dimension_numbers = #tpu.dot_dimension_numbers<[1], [0], [0], [1], [0, 0, 1, 1], [], []>} : vector<8x32xbf16>, vector<32x64xbf16>, vector<8x64xf32> -> vector<8x64xf32>
    %c0_17 = arith.constant 0 : index
    %c0_18 = arith.constant 0 : index
    %17 = vector.load %arg8[%c0_17, %c0_18] : memref<1x64xf32, #tpu.memory_space<vmem>>, vector<1x64xf32>
    %18 = vector.broadcast %17 : vector<1x64xf32> to vector<8x64xf32>
    %19 = arith.addf %16, %18 : vector<8x64xf32>
    %20 = vector.extract_strided_slice %19 {offsets = [0, 0], sizes = [8, 32], strides = [1, 1]} : vector<8x64xf32> to vector<8x32xf32>
    %21 = vector.extract_strided_slice %19 {offsets = [0, 32], sizes = [8, 32], strides = [1, 1]} : vector<8x64xf32> to vector<8x32xf32>
    %cst_19 = arith.constant 0.353553385 : f32
    %22 = vector.broadcast %cst_19 : f32 to vector<8x32xf32>
    %23 = arith.mulf %13, %22 : vector<8x32xf32>
    %24 = vector.extract_strided_slice %23 {offsets = [0, 0], sizes = [8, 8], strides = [1, 1]} : vector<8x32xf32> to vector<8x8xf32>
    %25 = arith.truncf %24 : vector<8x8xf32> to vector<8x8xbf16>
    %26 = vector.extract_strided_slice %20 {offsets = [0, 0], sizes = [8, 8], strides = [1, 1]} : vector<8x32xf32> to vector<8x8xf32>
    %27 = arith.truncf %26 : vector<8x8xf32> to vector<8x8xbf16>
    "tpu.trace_start"() <{level = 10 : i32, message = "qd,kd->qk"}> : () -> ()
    %cst_20 = arith.constant dense<0.000000e+00> : vector<8x8xf32>
    %28 = tpu.matmul %25, %27, %cst_20 {dimension_numbers = #tpu.dot_dimension_numbers<[1], [1], [0], [0], [0, 0, 1, 0], [], []>} : vector<8x8xbf16>, vector<8x8xbf16>, vector<8x8xf32> -> vector<8x8xf32>
    %cst_21 = arith.constant -1.000000e+10 : f32
    "tpu.trace_stop"() : () -> ()
    %29 = vector.shape_cast %7 : vector<1x8xi1> to vector<1x8xi1>
    %30 = vector.broadcast %29 : vector<1x8xi1> to vector<8x8xi1>
    %31 = vector.broadcast %cst_21 : f32 to vector<8x8xf32>
    %32 = arith.select %30, %28, %31 : vector<8x8xi1>, vector<8x8xf32>
    %cst_22 = arith.constant dense<0xFF800000> : vector<8xf32>
    %33 = vector.multi_reduction <maximumf>, %32, %cst_22 [1] : vector<8x8xf32> to vector<8xf32>
    %34 = vector.shape_cast %33 : vector<8xf32> to vector<8x1xf32>
    %35 = vector.broadcast %34 : vector<8x1xf32> to vector<8x8xf32>
    %36 = arith.subf %32, %35 : vector<8x8xf32>
    %37 = math.exp %36 : vector<8x8xf32>
    %cst_23 = arith.constant dense<0.000000e+00> : vector<8xf32>
    %38 = vector.multi_reduction <add>, %37, %cst_23 [1] : vector<8x8xf32> to vector<8xf32>
    %39 = vector.shape_cast %38 : vector<8xf32> to vector<8x1xf32>
    %40 = tpu.reciprocal %39 {approx = true} : vector<8x1xf32> -> vector<8x1xf32>
    %41 = vector.broadcast %40 : vector<8x1xf32> to vector<8x8xf32>
    %42 = arith.mulf %37, %41 : vector<8x8xf32>
    %43 = arith.truncf %42 : vector<8x8xf32> to vector<8x8xbf16>
    %44 = vector.extract_strided_slice %21 {offsets = [0, 0], sizes = [8, 8], strides = [1, 1]} : vector<8x32xf32> to vector<8x8xf32>
    %45 = arith.truncf %44 : vector<8x8xf32> to vector<8x8xbf16>
    %cst_24 = arith.constant dense<0.000000e+00> : vector<8x8xf32>
    %46 = tpu.matmul %43, %45, %cst_24 {dimension_numbers = #tpu.dot_dimension_numbers<[1], [0], [0], [1], [0, 0, 1, 1], [], []>} : vector<8x8xbf16>, vector<8x8xbf16>, vector<8x8xf32> -> vector<8x8xf32>
    %c0_25 = arith.constant 0 : index
    %c0_26 = arith.constant 0 : index
    %47 = vector.load %arg14[%c0_25, %c0_26] : memref<8x32xf32, #tpu.memory_space<vmem>>, vector<8x8xf32>
    tpu.vector_store %arg14[%c0_25, %c0_26], %46 {strides = array<i32>} : memref<8x32xf32, #tpu.memory_space<vmem>>, vector<8x8xf32>,
    %48 = vector.extract_strided_slice %23 {offsets = [0, 8], sizes = [8, 8], strides = [1, 1]} : vector<8x32xf32> to vector<8x8xf32>
    %49 = arith.truncf %48 : vector<8x8xf32> to vector<8x8xbf16>
    %50 = vector.extract_strided_slice %20 {offsets = [0, 8], sizes = [8, 8], strides = [1, 1]} : vector<8x32xf32> to vector<8x8xf32>
    %51 = arith.truncf %50 : vector<8x8xf32> to vector<8x8xbf16>
    "tpu.trace_start"() <{level = 10 : i32, message = "qd,kd->qk"}> : () -> ()
    %cst_27 = arith.constant dense<0.000000e+00> : vector<8x8xf32>
    %52 = tpu.matmul %49, %51, %cst_27 {dimension_numbers = #tpu.dot_dimension_numbers<[1], [1], [0], [0], [0, 0, 1, 0], [], []>} : vector<8x8xbf16>, vector<8x8xbf16>, vector<8x8xf32> -> vector<8x8xf32>
    %cst_28 = arith.constant -1.000000e+10 : f32
    "tpu.trace_stop"() : () -> ()
    %53 = vector.shape_cast %7 : vector<1x8xi1> to vector<1x8xi1>
    %54 = vector.broadcast %53 : vector<1x8xi1> to vector<8x8xi1>
    %55 = vector.broadcast %cst_28 : f32 to vector<8x8xf32>
    %56 = arith.select %54, %52, %55 : vector<8x8xi1>, vector<8x8xf32>
    %cst_29 = arith.constant dense<0xFF800000> : vector<8xf32>
    %57 = vector.multi_reduction <maximumf>, %56, %cst_29 [1] : vector<8x8xf32> to vector<8xf32>
    %58 = vector.shape_cast %57 : vector<8xf32> to vector<8x1xf32>
    %59 = vector.broadcast %58 : vector<8x1xf32> to vector<8x8xf32>
    %60 = arith.subf %56, %59 : vector<8x8xf32>
    %61 = math.exp %60 : vector<8x8xf32>
    %cst_30 = arith.constant dense<0.000000e+00> : vector<8xf32>
    %62 = vector.multi_reduction <add>, %61, %cst_30 [1] : vector<8x8xf32> to vector<8xf32>
    %63 = vector.shape_cast %62 : vector<8xf32> to vector<8x1xf32>
    %64 = tpu.reciprocal %63 {approx = true} : vector<8x1xf32> -> vector<8x1xf32>
    %65 = vector.broadcast %64 : vector<8x1xf32> to vector<8x8xf32>
    %66 = arith.mulf %61, %65 : vector<8x8xf32>
    %67 = arith.truncf %66 : vector<8x8xf32> to vector<8x8xbf16>
    %68 = vector.extract_strided_slice %21 {offsets = [0, 8], sizes = [8, 8], strides = [1, 1]} : vector<8x32xf32> to vector<8x8xf32>
    %69 = arith.truncf %68 : vector<8x8xf32> to vector<8x8xbf16>
    %cst_31 = arith.constant dense<0.000000e+00> : vector<8x8xf32>
    %70 = tpu.matmul %67, %69, %cst_31 {dimension_numbers = #tpu.dot_dimension_numbers<[1], [0], [0], [1], [0, 0, 1, 1], [], []>} : vector<8x8xbf16>, vector<8x8xbf16>, vector<8x8xf32> -> vector<8x8xf32>
    %c0_32 = arith.constant 0 : index
    %c8 = arith.constant 8 : index
    %71 = vector.load %arg14[%c0_32, %c8] : memref<8x32xf32, #tpu.memory_space<vmem>>, vector<8x8xf32>
    tpu.vector_store %arg14[%c0_32, %c8], %70 {strides = array<i32>} : memref<8x32xf32, #tpu.memory_space<vmem>>, vector<8x8xf32>,
    %72 = vector.extract_strided_slice %23 {offsets = [0, 16], sizes = [8, 8], strides = [1, 1]} : vector<8x32xf32> to vector<8x8xf32>
    %73 = arith.truncf %72 : vector<8x8xf32> to vector<8x8xbf16>
    %74 = vector.extract_strided_slice %20 {offsets = [0, 16], sizes = [8, 8], strides = [1, 1]} : vector<8x32xf32> to vector<8x8xf32>
    %75 = arith.truncf %74 : vector<8x8xf32> to vector<8x8xbf16>
    "tpu.trace_start"() <{level = 10 : i32, message = "qd,kd->qk"}> : () -> ()
    %cst_33 = arith.constant dense<0.000000e+00> : vector<8x8xf32>
    %76 = tpu.matmul %73, %75, %cst_33 {dimension_numbers = #tpu.dot_dimension_numbers<[1], [1], [0], [0], [0, 0, 1, 0], [], []>} : vector<8x8xbf16>, vector<8x8xbf16>, vector<8x8xf32> -> vector<8x8xf32>
    %cst_34 = arith.constant -1.000000e+10 : f32
    "tpu.trace_stop"() : () -> ()
    %77 = vector.shape_cast %7 : vector<1x8xi1> to vector<1x8xi1>
    %78 = vector.broadcast %77 : vector<1x8xi1> to vector<8x8xi1>
    %79 = vector.broadcast %cst_34 : f32 to vector<8x8xf32>
    %80 = arith.select %78, %76, %79 : vector<8x8xi1>, vector<8x8xf32>
    %cst_35 = arith.constant dense<0xFF800000> : vector<8xf32>
    %81 = vector.multi_reduction <maximumf>, %80, %cst_35 [1] : vector<8x8xf32> to vector<8xf32>
    %82 = vector.shape_cast %81 : vector<8xf32> to vector<8x1xf32>
    %83 = vector.broadcast %82 : vector<8x1xf32> to vector<8x8xf32>
    %84 = arith.subf %80, %83 : vector<8x8xf32>
    %85 = math.exp %84 : vector<8x8xf32>
    %cst_36 = arith.constant dense<0.000000e+00> : vector<8xf32>
    %86 = vector.multi_reduction <add>, %85, %cst_36 [1] : vector<8x8xf32> to vector<8xf32>
    %87 = vector.shape_cast %86 : vector<8xf32> to vector<8x1xf32>
    %88 = tpu.reciprocal %87 {approx = true} : vector<8x1xf32> -> vector<8x1xf32>
    %89 = vector.broadcast %88 : vector<8x1xf32> to vector<8x8xf32>
    %90 = arith.mulf %85, %89 : vector<8x8xf32>
    %91 = arith.truncf %90 : vector<8x8xf32> to vector<8x8xbf16>
    %92 = vector.extract_strided_slice %21 {offsets = [0, 16], sizes = [8, 8], strides = [1, 1]} : vector<8x32xf32> to vector<8x8xf32>
    %93 = arith.truncf %92 : vector<8x8xf32> to vector<8x8xbf16>
    %cst_37 = arith.constant dense<0.000000e+00> : vector<8x8xf32>
    %94 = tpu.matmul %91, %93, %cst_37 {dimension_numbers = #tpu.dot_dimension_numbers<[1], [0], [0], [1], [0, 0, 1, 1], [], []>} : vector<8x8xbf16>, vector<8x8xbf16>, vector<8x8xf32> -> vector<8x8xf32>
    %c0_38 = arith.constant 0 : index
    %c16 = arith.constant 16 : index
    %95 = vector.load %arg14[%c0_38, %c16] : memref<8x32xf32, #tpu.memory_space<vmem>>, vector<8x8xf32>
    tpu.vector_store %arg14[%c0_38, %c16], %94 {strides = array<i32>} : memref<8x32xf32, #tpu.memory_space<vmem>>, vector<8x8xf32>,
    %96 = vector.extract_strided_slice %23 {offsets = [0, 24], sizes = [8, 8], strides = [1, 1]} : vector<8x32xf32> to vector<8x8xf32>
    %97 = arith.truncf %96 : vector<8x8xf32> to vector<8x8xbf16>
    %98 = vector.extract_strided_slice %20 {offsets = [0, 24], sizes = [8, 8], strides = [1, 1]} : vector<8x32xf32> to vector<8x8xf32>
    %99 = arith.truncf %98 : vector<8x8xf32> to vector<8x8xbf16>
    "tpu.trace_start"() <{level = 10 : i32, message = "qd,kd->qk"}> : () -> ()
    %cst_39 = arith.constant dense<0.000000e+00> : vector<8x8xf32>
    %100 = tpu.matmul %97, %99, %cst_39 {dimension_numbers = #tpu.dot_dimension_numbers<[1], [1], [0], [0], [0, 0, 1, 0], [], []>} : vector<8x8xbf16>, vector<8x8xbf16>, vector<8x8xf32> -> vector<8x8xf32>
    %cst_40 = arith.constant -1.000000e+10 : f32
    "tpu.trace_stop"() : () -> ()
    %101 = vector.shape_cast %7 : vector<1x8xi1> to vector<1x8xi1>
    %102 = vector.broadcast %101 : vector<1x8xi1> to vector<8x8xi1>
    %103 = vector.broadcast %cst_40 : f32 to vector<8x8xf32>
    %104 = arith.select %102, %100, %103 : vector<8x8xi1>, vector<8x8xf32>
    %cst_41 = arith.constant dense<0xFF800000> : vector<8xf32>
    %105 = vector.multi_reduction <maximumf>, %104, %cst_41 [1] : vector<8x8xf32> to vector<8xf32>
    %106 = vector.shape_cast %105 : vector<8xf32> to vector<8x1xf32>
    %107 = vector.broadcast %106 : vector<8x1xf32> to vector<8x8xf32>
    %108 = arith.subf %104, %107 : vector<8x8xf32>
    %109 = math.exp %108 : vector<8x8xf32>
    %cst_42 = arith.constant dense<0.000000e+00> : vector<8xf32>
    %110 = vector.multi_reduction <add>, %109, %cst_42 [1] : vector<8x8xf32> to vector<8xf32>
    %111 = vector.shape_cast %110 : vector<8xf32> to vector<8x1xf32>
    %112 = tpu.reciprocal %111 {approx = true} : vector<8x1xf32> -> vector<8x1xf32>
    %113 = vector.broadcast %112 : vector<8x1xf32> to vector<8x8xf32>
    %114 = arith.mulf %109, %113 : vector<8x8xf32>
    %115 = arith.truncf %114 : vector<8x8xf32> to vector<8x8xbf16>
    %116 = vector.extract_strided_slice %21 {offsets = [0, 24], sizes = [8, 8], strides = [1, 1]} : vector<8x32xf32> to vector<8x8xf32>
    %117 = arith.truncf %116 : vector<8x8xf32> to vector<8x8xbf16>
    %cst_43 = arith.constant dense<0.000000e+00> : vector<8x8xf32>
    %118 = tpu.matmul %115, %117, %cst_43 {dimension_numbers = #tpu.dot_dimension_numbers<[1], [0], [0], [1], [0, 0, 1, 1], [], []>} : vector<8x8xbf16>, vector<8x8xbf16>, vector<8x8xf32> -> vector<8x8xf32>
    %c0_44 = arith.constant 0 : index
    %c24 = arith.constant 24 : index
    %119 = vector.load %arg14[%c0_44, %c24] : memref<8x32xf32, #tpu.memory_space<vmem>>, vector<8x8xf32>
    tpu.vector_store %arg14[%c0_44, %c24], %118 {strides = array<i32>} : memref<8x32xf32, #tpu.memory_space<vmem>>, vector<8x8xf32>,
    %c0_45 = arith.constant 0 : index
    %c0_46 = arith.constant 0 : index
    %120 = vector.load %arg14[%c0_45, %c0_46] : memref<8x32xf32, #tpu.memory_space<vmem>>, vector<8x32xf32>
    %121 = arith.truncf %120 : vector<8x32xf32> to vector<8x32xbf16>
    %c0_47 = arith.constant 0 : index
    %c0_48 = arith.constant 0 : index
    %122 = vector.load %arg9[%c0_47, %c0_48] : memref<32x32xbf16, #tpu.memory_space<vmem>>, vector<32x32xbf16>
    %cst_49 = arith.constant dense<0.000000e+00> : vector<8x32xf32>
    %123 = tpu.matmul %121, %122, %cst_49 {dimension_numbers = #tpu.dot_dimension_numbers<[1], [0], [0], [1], [0, 0, 1, 1], [], []>} : vector<8x32xbf16>, vector<32x32xbf16>, vector<8x32xf32> -> vector<8x32xf32>
    %c0_50 = arith.constant 0 : index
    %c0_51 = arith.constant 0 : index
    %124 = vector.load %arg10[%c0_50, %c0_51] : memref<1x32xf32, #tpu.memory_space<vmem>>, vector<1x32xf32>
    %125 = vector.broadcast %124 : vector<1x32xf32> to vector<8x32xf32>
    %126 = arith.addf %123, %125 : vector<8x32xf32>
    %127 = arith.addf %1, %126 : vector<8x32xf32>
    %cst_52 = arith.constant dense<0.000000e+00> : vector<8xf32>
    %128 = vector.multi_reduction <add>, %127, %cst_52 [1] : vector<8x32xf32> to vector<8xf32>
    %129 = vector.shape_cast %128 : vector<8xf32> to vector<8x1xf32>
    %cst_53 = arith.constant 3.200000e+01 : f32
    %130 = vector.broadcast %cst_53 : f32 to vector<8x1xf32>
    %131 = arith.divf %129, %130 : vector<8x1xf32>
    %132 = vector.broadcast %131 : vector<8x1xf32> to vector<8x32xf32>
    %133 = arith.subf %127, %132 : vector<8x32xf32>
    %134 = arith.mulf %133, %133 : vector<8x32xf32>
    %cst_54 = arith.constant dense<0.000000e+00> : vector<8xf32>
    %135 = vector.multi_reduction <add>, %134, %cst_54 [1] : vector<8x32xf32> to vector<8xf32>
    %136 = vector.shape_cast %135 : vector<8xf32> to vector<8x1xf32>
    %cst_55 = arith.constant 3.200000e+01 : f32
    %137 = vector.broadcast %cst_55 : f32 to vector<8x1xf32>
    %138 = arith.divf %136, %137 : vector<8x1xf32>
    %139 = vector.broadcast %131 : vector<8x1xf32> to vector<8x32xf32>
    %140 = arith.subf %127, %139 : vector<8x32xf32>
    %cst_56 = arith.constant 9.99999974E-6 : f32
    %141 = vector.broadcast %cst_56 : f32 to vector<8x1xf32>
    %142 = arith.addf %138, %141 : vector<8x1xf32>
    %143 = math.rsqrt %142 : vector<8x1xf32>
    %144 = vector.broadcast %143 : vector<8x1xf32> to vector<8x32xf32>
    %145 = arith.mulf %140, %144 : vector<8x32xf32>
    %c0_57 = arith.constant 0 : index
    %c0_58 = arith.constant 0 : index
    %146 = vector.load %arg11[%c0_57, %c0_58] : memref<1x32xf32, #tpu.memory_space<vmem>>, vector<1x32xf32>
    %147 = vector.broadcast %146 : vector<1x32xf32> to vector<8x32xf32>
    %148 = arith.mulf %145, %147 : vector<8x32xf32>
    %c0_59 = arith.constant 0 : index
    %c0_60 = arith.constant 0 : index
    %149 = vector.load %arg12[%c0_59, %c0_60] : memref<1x32xf32, #tpu.memory_space<vmem>>, vector<1x32xf32>
    %150 = vector.broadcast %149 : vector<1x32xf32> to vector<8x32xf32>
    %151 = arith.addf %148, %150 : vector<8x32xf32>
    %c0_61 = arith.constant 0 : index
    %c0_62 = arith.constant 0 : index
    %c0_63 = arith.constant 0 : index
    %152 = vector.load %arg13[%c0_61, %c0_62, %c0_63] : memref<1x8x32xf32, #tpu.memory_space<vmem>>, vector<1x8x32xf32>
    %153 = vector.shape_cast %152 : vector<1x8x32xf32> to vector<8x32xf32>
    %154 = vector.shape_cast %151 : vector<8x32xf32> to vector<1x8x32xf32>
    tpu.vector_store %arg13[%c0_61, %c0_62, %c0_63], %154 {strides = array<i32>} : memref<1x8x32xf32, #tpu.memory_space<vmem>>, vector<1x8x32xf32>,
    return
  }
  func.func @transform_0(%arg0: i32, %arg1: i32) -> (i32, i32, i32) {
    %c0_i32 = arith.constant 0 : i32
    %c0_i32_0 = arith.constant 0 : i32
    return %arg0, %arg1, %c0_i32 : i32, i32, i32
  }
  func.func @transform_1(%arg0: i32, %arg1: i32) -> (i32, i32, i32) {
    %c0_i32 = arith.constant 0 : i32
    %c0_i32_0 = arith.constant 0 : i32
    %c0_i32_1 = arith.constant 0 : i32
    return %arg0, %c0_i32, %c0_i32_0 : i32, i32, i32
  }
  func.func @transform_2(%arg0: i32, %arg1: i32) -> (i32, i32, i32, i32) {
    %c0_i32 = arith.constant 0 : i32
    %c0_i32_0 = arith.constant 0 : i32
    %c0_i32_1 = arith.constant 0 : i32
    %c0_i32_2 = arith.constant 0 : i32
    return %arg0, %c0_i32, %c0_i32_0, %c0_i32_1 : i32, i32, i32, i32
  }
  func.func @transform_3(%arg0: i32, %arg1: i32) -> (i32, i32) {
    %c0_i32 = arith.constant 0 : i32
    %c0_i32_0 = arith.constant 0 : i32
    %c0_i32_1 = arith.constant 0 : i32
    return %c0_i32, %c0_i32_0 : i32, i32
  }
  func.func @transform_4(%arg0: i32, %arg1: i32) -> (i32, i32) {
    %c0_i32 = arith.constant 0 : i32
    %c0_i32_0 = arith.constant 0 : i32
    %c0_i32_1 = arith.constant 0 : i32
    return %c0_i32, %c0_i32_0 : i32, i32
  }
  func.func @transform_5(%arg0: i32, %arg1: i32) -> (i32, i32) {
    %c0_i32 = arith.constant 0 : i32
    %c0_i32_0 = arith.constant 0 : i32
    %c0_i32_1 = arith.constant 0 : i32
    return %c0_i32, %c0_i32_0 : i32, i32
  }
  func.func @transform_6(%arg0: i32, %arg1: i32) -> (i32, i32) {
    %c0_i32 = arith.constant 0 : i32
    %c0_i32_0 = arith.constant 0 : i32
    %c0_i32_1 = arith.constant 0 : i32
    return %c0_i32, %c0_i32_0 : i32, i32
  }
  func.func @transform_7(%arg0: i32, %arg1: i32) -> (i32, i32) {
    %c0_i32 = arith.constant 0 : i32
    %c0_i32_0 = arith.constant 0 : i32
    %c0_i32_1 = arith.constant 0 : i32
    return %c0_i32, %c0_i32_0 : i32, i32
  }
  func.func @transform_8(%arg0: i32, %arg1: i32) -> (i32, i32) {
    %c0_i32 = arith.constant 0 : i32
    %c0_i32_0 = arith.constant 0 : i32
    %c0_i32_1 = arith.constant 0 : i32
    return %c0_i32, %c0_i32_0 : i32, i32
  }
  func.func @transform_9(%arg0: i32, %arg1: i32) -> (i32, i32) {
    %c0_i32 = arith.constant 0 : i32
    %c0_i32_0 = arith.constant 0 : i32
    %c0_i32_1 = arith.constant 0 : i32
    return %c0_i32, %c0_i32_0 : i32, i32
  }
  func.func @transform_10(%arg0: i32, %arg1: i32) -> (i32, i32) {
    %c0_i32 = arith.constant 0 : i32
    %c0_i32_0 = arith.constant 0 : i32
    %c0_i32_1 = arith.constant 0 : i32
    return %c0_i32, %c0_i32_0 : i32, i32
  }
  func.func @transform_11(%arg0: i32, %arg1: i32) -> (i32, i32, i32) {
    %c0_i32 = arith.constant 0 : i32
    %c0_i32_0 = arith.constant 0 : i32
    return %arg0, %arg1, %c0_i32 : i32, i32, i32
  }
}

module attributes {stable_mosaic.version = 11 : i64} {
  func.func @_attn_kernel_with_probs(%arg0: i32, %arg1: i32, %arg2: memref<1x8x32xf32, #tpu.memory_space<vmem>>, %arg3: memref<1x8x32xf32, #tpu.memory_space<vmem>>, %arg4: memref<1x1x1x8xbf16, #tpu.memory_space<vmem>>, %arg5: memref<32x32xbf16, #tpu.memory_space<vmem>>, %arg6: memref<1x32xf32, #tpu.memory_space<vmem>>, %arg7: memref<32x64xbf16, #tpu.memory_space<vmem>>, %arg8: memref<1x64xf32, #tpu.memory_space<vmem>>, %arg9: memref<32x32xbf16, #tpu.memory_space<vmem>>, %arg10: memref<1x32xf32, #tpu.memory_space<vmem>>, %arg11: memref<1x32xf32, #tpu.memory_space<vmem>>, %arg12: memref<1x32xf32, #tpu.memory_space<vmem>>, %arg13: memref<1x8x32xf32, #tpu.memory_space<vmem>>, %arg14: memref<1x4x8x8xf32, #tpu.memory_space<vmem>>, %arg15: memref<8x32xf32, #tpu.memory_space<vmem>>) attributes {dimension_semantics = [#tpu.dimension_semantics<parallel>, #tpu.dimension_semantics<parallel>], iteration_bounds = array<i64: 2, 1>, scalar_prefetch = 0 : i64, scratch_operands = 1 : i64, tpu.core_type = #tpu.core_type<tc>, window_params = [{transform_indices = @transform_0, window_bounds = array<i64: 1, 8, 32>}, {transform_indices = @transform_1, window_bounds = array<i64: 1, 8, 32>}, {transform_indices = @transform_2, window_bounds = array<i64: 1, 1, 1, 8>}, {pipeline_mode = #tpu.pipeline_mode<synchronous>, transform_indices = @transform_3, window_bounds = array<i64: 32, 32>}, {pipeline_mode = #tpu.pipeline_mode<synchronous>, transform_indices = @transform_4, window_bounds = array<i64: 1, 32>}, {pipeline_mode = #tpu.pipeline_mode<synchronous>, transform_indices = @transform_5, window_bounds = array<i64: 32, 64>}, {pipeline_mode = #tpu.pipeline_mode<synchronous>, transform_indices = @transform_6, window_bounds = array<i64: 1, 64>}, {pipeline_mode = #tpu.pipeline_mode<synchronous>, transform_indices = @transform_7, window_bounds = array<i64: 32, 32>}, {pipeline_mode = #tpu.pipeline_mode<synchronous>, transform_indices = @transform_8, window_bounds = array<i64: 1, 32>}, {pipeline_mode = #tpu.pipeline_mode<synchronous>, transform_indices = @transform_9, window_bounds = array<i64: 1, 32>}, {pipeline_mode = #tpu.pipeline_mode<synchronous>, transform_indices = @transform_10, window_bounds = array<i64: 1, 32>}, {transform_indices = @transform_11, window_bounds = array<i64: 1, 8, 32>}, {transform_indices = @transform_12, window_bounds = array<i64: 1, 4, 8, 8>}]} {
    %c0 = arith.constant 0 : index
    %c0_0 = arith.constant 0 : index
    %c0_1 = arith.constant 0 : index
    %0 = vector.load %arg2[%c0, %c0_0, %c0_1] : memref<1x8x32xf32, #tpu.memory_space<vmem>>, vector<1x8x32xf32>
    %1 = vector.shape_cast %0 : vector<1x8x32xf32> to vector<8x32xf32>
    %c0_2 = arith.constant 0 : index
    %c0_3 = arith.constant 0 : index
    %c0_4 = arith.constant 0 : index
    %2 = vector.load %arg3[%c0_2, %c0_3, %c0_4] : memref<1x8x32xf32, #tpu.memory_space<vmem>>, vector<1x8x32xf32>
    %3 = vector.shape_cast %2 : vector<1x8x32xf32> to vector<8x32xf32>
    %c0_5 = arith.constant 0 : index
    %c0_6 = arith.constant 0 : index
    %c0_7 = arith.constant 0 : index
    %c0_8 = arith.constant 0 : index
    %4 = vector.load %arg4[%c0_5, %c0_6, %c0_7, %c0_8] : memref<1x1x1x8xbf16, #tpu.memory_space<vmem>>, vector<1x1x1x8xbf16>
    %5 = vector.shape_cast %4 : vector<1x1x1x8xbf16> to vector<1x8xbf16>
    %cst = arith.constant 0.000000e+00 : bf16
    %6 = vector.broadcast %cst : bf16 to vector<1x8xbf16>
    %7 = arith.cmpf one, %5, %6 : vector<1x8xbf16>
    %8 = arith.truncf %1 : vector<8x32xf32> to vector<8x32xbf16>
    %c0_9 = arith.constant 0 : index
    %c0_10 = arith.constant 0 : index
    %9 = vector.load %arg5[%c0_9, %c0_10] : memref<32x32xbf16, #tpu.memory_space<vmem>>, vector<32x32xbf16>
    %cst_11 = arith.constant dense<0.000000e+00> : vector<8x32xf32>
    %10 = tpu.matmul %8, %9, %cst_11 {dimension_numbers = #tpu.dot_dimension_numbers<[1], [0], [0], [1], [0, 0, 1, 1], [], []>} : vector<8x32xbf16>, vector<32x32xbf16>, vector<8x32xf32> -> vector<8x32xf32>
    %c0_12 = arith.constant 0 : index
    %c0_13 = arith.constant 0 : index
    %11 = vector.load %arg6[%c0_12, %c0_13] : memref<1x32xf32, #tpu.memory_space<vmem>>, vector<1x32xf32>
    %12 = vector.broadcast %11 : vector<1x32xf32> to vector<8x32xf32>
    %13 = arith.addf %10, %12 : vector<8x32xf32>
    %14 = arith.truncf %3 : vector<8x32xf32> to vector<8x32xbf16>
    %c0_14 = arith.constant 0 : index
    %c0_15 = arith.constant 0 : index
    %15 = vector.load %arg7[%c0_14, %c0_15] : memref<32x64xbf16, #tpu.memory_space<vmem>>, vector<32x64xbf16>
    %cst_16 = arith.constant dense<0.000000e+00> : vector<8x64xf32>
    %16 = tpu.matmul %14, %15, %cst_16 {dimension_numbers = #tpu.dot_dimension_numbers<[1], [0], [0], [1], [0, 0, 1, 1], [], []>} : vector<8x32xbf16>, vector<32x64xbf16>, vector<8x64xf32> -> vector<8x64xf32>
    %c0_17 = arith.constant 0 : index
    %c0_18 = arith.constant 0 : index
    %17 = vector.load %arg8[%c0_17, %c0_18] : memref<1x64xf32, #tpu.memory_space<vmem>>, vector<1x64xf32>
    %18 = vector.broadcast %17 : vector<1x64xf32> to vector<8x64xf32>
    %19 = arith.addf %16, %18 : vector<8x64xf32>
    %20 = vector.extract_strided_slice %19 {offsets = [0, 0], sizes = [8, 32], strides = [1, 1]} : vector<8x64xf32> to vector<8x32xf32>
    %21 = vector.extract_strided_slice %19 {offsets = [0, 32], sizes = [8, 32], strides = [1, 1]} : vector<8x64xf32> to vector<8x32xf32>
    %cst_19 = arith.constant 0.353553385 : f32
    %22 = vector.broadcast %cst_19 : f32 to vector<8x32xf32>
    %23 = arith.mulf %13, %22 : vector<8x32xf32>
    %24 = vector.extract_strided_slice %23 {offsets = [0, 0], sizes = [8, 8], strides = [1, 1]} : vector<8x32xf32> to vector<8x8xf32>
    %25 = arith.truncf %24 : vector<8x8xf32> to vector<8x8xbf16>
    %26 = vector.extract_strided_slice %20 {offsets = [0, 0], sizes = [8, 8], strides = [1, 1]} : vector<8x32xf32> to vector<8x8xf32>
    %27 = arith.truncf %26 : vector<8x8xf32> to vector<8x8xbf16>
    "tpu.trace_start"() <{level = 10 : i32, message = "qd,kd->qk"}> : () -> ()
    %cst_20 = arith.constant dense<0.000000e+00> : vector<8x8xf32>
    %28 = tpu.matmul %25, %27, %cst_20 {dimension_numbers = #tpu.dot_dimension_numbers<[1], [1], [0], [0], [0, 0, 1, 0], [], []>} : vector<8x8xbf16>, vector<8x8xbf16>, vector<8x8xf32> -> vector<8x8xf32>
    %cst_21 = arith.constant -1.000000e+10 : f32
    "tpu.trace_stop"() : () -> ()
    %29 = vector.shape_cast %7 : vector<1x8xi1> to vector<1x8xi1>
    %30 = vector.broadcast %29 : vector<1x8xi1> to vector<8x8xi1>
    %31 = vector.broadcast %cst_21 : f32 to vector<8x8xf32>
    %32 = arith.select %30, %28, %31 : vector<8x8xi1>, vector<8x8xf32>
    %cst_22 = arith.constant dense<0xFF800000> : vector<8xf32>
    %33 = vector.multi_reduction <maximumf>, %32, %cst_22 [1] : vector<8x8xf32> to vector<8xf32>
    %34 = vector.shape_cast %33 : vector<8xf32> to vector<8x1xf32>
    %35 = vector.broadcast %34 : vector<8x1xf32> to vector<8x8xf32>
    %36 = arith.subf %32, %35 : vector<8x8xf32>
    %37 = math.exp %36 : vector<8x8xf32>
    %cst_23 = arith.constant dense<0.000000e+00> : vector<8xf32>
    %38 = vector.multi_reduction <add>, %37, %cst_23 [1] : vector<8x8xf32> to vector<8xf32>
    %39 = vector.shape_cast %38 : vector<8xf32> to vector<8x1xf32>
    %40 = vector.broadcast %39 : vector<8x1xf32> to vector<8x8xf32>
    %41 = arith.divf %37, %40 : vector<8x8xf32>
    %c0_24 = arith.constant 0 : index
    %c0_25 = arith.constant 0 : index
    %c0_26 = arith.constant 0 : index
    %c0_27 = arith.constant 0 : index
    %42 = vector.load %arg14[%c0_24, %c0_25, %c0_26, %c0_27] : memref<1x4x8x8xf32, #tpu.memory_space<vmem>>, vector<1x1x8x8xf32>
    %43 = vector.shape_cast %42 : vector<1x1x8x8xf32> to vector<8x8xf32>
    %44 = vector.shape_cast %41 : vector<8x8xf32> to vector<1x1x8x8xf32>
    tpu.vector_store %arg14[%c0_24, %c0_25, %c0_26, %c0_27], %44 {strides = array<i32>} : memref<1x4x8x8xf32, #tpu.memory_space<vmem>>, vector<1x1x8x8xf32>,
    %45 = arith.truncf %41 : vector<8x8xf32> to vector<8x8xbf16>
    %46 = vector.extract_strided_slice %21 {offsets = [0, 0], sizes = [8, 8], strides = [1, 1]} : vector<8x32xf32> to vector<8x8xf32>
    %47 = arith.truncf %46 : vector<8x8xf32> to vector<8x8xbf16>
    %cst_28 = arith.constant dense<0.000000e+00> : vector<8x8xf32>
    %48 = tpu.matmul %45, %47, %cst_28 {dimension_numbers = #tpu.dot_dimension_numbers<[1], [0], [0], [1], [0, 0, 1, 1], [], []>} : vector<8x8xbf16>, vector<8x8xbf16>, vector<8x8xf32> -> vector<8x8xf32>
    %c0_29 = arith.constant 0 : index
    %c0_30 = arith.constant 0 : index
    %49 = vector.load %arg15[%c0_29, %c0_30] : memref<8x32xf32, #tpu.memory_space<vmem>>, vector<8x8xf32>
    tpu.vector_store %arg15[%c0_29, %c0_30], %48 {strides = array<i32>} : memref<8x32xf32, #tpu.memory_space<vmem>>, vector<8x8xf32>,
    %50 = vector.extract_strided_slice %23 {offsets = [0, 8], sizes = [8, 8], strides = [1, 1]} : vector<8x32xf32> to vector<8x8xf32>
    %51 = arith.truncf %50 : vector<8x8xf32> to vector<8x8xbf16>
    %52 = vector.extract_strided_slice %20 {offsets = [0, 8], sizes = [8, 8], strides = [1, 1]} : vector<8x32xf32> to vector<8x8xf32>
    %53 = arith.truncf %52 : vector<8x8xf32> to vector<8x8xbf16>
    "tpu.trace_start"() <{level = 10 : i32, message = "qd,kd->qk"}> : () -> ()
    %cst_31 = arith.constant dense<0.000000e+00> : vector<8x8xf32>
    %54 = tpu.matmul %51, %53, %cst_31 {dimension_numbers = #tpu.dot_dimension_numbers<[1], [1], [0], [0], [0, 0, 1, 0], [], []>} : vector<8x8xbf16>, vector<8x8xbf16>, vector<8x8xf32> -> vector<8x8xf32>
    %cst_32 = arith.constant -1.000000e+10 : f32
    "tpu.trace_stop"() : () -> ()
    %55 = vector.shape_cast %7 : vector<1x8xi1> to vector<1x8xi1>
    %56 = vector.broadcast %55 : vector<1x8xi1> to vector<8x8xi1>
    %57 = vector.broadcast %cst_32 : f32 to vector<8x8xf32>
    %58 = arith.select %56, %54, %57 : vector<8x8xi1>, vector<8x8xf32>
    %cst_33 = arith.constant dense<0xFF800000> : vector<8xf32>
    %59 = vector.multi_reduction <maximumf>, %58, %cst_33 [1] : vector<8x8xf32> to vector<8xf32>
    %60 = vector.shape_cast %59 : vector<8xf32> to vector<8x1xf32>
    %61 = vector.broadcast %60 : vector<8x1xf32> to vector<8x8xf32>
    %62 = arith.subf %58, %61 : vector<8x8xf32>
    %63 = math.exp %62 : vector<8x8xf32>
    %cst_34 = arith.constant dense<0.000000e+00> : vector<8xf32>
    %64 = vector.multi_reduction <add>, %63, %cst_34 [1] : vector<8x8xf32> to vector<8xf32>
    %65 = vector.shape_cast %64 : vector<8xf32> to vector<8x1xf32>
    %66 = vector.broadcast %65 : vector<8x1xf32> to vector<8x8xf32>
    %67 = arith.divf %63, %66 : vector<8x8xf32>
    %c0_35 = arith.constant 0 : index
    %c1 = arith.constant 1 : index
    %c0_36 = arith.constant 0 : index
    %c0_37 = arith.constant 0 : index
    %68 = vector.load %arg14[%c0_35, %c1, %c0_36, %c0_37] : memref<1x4x8x8xf32, #tpu.memory_space<vmem>>, vector<1x1x8x8xf32>
    %69 = vector.shape_cast %68 : vector<1x1x8x8xf32> to vector<8x8xf32>
    %70 = vector.shape_cast %67 : vector<8x8xf32> to vector<1x1x8x8xf32>
    tpu.vector_store %arg14[%c0_35, %c1, %c0_36, %c0_37], %70 {strides = array<i32>} : memref<1x4x8x8xf32, #tpu.memory_space<vmem>>, vector<1x1x8x8xf32>,
    %71 = arith.truncf %67 : vector<8x8xf32> to vector<8x8xbf16>
    %72 = vector.extract_strided_slice %21 {offsets = [0, 8], sizes = [8, 8], strides = [1, 1]} : vector<8x32xf32> to vector<8x8xf32>
    %73 = arith.truncf %72 : vector<8x8xf32> to vector<8x8xbf16>
    %cst_38 = arith.constant dense<0.000000e+00> : vector<8x8xf32>
    %74 = tpu.matmul %71, %73, %cst_38 {dimension_numbers = #tpu.dot_dimension_numbers<[1], [0], [0], [1], [0, 0, 1, 1], [], []>} : vector<8x8xbf16>, vector<8x8xbf16>, vector<8x8xf32> -> vector<8x8xf32>
    %c0_39 = arith.constant 0 : index
    %c8 = arith.constant 8 : index
    %75 = vector.load %arg15[%c0_39, %c8] : memref<8x32xf32, #tpu.memory_space<vmem>>, vector<8x8xf32>
    tpu.vector_store %arg15[%c0_39, %c8], %74 {strides = array<i32>} : memref<8x32xf32, #tpu.memory_space<vmem>>, vector<8x8xf32>,
    %76 = vector.extract_strided_slice %23 {offsets = [0, 16], sizes = [8, 8], strides = [1, 1]} : vector<8x32xf32> to vector<8x8xf32>
    %77 = arith.truncf %76 : vector<8x8xf32> to vector<8x8xbf16>
    %78 = vector.extract_strided_slice %20 {offsets = [0, 16], sizes = [8, 8], strides = [1, 1]} : vector<8x32xf32> to vector<8x8xf32>
    %79 = arith.truncf %78 : vector<8x8xf32> to vector<8x8xbf16>
    "tpu.trace_start"() <{level = 10 : i32, message = "qd,kd->qk"}> : () -> ()
    %cst_40 = arith.constant dense<0.000000e+00> : vector<8x8xf32>
    %80 = tpu.matmul %77, %79, %cst_40 {dimension_numbers = #tpu.dot_dimension_numbers<[1], [1], [0], [0], [0, 0, 1, 0], [], []>} : vector<8x8xbf16>, vector<8x8xbf16>, vector<8x8xf32> -> vector<8x8xf32>
    %cst_41 = arith.constant -1.000000e+10 : f32
    "tpu.trace_stop"() : () -> ()
    %81 = vector.shape_cast %7 : vector<1x8xi1> to vector<1x8xi1>
    %82 = vector.broadcast %81 : vector<1x8xi1> to vector<8x8xi1>
    %83 = vector.broadcast %cst_41 : f32 to vector<8x8xf32>
    %84 = arith.select %82, %80, %83 : vector<8x8xi1>, vector<8x8xf32>
    %cst_42 = arith.constant dense<0xFF800000> : vector<8xf32>
    %85 = vector.multi_reduction <maximumf>, %84, %cst_42 [1] : vector<8x8xf32> to vector<8xf32>
    %86 = vector.shape_cast %85 : vector<8xf32> to vector<8x1xf32>
    %87 = vector.broadcast %86 : vector<8x1xf32> to vector<8x8xf32>
    %88 = arith.subf %84, %87 : vector<8x8xf32>
    %89 = math.exp %88 : vector<8x8xf32>
    %cst_43 = arith.constant dense<0.000000e+00> : vector<8xf32>
    %90 = vector.multi_reduction <add>, %89, %cst_43 [1] : vector<8x8xf32> to vector<8xf32>
    %91 = vector.shape_cast %90 : vector<8xf32> to vector<8x1xf32>
    %92 = vector.broadcast %91 : vector<8x1xf32> to vector<8x8xf32>
    %93 = arith.divf %89, %92 : vector<8x8xf32>
    %c0_44 = arith.constant 0 : index
    %c2 = arith.constant 2 : index
    %c0_45 = arith.constant 0 : index
    %c0_46 = arith.constant 0 : index
    %94 = vector.load %arg14[%c0_44, %c2, %c0_45, %c0_46] : memref<1x4x8x8xf32, #tpu.memory_space<vmem>>, vector<1x1x8x8xf32>
    %95 = vector.shape_cast %94 : vector<1x1x8x8xf32> to vector<8x8xf32>
    %96 = vector.shape_cast %93 : vector<8x8xf32> to vector<1x1x8x8xf32>
    tpu.vector_store %arg14[%c0_44, %c2, %c0_45, %c0_46], %96 {strides = array<i32>} : memref<1x4x8x8xf32, #tpu.memory_space<vmem>>, vector<1x1x8x8xf32>,
    %97 = arith.truncf %93 : vector<8x8xf32> to vector<8x8xbf16>
    %98 = vector.extract_strided_slice %21 {offsets = [0, 16], sizes = [8, 8], strides = [1, 1]} : vector<8x32xf32> to vector<8x8xf32>
    %99 = arith.truncf %98 : vector<8x8xf32> to vector<8x8xbf16>
    %cst_47 = arith.constant dense<0.000000e+00> : vector<8x8xf32>
    %100 = tpu.matmul %97, %99, %cst_47 {dimension_numbers = #tpu.dot_dimension_numbers<[1], [0], [0], [1], [0, 0, 1, 1], [], []>} : vector<8x8xbf16>, vector<8x8xbf16>, vector<8x8xf32> -> vector<8x8xf32>
    %c0_48 = arith.constant 0 : index
    %c16 = arith.constant 16 : index
    %101 = vector.load %arg15[%c0_48, %c16] : memref<8x32xf32, #tpu.memory_space<vmem>>, vector<8x8xf32>
    tpu.vector_store %arg15[%c0_48, %c16], %100 {strides = array<i32>} : memref<8x32xf32, #tpu.memory_space<vmem>>, vector<8x8xf32>,
    %102 = vector.extract_strided_slice %23 {offsets = [0, 24], sizes = [8, 8], strides = [1, 1]} : vector<8x32xf32> to vector<8x8xf32>
    %103 = arith.truncf %102 : vector<8x8xf32> to vector<8x8xbf16>
    %104 = vector.extract_strided_slice %20 {offsets = [0, 24], sizes = [8, 8], strides = [1, 1]} : vector<8x32xf32> to vector<8x8xf32>
    %105 = arith.truncf %104 : vector<8x8xf32> to vector<8x8xbf16>
    "tpu.trace_start"() <{level = 10 : i32, message = "qd,kd->qk"}> : () -> ()
    %cst_49 = arith.constant dense<0.000000e+00> : vector<8x8xf32>
    %106 = tpu.matmul %103, %105, %cst_49 {dimension_numbers = #tpu.dot_dimension_numbers<[1], [1], [0], [0], [0, 0, 1, 0], [], []>} : vector<8x8xbf16>, vector<8x8xbf16>, vector<8x8xf32> -> vector<8x8xf32>
    %cst_50 = arith.constant -1.000000e+10 : f32
    "tpu.trace_stop"() : () -> ()
    %107 = vector.shape_cast %7 : vector<1x8xi1> to vector<1x8xi1>
    %108 = vector.broadcast %107 : vector<1x8xi1> to vector<8x8xi1>
    %109 = vector.broadcast %cst_50 : f32 to vector<8x8xf32>
    %110 = arith.select %108, %106, %109 : vector<8x8xi1>, vector<8x8xf32>
    %cst_51 = arith.constant dense<0xFF800000> : vector<8xf32>
    %111 = vector.multi_reduction <maximumf>, %110, %cst_51 [1] : vector<8x8xf32> to vector<8xf32>
    %112 = vector.shape_cast %111 : vector<8xf32> to vector<8x1xf32>
    %113 = vector.broadcast %112 : vector<8x1xf32> to vector<8x8xf32>
    %114 = arith.subf %110, %113 : vector<8x8xf32>
    %115 = math.exp %114 : vector<8x8xf32>
    %cst_52 = arith.constant dense<0.000000e+00> : vector<8xf32>
    %116 = vector.multi_reduction <add>, %115, %cst_52 [1] : vector<8x8xf32> to vector<8xf32>
    %117 = vector.shape_cast %116 : vector<8xf32> to vector<8x1xf32>
    %118 = vector.broadcast %117 : vector<8x1xf32> to vector<8x8xf32>
    %119 = arith.divf %115, %118 : vector<8x8xf32>
    %c0_53 = arith.constant 0 : index
    %c3 = arith.constant 3 : index
    %c0_54 = arith.constant 0 : index
    %c0_55 = arith.constant 0 : index
    %120 = vector.load %arg14[%c0_53, %c3, %c0_54, %c0_55] : memref<1x4x8x8xf32, #tpu.memory_space<vmem>>, vector<1x1x8x8xf32>
    %121 = vector.shape_cast %120 : vector<1x1x8x8xf32> to vector<8x8xf32>
    %122 = vector.shape_cast %119 : vector<8x8xf32> to vector<1x1x8x8xf32>
    tpu.vector_store %arg14[%c0_53, %c3, %c0_54, %c0_55], %122 {strides = array<i32>} : memref<1x4x8x8xf32, #tpu.memory_space<vmem>>, vector<1x1x8x8xf32>,
    %123 = arith.truncf %119 : vector<8x8xf32> to vector<8x8xbf16>
    %124 = vector.extract_strided_slice %21 {offsets = [0, 24], sizes = [8, 8], strides = [1, 1]} : vector<8x32xf32> to vector<8x8xf32>
    %125 = arith.truncf %124 : vector<8x8xf32> to vector<8x8xbf16>
    %cst_56 = arith.constant dense<0.000000e+00> : vector<8x8xf32>
    %126 = tpu.matmul %123, %125, %cst_56 {dimension_numbers = #tpu.dot_dimension_numbers<[1], [0], [0], [1], [0, 0, 1, 1], [], []>} : vector<8x8xbf16>, vector<8x8xbf16>, vector<8x8xf32> -> vector<8x8xf32>
    %c0_57 = arith.constant 0 : index
    %c24 = arith.constant 24 : index
    %127 = vector.load %arg15[%c0_57, %c24] : memref<8x32xf32, #tpu.memory_space<vmem>>, vector<8x8xf32>
    tpu.vector_store %arg15[%c0_57, %c24], %126 {strides = array<i32>} : memref<8x32xf32, #tpu.memory_space<vmem>>, vector<8x8xf32>,
    %c0_58 = arith.constant 0 : index
    %c0_59 = arith.constant 0 : index
    %128 = vector.load %arg15[%c0_58, %c0_59] : memref<8x32xf32, #tpu.memory_space<vmem>>, vector<8x32xf32>
    %129 = arith.truncf %128 : vector<8x32xf32> to vector<8x32xbf16>
    %c0_60 = arith.constant 0 : index
    %c0_61 = arith.constant 0 : index
    %130 = vector.load %arg9[%c0_60, %c0_61] : memref<32x32xbf16, #tpu.memory_space<vmem>>, vector<32x32xbf16>
    %cst_62 = arith.constant dense<0.000000e+00> : vector<8x32xf32>
    %131 = tpu.matmul %129, %130, %cst_62 {dimension_numbers = #tpu.dot_dimension_numbers<[1], [0], [0], [1], [0, 0, 1, 1], [], []>} : vector<8x32xbf16>, vector<32x32xbf16>, vector<8x32xf32> -> vector<8x32xf32>
    %c0_63 = arith.constant 0 : index
    %c0_64 = arith.constant 0 : index
    %132 = vector.load %arg10[%c0_63, %c0_64] : memref<1x32xf32, #tpu.memory_space<vmem>>, vector<1x32xf32>
    %133 = vector.broadcast %132 : vector<1x32xf32> to vector<8x32xf32>
    %134 = arith.addf %131, %133 : vector<8x32xf32>
    %135 = arith.addf %1, %134 : vector<8x32xf32>
    %cst_65 = arith.constant dense<0.000000e+00> : vector<8xf32>
    %136 = vector.multi_reduction <add>, %135, %cst_65 [1] : vector<8x32xf32> to vector<8xf32>
    %137 = vector.shape_cast %136 : vector<8xf32> to vector<8x1xf32>
    %cst_66 = arith.constant 3.200000e+01 : f32
    %138 = vector.broadcast %cst_66 : f32 to vector<8x1xf32>
    %139 = arith.divf %137, %138 : vector<8x1xf32>
    %140 = vector.broadcast %139 : vector<8x1xf32> to vector<8x32xf32>
    %141 = arith.subf %135, %140 : vector<8x32xf32>
    %142 = arith.mulf %141, %141 : vector<8x32xf32>
    %cst_67 = arith.constant dense<0.000000e+00> : vector<8xf32>
    %143 = vector.multi_reduction <add>, %142, %cst_67 [1] : vector<8x32xf32> to vector<8xf32>
    %144 = vector.shape_cast %143 : vector<8xf32> to vector<8x1xf32>
    %cst_68 = arith.constant 3.200000e+01 : f32
    %145 = vector.broadcast %cst_68 : f32 to vector<8x1xf32>
    %146 = arith.divf %144, %145 : vector<8x1xf32>
    %147 = vector.broadcast %139 : vector<8x1xf32> to vector<8x32xf32>
    %148 = arith.subf %135, %147 : vector<8x32xf32>
    %cst_69 = arith.constant 9.99999974E-6 : f32
    %149 = vector.broadcast %cst_69 : f32 to vector<8x1xf32>
    %150 = arith.addf %146, %149 : vector<8x1xf32>
    %151 = math.rsqrt %150 : vector<8x1xf32>
    %152 = vector.broadcast %151 : vector<8x1xf32> to vector<8x32xf32>
    %153 = arith.mulf %148, %152 : vector<8x32xf32>
    %c0_70 = arith.constant 0 : index
    %c0_71 = arith.constant 0 : index
    %154 = vector.load %arg11[%c0_70, %c0_71] : memref<1x32xf32, #tpu.memory_space<vmem>>, vector<1x32xf32>
    %155 = vector.broadcast %154 : vector<1x32xf32> to vector<8x32xf32>
    %156 = arith.mulf %153, %155 : vector<8x32xf32>
    %c0_72 = arith.constant 0 : index
    %c0_73 = arith.constant 0 : index
    %157 = vector.load %arg12[%c0_72, %c0_73] : memref<1x32xf32, #tpu.memory_space<vmem>>, vector<1x32xf32>
    %158 = vector.broadcast %157 : vector<1x32xf32> to vector<8x32xf32>
    %159 = arith.addf %156, %158 : vector<8x32xf32>
    %c0_74 = arith.constant 0 : index
    %c0_75 = arith.constant 0 : index
    %c0_76 = arith.constant 0 : index
    %160 = vector.load %arg13[%c0_74, %c0_75, %c0_76] : memref<1x8x32xf32, #tpu.memory_space<vmem>>, vector<1x8x32xf32>
    %161 = vector.shape_cast %160 : vector<1x8x32xf32> to vector<8x32xf32>
    %162 = vector.shape_cast %159 : vector<8x32xf32> to vector<1x8x32xf32>
    tpu.vector_store %arg13[%c0_74, %c0_75, %c0_76], %162 {strides = array<i32>} : memref<1x8x32xf32, #tpu.memory_space<vmem>>, vector<1x8x32xf32>,
    return
  }
  func.func @transform_0(%arg0: i32, %arg1: i32) -> (i32, i32, i32) {
    %c0_i32 = arith.constant 0 : i32
    %c0_i32_0 = arith.constant 0 : i32
    return %arg0, %arg1, %c0_i32 : i32, i32, i32
  }
  func.func @transform_1(%arg0: i32, %arg1: i32) -> (i32, i32, i32) {
    %c0_i32 = arith.constant 0 : i32
    %c0_i32_0 = arith.constant 0 : i32
    %c0_i32_1 = arith.constant 0 : i32
    return %arg0, %c0_i32, %c0_i32_0 : i32, i32, i32
  }
  func.func @transform_2(%arg0: i32, %arg1: i32) -> (i32, i32, i32, i32) {
    %c0_i32 = arith.constant 0 : i32
    %c0_i32_0 = arith.constant 0 : i32
    %c0_i32_1 = arith.constant 0 : i32
    %c0_i32_2 = arith.constant 0 : i32
    return %arg0, %c0_i32, %c0_i32_0, %c0_i32_1 : i32, i32, i32, i32
  }
  func.func @transform_3(%arg0: i32, %arg1: i32) -> (i32, i32) {
    %c0_i32 = arith.constant 0 : i32
    %c0_i32_0 = arith.constant 0 : i32
    %c0_i32_1 = arith.constant 0 : i32
    return %c0_i32, %c0_i32_0 : i32, i32
  }
  func.func @transform_4(%arg0: i32, %arg1: i32) -> (i32, i32) {
    %c0_i32 = arith.constant 0 : i32
    %c0_i32_0 = arith.constant 0 : i32
    %c0_i32_1 = arith.constant 0 : i32
    return %c0_i32, %c0_i32_0 : i32, i32
  }
  func.func @transform_5(%arg0: i32, %arg1: i32) -> (i32, i32) {
    %c0_i32 = arith.constant 0 : i32
    %c0_i32_0 = arith.constant 0 : i32
    %c0_i32_1 = arith.constant 0 : i32
    return %c0_i32, %c0_i32_0 : i32, i32
  }
  func.func @transform_6(%arg0: i32, %arg1: i32) -> (i32, i32) {
    %c0_i32 = arith.constant 0 : i32
    %c0_i32_0 = arith.constant 0 : i32
    %c0_i32_1 = arith.constant 0 : i32
    return %c0_i32, %c0_i32_0 : i32, i32
  }
  func.func @transform_7(%arg0: i32, %arg1: i32) -> (i32, i32) {
    %c0_i32 = arith.constant 0 : i32
    %c0_i32_0 = arith.constant 0 : i32
    %c0_i32_1 = arith.constant 0 : i32
    return %c0_i32, %c0_i32_0 : i32, i32
  }
  func.func @transform_8(%arg0: i32, %arg1: i32) -> (i32, i32) {
    %c0_i32 = arith.constant 0 : i32
    %c0_i32_0 = arith.constant 0 : i32
    %c0_i32_1 = arith.constant 0 : i32
    return %c0_i32, %c0_i32_0 : i32, i32
  }
  func.func @transform_9(%arg0: i32, %arg1: i32) -> (i32, i32) {
    %c0_i32 = arith.constant 0 : i32
    %c0_i32_0 = arith.constant 0 : i32
    %c0_i32_1 = arith.constant 0 : i32
    return %c0_i32, %c0_i32_0 : i32, i32
  }
  func.func @transform_10(%arg0: i32, %arg1: i32) -> (i32, i32) {
    %c0_i32 = arith.constant 0 : i32
    %c0_i32_0 = arith.constant 0 : i32
    %c0_i32_1 = arith.constant 0 : i32
    return %c0_i32, %c0_i32_0 : i32, i32
  }
  func.func @transform_11(%arg0: i32, %arg1: i32) -> (i32, i32, i32) {
    %c0_i32 = arith.constant 0 : i32
    %c0_i32_0 = arith.constant 0 : i32
    return %arg0, %arg1, %c0_i32 : i32, i32, i32
  }
  func.func @transform_12(%arg0: i32, %arg1: i32) -> (i32, i32, i32, i32) {
    %c0_i32 = arith.constant 0 : i32
    %c0_i32_0 = arith.constant 0 : i32
    %c0_i32_1 = arith.constant 0 : i32
    return %arg0, %c0_i32, %arg1, %c0_i32_0 : i32, i32, i32, i32
  }
}

module attributes {stable_mosaic.version = 11 : i64} {
  func.func @_out_proj_kernel(%arg0: i32, %arg1: i32, %arg2: memref<16x32xf32, #tpu.memory_space<vmem>>, %arg3: memref<32x128xbf16, #tpu.memory_space<vmem>>, %arg4: memref<1x128xf32, #tpu.memory_space<vmem>>, %arg5: memref<16x128xf32, #tpu.memory_space<vmem>>) attributes {dimension_semantics = [#tpu.dimension_semantics<parallel>, #tpu.dimension_semantics<parallel>], iteration_bounds = array<i64: 1, 1>, scalar_prefetch = 0 : i64, scratch_operands = 0 : i64, tpu.core_type = #tpu.core_type<tc>, window_params = [{transform_indices = @transform_0, window_bounds = array<i64: 16, 32>}, {transform_indices = @transform_1, window_bounds = array<i64: 32, 128>}, {transform_indices = @transform_2, window_bounds = array<i64: 1, 128>}, {transform_indices = @transform_3, window_bounds = array<i64: 16, 128>}]} {
    %c0 = arith.constant 0 : index
    %c0_0 = arith.constant 0 : index
    %0 = vector.load %arg2[%c0, %c0_0] : memref<16x32xf32, #tpu.memory_space<vmem>>, vector<16x32xf32>
    %1 = arith.truncf %0 : vector<16x32xf32> to vector<16x32xbf16>
    %c0_1 = arith.constant 0 : index
    %c0_2 = arith.constant 0 : index
    %2 = vector.load %arg3[%c0_1, %c0_2] : memref<32x128xbf16, #tpu.memory_space<vmem>>, vector<32x128xbf16>
    %cst = arith.constant dense<0.000000e+00> : vector<16x128xf32>
    %3 = tpu.matmul %1, %2, %cst {dimension_numbers = #tpu.dot_dimension_numbers<[1], [0], [0], [1], [0, 0, 1, 1], [], []>} : vector<16x32xbf16>, vector<32x128xbf16>, vector<16x128xf32> -> vector<16x128xf32>
    %c0_3 = arith.constant 0 : index
    %c0_4 = arith.constant 0 : index
    %4 = vector.load %arg4[%c0_3, %c0_4] : memref<1x128xf32, #tpu.memory_space<vmem>>, vector<1x128xf32>
    %5 = vector.broadcast %4 : vector<1x128xf32> to vector<16x128xf32>
    %6 = arith.addf %3, %5 : vector<16x128xf32>
    %c0_5 = arith.constant 0 : index
    %c0_6 = arith.constant 0 : index
    %7 = vector.load %arg5[%c0_5, %c0_6] : memref<16x128xf32, #tpu.memory_space<vmem>>, vector<16x128xf32>
    tpu.vector_store %arg5[%c0_5, %c0_6], %6 {strides = array<i32>} : memref<16x128xf32, #tpu.memory_space<vmem>>, vector<16x128xf32>,
    return
  }
  func.func @transform_0(%arg0: i32, %arg1: i32) -> (i32, i32) {
    %c0_i32 = arith.constant 0 : i32
    %c0_i32_0 = arith.constant 0 : i32
    return %arg1, %c0_i32 : i32, i32
  }
  func.func @transform_1(%arg0: i32, %arg1: i32) -> (i32, i32) {
    %c0_i32 = arith.constant 0 : i32
    %c0_i32_0 = arith.constant 0 : i32
    return %c0_i32, %arg0 : i32, i32
  }
  func.func @transform_2(%arg0: i32, %arg1: i32) -> (i32, i32) {
    %c0_i32 = arith.constant 0 : i32
    %c0_i32_0 = arith.constant 0 : i32
    return %c0_i32, %arg0 : i32, i32
  }
  func.func @transform_3(%arg0: i32, %arg1: i32) -> (i32, i32) {
    %c0_i32 = arith.constant 0 : i32
    return %arg1, %arg0 : i32, i32
  }
}

</mosaic_0001>

<llo_original>
// kernel: decoder_forward.9
$region0: #{decoder_forward.9}
  #allocation0 [shape = 'u32[]', space=smem, size = 0x4, offset = 0x4, fixed_abs, tag = 'smem constant byte address 0x4 - core index']
  #allocation1 [shape = 'u32[144,128]{1,0:T(1,128)}', space=vmem, size = 0x12000, scoped, tag = 'internal scratch']
  %s0 = inlined_call_operand.vmem [shape: f32[16,32], index: 0, kind: input, shape index: {}]
  %s1 = inlined_call_operand.vmem [shape: bf16[32,64], index: 1, kind: input, shape index: {}]
  %s2 = inlined_call_operand.vmem [shape: f32[1,64], index: 2, kind: input, shape index: {}]
  %s3 = inlined_call_operand.vmem [shape: bf16[64,32], index: 3, kind: input, shape index: {}]
  %s4 = inlined_call_operand.vmem [shape: f32[1,32], index: 4, kind: input, shape index: {}]
  %s5 = inlined_call_operand.vmem [shape: f32[1,32], index: 5, kind: input, shape index: {}]
  %s6 = inlined_call_operand.vmem [shape: f32[1,32], index: 6, kind: input, shape index: {}]
  %s7 = inlined_call_operand.vmem [shape: f32[16,32], index: 7, kind: output, shape index: {}]
  %s8 = sld [smem:[#allocation0]]
  $region38: #{decoder_forward.9} parent=0
    _
  %s10 = ssub.s32 1, %s8
  %s11 = scalar_select 0, %s10, %s8
  // Predicated region
  $region2: #{decoder_forward.9} parent=0 // pred_check
    _
  $region3: #{decoder_forward.9} parent=0 // pred_check_branch
    %13 = sbr.rel (0) target = $region5
  $region4: #{decoder_forward.9} parent=0 // pred_region
    _
  $region5: #{decoder_forward.9} parent=0 // pred_fallthru
    _
  // Predicated region
  $region6: #{decoder_forward.9} parent=0 // pred_check
    _
  $region7: #{decoder_forward.9} parent=0 // pred_check_branch
    %15 = sbr.rel (0) target = $region9
  $region8: #{decoder_forward.9} parent=0 // pred_region
    _
  $region9: #{decoder_forward.9} parent=0 // pred_fallthru
    _
  // Predicated region
  $region10: #{decoder_forward.9} parent=0 // pred_check
    _
  $region11: #{decoder_forward.9} parent=0 // pred_check_branch
    %17 = sbr.rel (0) target = $region13
  $region12: #{decoder_forward.9} parent=0 // pred_region
    _
  $region13: #{decoder_forward.9} parent=0 // pred_fallthru
    _
  // Predicated region
  $region14: #{decoder_forward.9} parent=0 // pred_check
    _
  $region15: #{decoder_forward.9} parent=0 // pred_check_branch
    %19 = sbr.rel (0) target = $region17
  $region16: #{decoder_forward.9} parent=0 // pred_region
    _
  $region17: #{decoder_forward.9} parent=0 // pred_fallthru
    _
  // Predicated region
  $region18: #{decoder_forward.9} parent=0 // pred_check
    _
  $region19: #{decoder_forward.9} parent=0 // pred_check_branch
    %21 = sbr.rel (0) target = $region21
  $region20: #{decoder_forward.9} parent=0 // pred_region
    _
  $region21: #{decoder_forward.9} parent=0 // pred_fallthru
    _
  // Predicated region
  $region22: #{decoder_forward.9} parent=0 // pred_check
    _
  $region23: #{decoder_forward.9} parent=0 // pred_check_branch
    %23 = sbr.rel (0) target = $region25
  $region24: #{decoder_forward.9} parent=0 // pred_region
    _
  $region25: #{decoder_forward.9} parent=0 // pred_fallthru
    _
  // Predicated region
  $region26: #{decoder_forward.9} parent=0 // pred_check
    _
  $region27: #{decoder_forward.9} parent=0 // pred_check_branch
    %25 = sbr.rel (0) target = $region29
  $region28: #{decoder_forward.9} parent=0 // pred_region
    _
  $region29: #{decoder_forward.9} parent=0 // pred_fallthru
    _
  %v27 = vld [vmem:[%s0] sm:$0xff]
  %v28 = vld [vmem:[%s0 + $0x8] sm:$0xff]
  %v29 = vpack.c.bf16 %v28, %v27
  %v30 = vld [vmem:[%s1] sm:$0xf]
  %v31 = vld [vmem:[%s1 + $0x4] sm:$0xf]
  %v32 = vld [vmem:[%s1 + $0x8] sm:$0xf]
  %v33 = vld [vmem:[%s1 + $0xc] sm:$0xf]
  %v34 = vld [vmem:[%s2] sm:$0x1]
  %v36 = vlaneseq
  %v37 = vshrl.u32 %v36, 7
  %v38 = vsub.s32 0, %v37
  %v39 = vrot.slane %v34, %v38
  %v45 = vunpack.c.l.b16 %v30
  %v46 = vunpack.c.l.b16 %v31
  %v47 = vunpack.c.l.b16 %v32
  %v48 = vunpack.c.l.b16 %v33
  %v49 = vpack.c.b16 %v46, %v45
  %v50 = vpack.c.b16 %v48, %v47
  %vm53 = vcmask 261120
  %v55 = vsel %vm53, %v29, 0
  %57 = vmatprep.subr.bf16.mxu0 0
  %58 = vmatpush1.bf16.msra.mxu0 %v49
  %59 = vmatprep.subr.bf16.mxu0 0
  %60 = vmatpush1.bf16.msra.mxu0 %v50
  %61 = vmatprep.subr.bf16.mxu0 0
  %62 = vmatpush1.bf16.msra.mxu0 0
  %63 = vmatprep.subr.bf16.mxu0 0
  %64 = vmatpush1.bf16.msra.mxu0 0
  %65 = vmatprep.subr.bf16.mxu0 0
  %66 = vmatpush1.bf16.msra.mxu0 0
  %67 = vmatprep.subr.bf16.mxu0 0
  %68 = vmatpush1.bf16.msra.mxu0 0
  %69 = vmatprep.subr.bf16.mxu0 0
  %70 = vmatpush1.bf16.msra.mxu0 0
  %71 = vmatprep.subr.bf16.mxu0 0
  %72 = vmatpush1.bf16.msra.mxu0 0
  %73 = vmatprep.subr.bf16.mxu0 0
  %74 = vmatpush1.bf16.msra.mxu0 0
  %75 = vmatprep.subr.bf16.mxu0 0
  %76 = vmatpush1.bf16.msra.mxu0 0
  %77 = vmatprep.subr.bf16.mxu0 0
  %78 = vmatpush1.bf16.msra.mxu0 0
  %79 = vmatprep.subr.bf16.mxu0 0
  %80 = vmatpush1.bf16.msra.mxu0 0
  %81 = vmatprep.subr.bf16.mxu0 0
  %82 = vmatpush1.bf16.msra.mxu0 0
  %83 = vmatprep.subr.bf16.mxu0 0
  %84 = vmatpush1.bf16.msra.mxu0 0
  %85 = vmatprep.subr.bf16.mxu0 0
  %86 = vmatpush1.bf16.msra.mxu0 0
  %87 = vmatprep.subr.bf16.mxu0 0
  %88 = vmatpush1.bf16.msra.mxu0 0
  %89 = vmatprep.mubr.bf16.mxu0 0
  %90 = vmatmul.mubr.bf16.gmra.mrb[0].mxu0 %v55
  %v91 = vpop.f32.mrb[0].mxu0
  %v92 = vadd.f32 %v39, %v91
  %v93 = vpop.f32.mrb[0].mxu0
  %v94 = vpop.f32.mrb[0].mxu0
  %v95 = vadd.f32 %v39, %v94
  %v96 = vpop.f32.mrb[0].mxu0
  %97 = vdwg.mxu0
  %v98 = vmax.f32 %v92, 0.0
  %v99 = vmax.f32 %v95, 0.0
  %v100 = vpack.c.bf16 %v99, %v98
  %v101 = vld [vmem:[%s3] sm:$0xf]
  %v102 = vld [vmem:[%s3 + $0x4] sm:$0xf]
  %v103 = vld [vmem:[%s3 + $0x8] sm:$0xf]
  %v104 = vld [vmem:[%s3 + $0xc] sm:$0xf]
  %v105 = vld [vmem:[%s3 + $0x10] sm:$0xf]
  %v106 = vld [vmem:[%s3 + $0x14] sm:$0xf]
  %v107 = vld [vmem:[%s3 + $0x18] sm:$0xf]
  %v108 = vld [vmem:[%s3 + $0x1c] sm:$0xf]
  %v109 = vld [vmem:[%s4] sm:$0x1]
  %v111 = vlaneseq
  %v112 = vshrl.u32 %v111, 7
  %v113 = vsub.s32 0, %v112
  %v114 = vrot.slane %v109, %v113
  %v124 = vunpack.c.l.b16 %v101
  %v125 = vunpack.c.l.b16 %v102
  %v126 = vunpack.c.l.b16 %v103
  %v127 = vunpack.c.l.b16 %v104
  %v128 = vunpack.c.l.b16 %v105
  %v129 = vunpack.c.l.b16 %v106
  %v130 = vunpack.c.l.b16 %v107
  %v131 = vunpack.c.l.b16 %v108
  %v132 = vpack.c.b16 %v125, %v124
  %v133 = vpack.c.b16 %v127, %v126
  %v134 = vpack.c.b16 %v129, %v128
  %v135 = vpack.c.b16 %v131, %v130
  %vm140 = vcmask 523264
  %v142 = vsel %vm140, %v100, 0
  %144 = vmatprep.subr.bf16.mxu0 0
  %145 = vmatpush1.bf16.msra.mxu0 %v132
  %146 = vmatprep.subr.bf16.mxu0 0
  %147 = vmatpush1.bf16.msra.mxu0 %v133
  %148 = vmatprep.subr.bf16.mxu0 0
  %149 = vmatpush1.bf16.msra.mxu0 %v134
  %150 = vmatprep.subr.bf16.mxu0 0
  %151 = vmatpush1.bf16.msra.mxu0 %v135
  %152 = vmatprep.subr.bf16.mxu0 0
  %153 = vmatpush1.bf16.msra.mxu0 0
  %154 = vmatprep.subr.bf16.mxu0 0
  %155 = vmatpush1.bf16.msra.mxu0 0
  %156 = vmatprep.subr.bf16.mxu0 0
  %157 = vmatpush1.bf16.msra.mxu0 0
  %158 = vmatprep.subr.bf16.mxu0 0
  %159 = vmatpush1.bf16.msra.mxu0 0
  %160 = vmatprep.subr.bf16.mxu0 0
  %161 = vmatpush1.bf16.msra.mxu0 0
  %162 = vmatprep.subr.bf16.mxu0 0
  %163 = vmatpush1.bf16.msra.mxu0 0
  %164 = vmatprep.subr.bf16.mxu0 0
  %165 = vmatpush1.bf16.msra.mxu0 0
  %166 = vmatprep.subr.bf16.mxu0 0
  %167 = vmatpush1.bf16.msra.mxu0 0
  %168 = vmatprep.subr.bf16.mxu0 0
  %169 = vmatpush1.bf16.msra.mxu0 0
  %170 = vmatprep.subr.bf16.mxu0 0
  %171 = vmatpush1.bf16.msra.mxu0 0
  %172 = vmatprep.subr.bf16.mxu0 0
  %173 = vmatpush1.bf16.msra.mxu0 0
  %174 = vmatprep.subr.bf16.mxu0 0
  %175 = vmatpush1.bf16.msra.mxu0 0
  %176 = vmatprep.mubr.bf16.mxu0 0
  %177 = vmatmul.mubr.bf16.gmra.mrb[0].mxu0 %v142
  %v178 = vpop.f32.mrb[0].mxu0
  %v179 = vadd.f32 %v114, %v178
  %v180 = vpop.f32.mrb[0].mxu0
  %v181 = vpop.f32.mrb[0].mxu0
  %v182 = vadd.f32 %v114, %v181
  %v183 = vpop.f32.mrb[0].mxu0
  %184 = vdwg.mxu0
  %v185 = vadd.f32 %v27, %v179
  %v186 = vadd.f32 %v28, %v182
  %v187 = vsel %vm53, %v185, 0.0
  %188 = vadd.xlane.f32.xlu0 %v187
  %v189 = vpop.xlane.xlu0 %188
  %v190 = vsel %vm53, %v186, 0.0
  %191 = vadd.xlane.f32.xlu0 %v190
  %v192 = vpop.xlane.xlu0 %191
  %v193 = vrcp.pop 32.0
  %v194 = vmul.f32 %v189, %v193
  %v195 = vmul.f32 %v192, %v193
  %v196 = vsub.f32 %v185, %v194
  %v197 = vsub.f32 %v186, %v195
  %v198 = vmul.f32 %v196, %v196
  %v199 = vmul.f32 %v197, %v197
  %v200 = vsel %vm53, %v198, 0.0
  %201 = vadd.xlane.f32.xlu0 %v200
  %v202 = vpop.xlane.xlu0 %201
  %v203 = vsel %vm53, %v199, 0.0
  %204 = vadd.xlane.f32.xlu0 %v203
  %v205 = vpop.xlane.xlu0 %204
  %v206 = vmul.f32 %v202, %v193
  %v207 = vmul.f32 %v205, %v193
  %v208 = vadd.f32 %v206, 1e-05
  %v209 = vadd.f32 %v207, 1e-05
  %v210 = vrsqrt.pop %v208
  %v211 = vrsqrt.pop %v209
  %v212 = vmul.f32 %v196, %v210
  %v213 = vmul.f32 %v197, %v211
  %v214 = vld [vmem:[%s5] sm:$0x1]
  %v216 = vlaneseq
  %v217 = vshrl.u32 %v216, 7
  %v218 = vsub.s32 0, %v217
  %v219 = vrot.slane %v214, %v218
  %v221 = vmul.f32 %v212, %v219
  %v222 = vmul.f32 %v213, %v219
  %v223 = vld [vmem:[%s6] sm:$0x1]
  %v225 = vlaneseq
  %v226 = vshrl.u32 %v225, 7
  %v227 = vsub.s32 0, %v226
  %v228 = vrot.slane %v223, %v227
  %v230 = vadd.f32 %v221, %v228
  %v231 = vadd.f32 %v222, %v228
  %232 = vst.msk [vmem:[%s7] sm:$0xff] %vm53, %v230
  %233 = vst.msk [vmem:[%s7 + $0x8] sm:$0xff] %vm53, %v231
  // Predicated region
  $region30: #{decoder_forward.9} parent=0 // pred_check
    _
  $region31: #{decoder_forward.9} parent=0 // pred_check_branch
    %235 = sbr.rel (0) target = $region33
  $region32: #{decoder_forward.9} parent=0 // pred_region
    _
  $region33: #{decoder_forward.9} parent=0 // pred_fallthru
    _
  // Predicated region
  $region34: #{decoder_forward.9} parent=0 // pred_check
    _
  $region35: #{decoder_forward.9} parent=0 // pred_check_branch
    %237 = sbr.rel (0) target = $region37
  $region36: #{decoder_forward.9} parent=0 // pred_region
    _
  $region37: #{decoder_forward.9} parent=0 // pred_fallthru
    _

// kernel: decoder_forward.8
$region0: #{decoder_forward.8}
  #allocation0 [shape = 'u32[]', space=smem, size = 0x4, offset = 0x4, fixed_abs, tag = 'smem constant byte address 0x4 - core index']
  #allocation1 [shape = 'u32[144,128]{1,0:T(1,128)}', space=vmem, size = 0x12000, scoped, tag = 'internal scratch']
  #allocation2 [shape = 'f32[8,32]{1,0:T(8,128)}', space=vmem, size = 0x1000, scoped, tag = 'scratch operand']
  %s0 = inlined_call_operand.vmem [shape: f32[2,8,32], index: 0, kind: input, shape index: {}]
  %s1 = inlined_call_operand.vmem [shape: f32[2,8,32], index: 1, kind: input, shape index: {}]
  %s2 = inlined_call_operand.vmem [shape: bf16[2,1,1,8], index: 2, kind: input, shape index: {}]
  %s3 = inlined_call_operand.vmem [shape: bf16[32,32], index: 3, kind: input, shape index: {}]
  %s4 = inlined_call_operand.vmem [shape: f32[1,32], index: 4, kind: input, shape index: {}]
  %s5 = inlined_call_operand.vmem [shape: bf16[32,64], index: 5, kind: input, shape index: {}]
  %s6 = inlined_call_operand.vmem [shape: f32[1,64], index: 6, kind: input, shape index: {}]
  %s7 = inlined_call_operand.vmem [shape: bf16[32,32], index: 7, kind: input, shape index: {}]
  %s8 = inlined_call_operand.vmem [shape: f32[1,32], index: 8, kind: input, shape index: {}]
  %s9 = inlined_call_operand.vmem [shape: f32[1,32], index: 9, kind: input, shape index: {}]
  %s10 = inlined_call_operand.vmem [shape: f32[1,32], index: 10, kind: input, shape index: {}]
  %s11 = inlined_call_operand.vmem [shape: f32[2,8,32], index: 11, kind: output, shape index: {}]
  %s12 = sld [smem:[#allocation0]]
  $region77: #{decoder_forward.8} parent=0
    _
  %s14 = ssub.s32 1, %s12
  %s15 = scalar_select 0, %s14, %s12
  loop: start=0, step=1, limit=4
  $region2: #{decoder_forward.8} parent=0 // loop_pre_header
    _
  $region3: #{decoder_forward.8} parent=0 // loop_header
    %s17 = sphi 0, %s21
    %p18 = scmp.ge.s32.totalorder %s17, 4
    %s24 = sphi 0, %s36
    %s25 = sphi 0, %s32
    %s26 = sphi 0, %s24
    %s27 = sphi 0, %s25
    %s28 = sphi 0, %s26
    %s29 = sphi 0, %s27
    %s41 = sphi 0, %s43
    %s44 = sphi 0, %s41
    %s45 = sphi 0, %s44
    %s61 = sphi 0, %s45
    %s67 = sphi 0, %s69
    %s70 = sphi 0, %s67
    %s71 = sphi 0, %s70
    %s87 = sphi 0, %s71
    %s93 = sphi 0, %s95
    %s96 = sphi 0, %s93
    %s97 = sphi 0, %s96
    %s113 = sphi 0, %s97
    %s117 = sphi 0, %s117
    %s119 = sphi 0, %s117
    %s120 = sphi 0, %s119
    %s134 = sphi 0, %s120
    %s138 = sphi 0, %s138
    %s140 = sphi 0, %s138
    %s141 = sphi 0, %s140
    %s155 = sphi 0, %s141
    %s159 = sphi 0, %s159
    %s161 = sphi 0, %s159
    %s162 = sphi 0, %s161
    %s176 = sphi 0, %s162
    %s180 = sphi 0, %s180
    %s182 = sphi 0, %s180
    %s183 = sphi 0, %s182
    %s197 = sphi 0, %s183
    %s201 = sphi 0, %s201
    %s203 = sphi 0, %s201
    %s204 = sphi 0, %s203
    %s218 = sphi 0, %s204
    %s222 = sphi 0, %s222
    %s224 = sphi 0, %s222
    %s225 = sphi 0, %s224
    %s239 = sphi 0, %s225
    %s243 = sphi 0, %s243
    %s245 = sphi 0, %s243
    %s246 = sphi 0, %s245
    %s260 = sphi 0, %s246
    %s264 = sphi 0, %s264
    %s266 = sphi 0, %s264
    %s267 = sphi 0, %s266
    %s281 = sphi 0, %s267
    %s289 = sphi 0, %s291
    %s292 = sphi 0, %s289
    %s293 = sphi 0, %s292
    %s309 = sphi 0, %s293
  $region4: #{decoder_forward.8} parent=0 // loop_header_branch
    %20 = sbr.rel (%p18) target = $region8
  $region5: #{decoder_forward.8} parent=0 // loop_body
    %s22 = ssub.s32 %s17, 1
    %s23 = ssub.s32 %s17, 2
    %s30 = sadd.s32 1, %s25
    %p31 = scmp.ge.s32.totalorder %s30, 1
    %s32 = scalar_select %p31, 0, %s30
    %s33 = sadd.s32 1, %s24
    %s34 = scalar_select %p31, %s33, %s24
    %p35 = scmp.ge.s32.totalorder %s34, 2
    %s36 = scalar_select %p35, 0, %s34
    %s37 = ssub.s32 %s24, %s36
    %s38 = ssub.s32 %s25, %s32
    %s39 = sor.u32 %s37, %s38
    %p40 = scmp.eq.s32.totalorder %s39, 0
    %s42 = sadd.s32 %s41, 1
    %s43 = scalar_select %p40, %s41, %s42
    %p46 = pneg %p40
    %p47 = scmp.eq.s32.totalorder %s17, 1
    %p48 = por %p46, %p47
    %p49 = scmp.ne.s32.totalorder %s41, %s44
    %p50 = scmp.eq.s32.totalorder %s17, 0
    %p51 = por %p49, %p50
    %p52 = scmp.ne.s32.totalorder %s41, %s44
    %p53 = scmp.eq.s32.totalorder %s22, 1
    %p54 = por %p52, %p53
    %p55 = scmp.ne.s32.totalorder %s44, %s45
    %p56 = scmp.eq.s32.totalorder %s22, 0
    %p57 = por %p55, %p56
    %p58 = scmp.ne.s32.totalorder %s44, %s45
    %p59 = scmp.eq.s32.totalorder %s23, 1
    %p60 = por %p58, %p59
    %p62 = scmp.ne.s32.totalorder %s45, %s61
    %p63 = scmp.eq.s32.totalorder %s23, 0
    %p64 = por %p62, %p63
    %s65 = ssub.s32 %s24, %s36
    %p66 = scmp.eq.s32.totalorder %s65, 0
    %s68 = sadd.s32 %s67, 1
    %s69 = scalar_select %p66, %s67, %s68
    %p72 = pneg %p66
    %p73 = scmp.eq.s32.totalorder %s17, 1
    %p74 = por %p72, %p73
    %p75 = scmp.ne.s32.totalorder %s67, %s70
    %p76 = scmp.eq.s32.totalorder %s17, 0
    %p77 = por %p75, %p76
    %p78 = scmp.ne.s32.totalorder %s67, %s70
    %p79 = scmp.eq.s32.totalorder %s22, 1
    %p80 = por %p78, %p79
    %p81 = scmp.ne.s32.totalorder %s70, %s71
    %p82 = scmp.eq.s32.totalorder %s22, 0
    %p83 = por %p81, %p82
    %p84 = scmp.ne.s32.totalorder %s70, %s71
    %p85 = scmp.eq.s32.totalorder %s23, 1
    %p86 = por %p84, %p85
    %p88 = scmp.ne.s32.totalorder %s71, %s87
    %p89 = scmp.eq.s32.totalorder %s23, 0
    %p90 = por %p88, %p89
    %s91 = ssub.s32 %s24, %s36
    %p92 = scmp.eq.s32.totalorder %s91, 0
    %s94 = sadd.s32 %s93, 1
    %s95 = scalar_select %p92, %s93, %s94
    %p98 = pneg %p92
    %p99 = scmp.eq.s32.totalorder %s17, 1
    %p100 = por %p98, %p99
    %p101 = scmp.ne.s32.totalorder %s93, %s96
    %p102 = scmp.eq.s32.totalorder %s17, 0
    %p103 = por %p101, %p102
    %p104 = scmp.ne.s32.totalorder %s93, %s96
    %p105 = scmp.eq.s32.totalorder %s22, 1
    %p106 = por %p104, %p105
    %p107 = scmp.ne.s32.totalorder %s96, %s97
    %p108 = scmp.eq.s32.totalorder %s22, 0
    %p109 = por %p107, %p108
    %p110 = scmp.ne.s32.totalorder %s96, %s97
    %p111 = scmp.eq.s32.totalorder %s23, 1
    %p112 = por %p110, %p111
    %p114 = scmp.ne.s32.totalorder %s97, %s113
    %p115 = scmp.eq.s32.totalorder %s23, 0
    %p116 = por %p114, %p115
    %s118 = sadd.s32 %s117, 1
    %p121 = scmp.eq.s32.totalorder %s17, 1
    %p122 = scmp.ne.s32.totalorder %s117, %s119
    %p123 = scmp.eq.s32.totalorder %s17, 0
    %p124 = por %p122, %p123
    %p125 = scmp.ne.s32.totalorder %s117, %s119
    %p126 = scmp.eq.s32.totalorder %s22, 1
    %p127 = por %p125, %p126
    %p128 = scmp.ne.s32.totalorder %s119, %s120
    %p129 = scmp.eq.s32.totalorder %s22, 0
    %p130 = por %p128, %p129
    %p131 = scmp.ne.s32.totalorder %s119, %s120
    %p132 = scmp.eq.s32.totalorder %s23, 1
    %p133 = por %p131, %p132
    %p135 = scmp.ne.s32.totalorder %s120, %s134
    %p136 = scmp.eq.s32.totalorder %s23, 0
    %p137 = por %p135, %p136
    %s139 = sadd.s32 %s138, 1
    %p142 = scmp.eq.s32.totalorder %s17, 1
    %p143 = scmp.ne.s32.totalorder %s138, %s140
    %p144 = scmp.eq.s32.totalorder %s17, 0
    %p145 = por %p143, %p144
    %p146 = scmp.ne.s32.totalorder %s138, %s140
    %p147 = scmp.eq.s32.totalorder %s22, 1
    %p148 = por %p146, %p147
    %p149 = scmp.ne.s32.totalorder %s140, %s141
    %p150 = scmp.eq.s32.totalorder %s22, 0
    %p151 = por %p149, %p150
    %p152 = scmp.ne.s32.totalorder %s140, %s141
    %p153 = scmp.eq.s32.totalorder %s23, 1
    %p154 = por %p152, %p153
    %p156 = scmp.ne.s32.totalorder %s141, %s155
    %p157 = scmp.eq.s32.totalorder %s23, 0
    %p158 = por %p156, %p157
    %s160 = sadd.s32 %s159, 1
    %p163 = scmp.eq.s32.totalorder %s17, 1
    %p164 = scmp.ne.s32.totalorder %s159, %s161
    %p165 = scmp.eq.s32.totalorder %s17, 0
    %p166 = por %p164, %p165
    %p167 = scmp.ne.s32.totalorder %s159, %s161
    %p168 = scmp.eq.s32.totalorder %s22, 1
    %p169 = por %p167, %p168
    %p170 = scmp.ne.s32.totalorder %s161, %s162
    %p171 = scmp.eq.s32.totalorder %s22, 0
    %p172 = por %p170, %p171
    %p173 = scmp.ne.s32.totalorder %s161, %s162
    %p174 = scmp.eq.s32.totalorder %s23, 1
    %p175 = por %p173, %p174
    %p177 = scmp.ne.s32.totalorder %s162, %s176
    %p178 = scmp.eq.s32.totalorder %s23, 0
    %p179 = por %p177, %p178
    %s181 = sadd.s32 %s180, 1
    %p184 = scmp.eq.s32.totalorder %s17, 1
    %p185 = scmp.ne.s32.totalorder %s180, %s182
    %p186 = scmp.eq.s32.totalorder %s17, 0
    %p187 = por %p185, %p186
    %p188 = scmp.ne.s32.totalorder %s180, %s182
    %p189 = scmp.eq.s32.totalorder %s22, 1
    %p190 = por %p188, %p189
    %p191 = scmp.ne.s32.totalorder %s182, %s183
    %p192 = scmp.eq.s32.totalorder %s22, 0
    %p193 = por %p191, %p192
    %p194 = scmp.ne.s32.totalorder %s182, %s183
    %p195 = scmp.eq.s32.totalorder %s23, 1
    %p196 = por %p194, %p195
    %p198 = scmp.ne.s32.totalorder %s183, %s197
    %p199 = scmp.eq.s32.totalorder %s23, 0
    %p200 = por %p198, %p199
    %s202 = sadd.s32 %s201, 1
    %p205 = scmp.eq.s32.totalorder %s17, 1
    %p206 = scmp.ne.s32.totalorder %s201, %s203
    %p207 = scmp.eq.s32.totalorder %s17, 0
    %p208 = por %p206, %p207
    %p209 = scmp.ne.s32.totalorder %s201, %s203
    %p210 = scmp.eq.s32.totalorder %s22, 1
    %p211 = por %p209, %p210
    %p212 = scmp.ne.s32.totalorder %s203, %s204
    %p213 = scmp.eq.s32.totalorder %s22, 0
    %p214 = por %p212, %p213
    %p215 = scmp.ne.s32.totalorder %s203, %s204
    %p216 = scmp.eq.s32.totalorder %s23, 1
    %p217 = por %p215, %p216
    %p219 = scmp.ne.s32.totalorder %s204, %s218
    %p220 = scmp.eq.s32.totalorder %s23, 0
    %p221 = por %p219, %p220
    %s223 = sadd.s32 %s222, 1
    %p226 = scmp.eq.s32.totalorder %s17, 1
    %p227 = scmp.ne.s32.totalorder %s222, %s224
    %p228 = scmp.eq.s32.totalorder %s17, 0
    %p229 = por %p227, %p228
    %p230 = scmp.ne.s32.totalorder %s222, %s224
    %p231 = scmp.eq.s32.totalorder %s22, 1
    %p232 = por %p230, %p231
    %p233 = scmp.ne.s32.totalorder %s224, %s225
    %p234 = scmp.eq.s32.totalorder %s22, 0
    %p235 = por %p233, %p234
    %p236 = scmp.ne.s32.totalorder %s224, %s225
    %p237 = scmp.eq.s32.totalorder %s23, 1
    %p238 = por %p236, %p237
    %p240 = scmp.ne.s32.totalorder %s225, %s239
    %p241 = scmp.eq.s32.totalorder %s23, 0
    %p242 = por %p240, %p241
    %s244 = sadd.s32 %s243, 1
    %p247 = scmp.eq.s32.totalorder %s17, 1
    %p248 = scmp.ne.s32.totalorder %s243, %s245
    %p249 = scmp.eq.s32.totalorder %s17, 0
    %p250 = por %p248, %p249
    %p251 = scmp.ne.s32.totalorder %s243, %s245
    %p252 = scmp.eq.s32.totalorder %s22, 1
    %p253 = por %p251, %p252
    %p254 = scmp.ne.s32.totalorder %s245, %s246
    %p255 = scmp.eq.s32.totalorder %s22, 0
    %p256 = por %p254, %p255
    %p257 = scmp.ne.s32.totalorder %s245, %s246
    %p258 = scmp.eq.s32.totalorder %s23, 1
    %p259 = por %p257, %p258
    %p261 = scmp.ne.s32.totalorder %s246, %s260
    %p262 = scmp.eq.s32.totalorder %s23, 0
    %p263 = por %p261, %p262
    %s265 = sadd.s32 %s264, 1
    %p268 = scmp.eq.s32.totalorder %s17, 1
    %p269 = scmp.ne.s32.totalorder %s264, %s266
    %p270 = scmp.eq.s32.totalorder %s17, 0
    %p271 = por %p269, %p270
    %p272 = scmp.ne.s32.totalorder %s264, %s266
    %p273 = scmp.eq.s32.totalorder %s22, 1
    %p274 = por %p272, %p273
    %p275 = scmp.ne.s32.totalorder %s266, %s267
    %p276 = scmp.eq.s32.totalorder %s22, 0
    %p277 = por %p275, %p276
    %p278 = scmp.ne.s32.totalorder %s266, %s267
    %p279 = scmp.eq.s32.totalorder %s23, 1
    %p280 = por %p278, %p279
    %p282 = scmp.ne.s32.totalorder %s267, %s281
    %p283 = scmp.eq.s32.totalorder %s23, 0
    %p284 = por %p282, %p283
    %s285 = ssub.s32 %s24, %s36
    %s286 = ssub.s32 %s25, %s32
    %s287 = sor.u32 %s285, %s286
    %p288 = scmp.eq.s32.totalorder %s287, 0
    %s290 = sadd.s32 %s289, 1
    %s291 = scalar_select %p288, %s289, %s290
    %p294 = pneg %p288
    %p295 = scmp.eq.s32.totalorder %s17, 1
    %p296 = por %p294, %p295
    %p297 = scmp.ne.s32.totalorder %s289, %s292
    %p298 = scmp.eq.s32.totalorder %s17, 0
    %p299 = por %p297, %p298
    %p300 = scmp.ne.s32.totalorder %s289, %s292
    %p301 = scmp.eq.s32.totalorder %s22, 1
    %p302 = por %p300, %p301
    %p303 = scmp.ne.s32.totalorder %s292, %s293
    %p304 = scmp.eq.s32.totalorder %s22, 0
    %p305 = por %p303, %p304
    %p306 = scmp.ne.s32.totalorder %s292, %s293
    %p307 = scmp.eq.s32.totalorder %s23, 1
    %p308 = por %p306, %p307
    %p310 = scmp.ne.s32.totalorder %s293, %s309
    %p311 = scmp.eq.s32.totalorder %s23, 0
    %p312 = por %p310, %p311
    %p313 = scmp.le.s32.totalorder 1, %s17
    %p314 = scmp.lt.s32.totalorder %s17, 3
    %p315 = pnand %p313, %p314
    %p316 = pneg %p315
    // Predicated region
    $region9: #{decoder_forward.8} parent=5 // pred_check
      _
    $region10: #{decoder_forward.8} parent=5 // pred_check_branch
      %318 = sbr.rel (%p315) target = $region12
    $region11: #{decoder_forward.8} parent=5 // pred_region
      %s319 = ssub.s32 %s17, 1
      // Predicated region
      $region13: #{decoder_forward.8} parent=11 // pred_check
        %p320 = pneg %p130
      $region14: #{decoder_forward.8} parent=11 // pred_check_branch
        %322 = sbr.rel (%p320) target = $region16
      $region15: #{decoder_forward.8} parent=11 // pred_region
        _
      $region16: #{decoder_forward.8} parent=11 // pred_fallthru
        _
      // Predicated region
      $region17: #{decoder_forward.8} parent=11 // pred_check
        %p323 = pneg %p151
      $region18: #{decoder_forward.8} parent=11 // pred_check_branch
        %325 = sbr.rel (%p323) target = $region20
      $region19: #{decoder_forward.8} parent=11 // pred_region
        _
      $region20: #{decoder_forward.8} parent=11 // pred_fallthru
        _
      // Predicated region
      $region21: #{decoder_forward.8} parent=11 // pred_check
        %p326 = pneg %p172
      $region22: #{decoder_forward.8} parent=11 // pred_check_branch
        %328 = sbr.rel (%p326) target = $region24
      $region23: #{decoder_forward.8} parent=11 // pred_region
        _
      $region24: #{decoder_forward.8} parent=11 // pred_fallthru
        _
      // Predicated region
      $region25: #{decoder_forward.8} parent=11 // pred_check
        %p329 = pneg %p193
      $region26: #{decoder_forward.8} parent=11 // pred_check_branch
        %331 = sbr.rel (%p329) target = $region28
      $region27: #{decoder_forward.8} parent=11 // pred_region
        _
      $region28: #{decoder_forward.8} parent=11 // pred_fallthru
        _
      // Predicated region
      $region29: #{decoder_forward.8} parent=11 // pred_check
        %p332 = pneg %p214
      $region30: #{decoder_forward.8} parent=11 // pred_check_branch
        %334 = sbr.rel (%p332) target = $region32
      $region31: #{decoder_forward.8} parent=11 // pred_region
        _
      $region32: #{decoder_forward.8} parent=11 // pred_fallthru
        _
      // Predicated region
      $region33: #{decoder_forward.8} parent=11 // pred_check
        %p335 = pneg %p235
      $region34: #{decoder_forward.8} parent=11 // pred_check_branch
        %337 = sbr.rel (%p335) target = $region36
      $region35: #{decoder_forward.8} parent=11 // pred_region
        _
      $region36: #{decoder_forward.8} parent=11 // pred_fallthru
        _
      // Predicated region
      $region37: #{decoder_forward.8} parent=11 // pred_check
        %p338 = pneg %p256
      $region38: #{decoder_forward.8} parent=11 // pred_check_branch
        %340 = sbr.rel (%p338) target = $region40
      $region39: #{decoder_forward.8} parent=11 // pred_region
        _
      $region40: #{decoder_forward.8} parent=11 // pred_fallthru
        _
      // Predicated region
      $region41: #{decoder_forward.8} parent=11 // pred_check
        %p341 = pneg %p277
      $region42: #{decoder_forward.8} parent=11 // pred_check_branch
        %343 = sbr.rel (%p341) target = $region44
      $region43: #{decoder_forward.8} parent=11 // pred_region
        _
      $region44: #{decoder_forward.8} parent=11 // pred_fallthru
        _
    $region12: #{decoder_forward.8} parent=5 // pred_fallthru
      _
    %p344 = scmp.lt.s32.totalorder %s17, 2
    // Predicated region
    $region45: #{decoder_forward.8} parent=5 // pred_check
      %p345 = pneg %p344
    $region46: #{decoder_forward.8} parent=5 // pred_check_branch
      %347 = sbr.rel (%p345) target = $region48
    $region47: #{decoder_forward.8} parent=5 // pred_region
      // Predicated region
      $region49: #{decoder_forward.8} parent=47 // pred_check
        %p348 = pneg %p51
      $region50: #{decoder_forward.8} parent=47 // pred_check_branch
        %350 = sbr.rel (%p348) target = $region52
      $region51: #{decoder_forward.8} parent=47 // pred_region
        %p351 = scmp.lt.s32.totalorder %s24, 1
        %s352 = scalar_select %p351, %s24, 1
        %p353 = scmp.lt.s32.totalorder %s25, 0
        %s354 = scalar_select %p353, %s25, 0
        %s355 = sadd.s32 %s354, %s352
        %s356 = smul.addr %s355, 8
        %s357 = scalar_lea.vmem %s0, %s356
      $region52: #{decoder_forward.8} parent=47 // pred_fallthru
        _
      // Predicated region
      $region53: #{decoder_forward.8} parent=47 // pred_check
        %p358 = pneg %p77
      $region54: #{decoder_forward.8} parent=47 // pred_check_branch
        %360 = sbr.rel (%p358) target = $region56
      $region55: #{decoder_forward.8} parent=47 // pred_region
        %p361 = scmp.lt.s32.totalorder %s24, 1
        %s362 = scalar_select %p361, %s24, 1
        %s363 = smul.addr %s362, 8
        %s364 = scalar_lea.vmem %s1, %s363
      $region56: #{decoder_forward.8} parent=47 // pred_fallthru
        _
      // Predicated region
      $region57: #{decoder_forward.8} parent=47 // pred_check
        %p365 = pneg %p103
      $region58: #{decoder_forward.8} parent=47 // pred_check_branch
        %367 = sbr.rel (%p365) target = $region60
      $region59: #{decoder_forward.8} parent=47 // pred_region
        %p368 = scmp.lt.s32.totalorder %s24, 1
        %s369 = scalar_select %p368, %s24, 1
        %s370 = scalar_lea.vmem %s2, %s369
      $region60: #{decoder_forward.8} parent=47 // pred_fallthru
        _
    $region48: #{decoder_forward.8} parent=5 // pred_fallthru
      _
    %p371 = scmp.le.s32.totalorder 1, %s17
    %p372 = scmp.lt.s32.totalorder %s17, 3
    %p373 = pnand %p371, %p372
    %p374 = pneg %p373
    // Predicated region
    $region61: #{decoder_forward.8} parent=5 // pred_check
      _
    $region62: #{decoder_forward.8} parent=5 // pred_check_branch
      %376 = sbr.rel (%p373) target = $region64
    $region63: #{decoder_forward.8} parent=5 // pred_region
      %s377 = ssub.s32 %s17, 1
      %p378 = scmp.lt.s32.totalorder %s26, 1
      %s379 = scalar_select %p378, %s26, 1
      %p380 = scmp.lt.s32.totalorder %s27, 0
      %s381 = scalar_select %p380, %s27, 0
      %s382 = sadd.s32 %s381, %s379
      %s383 = smul.addr %s382, 8
      %s384 = scalar_lea.vmem %s0, %s383
      %p385 = pneg %p57
      %p386 = pneg %p54
      %p387 = scmp.lt.s32.totalorder %s26, 1
      %s388 = scalar_select %p387, %s26, 1
      %s389 = smul.addr %s388, 8
      %s390 = scalar_lea.vmem %s1, %s389
      %p391 = pneg %p83
      %p392 = pneg %p80
      %p393 = scmp.lt.s32.totalorder %s26, 1
      %s394 = scalar_select %p393, %s26, 1
      %s395 = scalar_lea.vmem %s2, %s394
      %p396 = pneg %p109
      %p397 = pneg %p106
      %p398 = pneg %p130
      %p399 = pneg %p127
      %p400 = pneg %p151
      %p401 = pneg %p148
      %p402 = pneg %p172
      %p403 = pneg %p169
      %p404 = pneg %p193
      %p405 = pneg %p190
      %p406 = pneg %p214
      %p407 = pneg %p211
      %p408 = pneg %p235
      %p409 = pneg %p232
      %p410 = pneg %p256
      %p411 = pneg %p253
      %p412 = pneg %p277
      %p413 = pneg %p274
      %p414 = pneg %p305
      %p415 = pneg %p302
      %p416 = scmp.lt.s32.totalorder %s26, 1
      %s417 = scalar_select %p416, %s26, 1
      %p418 = scmp.lt.s32.totalorder %s27, 0
      %s419 = scalar_select %p418, %s27, 0
      %s420 = sadd.s32 %s419, %s417
      %s421 = smul.addr %s420, 8
      %s422 = scalar_lea.vmem %s11, %s421
      %p423 = scmp.lt.s32.totalorder %s26, 1
      %s424 = scalar_select %p423, %s26, 1
      %p425 = scmp.lt.s32.totalorder %s27, 0
      %s426 = scalar_select %p425, %s27, 0
      %s427 = sadd.s32 %s426, %s424
      %s428 = smul.addr %s427, 8
      %s429 = scalar_lea.vmem %s0, %s428
      %p430 = scmp.lt.s32.totalorder %s26, 1
      %s431 = scalar_select %p430, %s26, 1
      %s432 = smul.addr %s431, 8
      %s433 = scalar_lea.vmem %s1, %s432
      %p434 = scmp.lt.s32.totalorder %s26, 1
      %s435 = scalar_select %p434, %s26, 1
      %s436 = scalar_lea.vmem %s2, %s435
      %p437 = scmp.lt.s32.totalorder %s26, 1
      %s438 = scalar_select %p437, %s26, 1
      %p439 = scmp.lt.s32.totalorder %s27, 0
      %s440 = scalar_select %p439, %s27, 0
      %s441 = sadd.s32 %s440, %s438
      %s442 = smul.addr %s441, 8
      %s443 = scalar_lea.vmem %s11, %s442
      %v447 = vld [vmem:[%s429] sm:$0xff]
      %v448 = vld [vmem:[%s433] sm:$0xff]
      %v449 = vld [vmem:[%s436] sm:$0x1]
      %vm450 = vcmp.ne.bf16.partialorder %v449, 0
      %v451 = vpack.c.bf16 %v447, %v447
      %v452 = vld [vmem:[%s3] sm:$0xf]
      %v453 = vld [vmem:[%s3 + $0x4] sm:$0xf]
      %v454 = vld [vmem:[%s3 + $0x8] sm:$0xf]
      %v455 = vld [vmem:[%s3 + $0xc] sm:$0xf]
      %v456 = vld [vmem:[%s4] sm:$0x1]
      %v458 = vlaneseq
      %v459 = vshrl.u32 %v458, 7
      %v460 = vsub.s32 0, %v459
      %v461 = vrot.slane %v456, %v460
      %v467 = vunpack.c.l.b16 %v452
      %v468 = vunpack.c.l.b16 %v453
      %v469 = vunpack.c.l.b16 %v454
      %v470 = vunpack.c.l.b16 %v455
      %v471 = vpack.c.b16 %v468, %v467
      %v472 = vpack.c.b16 %v470, %v469
      %vm475 = vcmask 261120
      %v477 = vsel %vm475, %v451, 0
      %479 = vmatprep.subr.bf16.mxu0 0
      %480 = vmatpush1.bf16.msra.mxu0 %v471
      %481 = vmatprep.subr.bf16.mxu0 0
      %482 = vmatpush1.bf16.msra.mxu0 %v472
      %483 = vmatprep.subr.bf16.mxu0 0
      %484 = vmatpush1.bf16.msra.mxu0 0
      %485 = vmatprep.subr.bf16.mxu0 0
      %486 = vmatpush1.bf16.msra.mxu0 0
      %487 = vmatprep.subr.bf16.mxu0 0
      %488 = vmatpush1.bf16.msra.mxu0 0
      %489 = vmatprep.subr.bf16.mxu0 0
      %490 = vmatpush1.bf16.msra.mxu0 0
      %491 = vmatprep.subr.bf16.mxu0 0
      %492 = vmatpush1.bf16.msra.mxu0 0
      %493 = vmatprep.subr.bf16.mxu0 0
      %494 = vmatpush1.bf16.msra.mxu0 0
      %495 = vmatprep.subr.bf16.mxu0 0
      %496 = vmatpush1.bf16.msra.mxu0 0
      %497 = vmatprep.subr.bf16.mxu0 0
      %498 = vmatpush1.bf16.msra.mxu0 0
      %499 = vmatprep.subr.bf16.mxu0 0
      %500 = vmatpush1.bf16.msra.mxu0 0
      %501 = vmatprep.subr.bf16.mxu0 0
      %502 = vmatpush1.bf16.msra.mxu0 0
      %503 = vmatprep.subr.bf16.mxu0 0
      %504 = vmatpush1.bf16.msra.mxu0 0
      %505 = vmatprep.subr.bf16.mxu0 0
      %506 = vmatpush1.bf16.msra.mxu0 0
      %507 = vmatprep.subr.bf16.mxu0 0
      %508 = vmatpush1.bf16.msra.mxu0 0
      %509 = vmatprep.subr.bf16.mxu0 0
      %510 = vmatpush1.bf16.msra.mxu0 0
      %511 = vmatprep.mubr.bf16.mxu0 0
      %512 = vmatmul.mubr.bf16.gmra.mrb[0].mxu0 %v477
      %v513 = vpop.f32.mrb[0].mxu0
      %v514 = vadd.f32 %v461, %v513
      %v515 = vpop.f32.mrb[0].mxu0
      %v516 = vpop.f32.mrb[0].mxu0
      %v517 = vpop.f32.mrb[0].mxu0
      %518 = vdwg.mxu0
      %v519 = vpack.c.bf16 %v448, %v448
      %v520 = vld [vmem:[%s5] sm:$0xf]
      %v521 = vld [vmem:[%s5 + $0x4] sm:$0xf]
      %v522 = vld [vmem:[%s5 + $0x8] sm:$0xf]
      %v523 = vld [vmem:[%s5 + $0xc] sm:$0xf]
      %v524 = vld [vmem:[%s6] sm:$0x1]
      %v526 = vlaneseq
      %v527 = vshrl.u32 %v526, 7
      %v528 = vsub.s32 0, %v527
      %v529 = vrot.slane %v524, %v528
      %v535 = vunpack.c.l.b16 %v520
      %v536 = vunpack.c.l.b16 %v521
      %v537 = vunpack.c.l.b16 %v522
      %v538 = vunpack.c.l.b16 %v523
      %v539 = vpack.c.b16 %v536, %v535
      %v540 = vpack.c.b16 %v538, %v537
      %v544 = vsel %vm475, %v519, 0
      %546 = vmatprep.subr.bf16.mxu0 0
      %547 = vmatpush1.bf16.msra.mxu0 %v539
      %548 = vmatprep.subr.bf16.mxu0 0
      %549 = vmatpush1.bf16.msra.mxu0 %v540
      %550 = vmatprep.subr.bf16.mxu0 0
      %551 = vmatpush1.bf16.msra.mxu0 0
      %552 = vmatprep.subr.bf16.mxu0 0
      %553 = vmatpush1.bf16.msra.mxu0 0
      %554 = vmatprep.subr.bf16.mxu0 0
      %555 = vmatpush1.bf16.msra.mxu0 0
      %556 = vmatprep.subr.bf16.mxu0 0
      %557 = vmatpush1.bf16.msra.mxu0 0
      %558 = vmatprep.subr.bf16.mxu0 0
      %559 = vmatpush1.bf16.msra.mxu0 0
      %560 = vmatprep.subr.bf16.mxu0 0
      %561 = vmatpush1.bf16.msra.mxu0 0
      %562 = vmatprep.subr.bf16.mxu0 0
      %563 = vmatpush1.bf16.msra.mxu0 0
      %564 = vmatprep.subr.bf16.mxu0 0
      %565 = vmatpush1.bf16.msra.mxu0 0
      %566 = vmatprep.subr.bf16.mxu0 0
      %567 = vmatpush1.bf16.msra.mxu0 0
      %568 = vmatprep.subr.bf16.mxu0 0
      %569 = vmatpush1.bf16.msra.mxu0 0
      %570 = vmatprep.subr.bf16.mxu0 0
      %571 = vmatpush1.bf16.msra.mxu0 0
      %572 = vmatprep.subr.bf16.mxu0 0
      %573 = vmatpush1.bf16.msra.mxu0 0
      %574 = vmatprep.subr.bf16.mxu0 0
      %575 = vmatpush1.bf16.msra.mxu0 0
      %576 = vmatprep.subr.bf16.mxu0 0
      %577 = vmatpush1.bf16.msra.mxu0 0
      %578 = vmatprep.mubr.bf16.mxu0 0
      %579 = vmatmul.mubr.bf16.gmra.mrb[0].mxu0 %v544
      %v580 = vpop.f32.mrb[0].mxu0
      %v581 = vadd.f32 %v529, %v580
      %v582 = vpop.f32.mrb[0].mxu0
      %v583 = vpop.f32.mrb[0].mxu0
      %v584 = vpop.f32.mrb[0].mxu0
      %585 = vdwg.mxu0
      %v586 = vmul.f32 %v514, 0.35355338
      %v587 = vpack.c.bf16 %v586, %v586
      %v588 = vpack.c.bf16 %v581, %v581
      %vm589 = vcmask 64512
      %v591 = vsel %vm589, %v587, 0
      %v594 = vsel %vm589, %v588, 0
      %596 = vmatprep.subr.bf16.mxu0 0
      %597 = vmatpush1.bf16.xpose.msra.mxu0 %v594
      %598 = vmatprep.subr.bf16.mxu0 0
      %599 = vmatpush1.bf16.xpose.msra.mxu0 0
      %600 = vmatprep.subr.bf16.mxu0 0
      %601 = vmatpush1.bf16.xpose.msra.mxu0 0
      %602 = vmatprep.subr.bf16.mxu0 0
      %603 = vmatpush1.bf16.xpose.msra.mxu0 0
      %604 = vmatprep.subr.bf16.mxu0 0
      %605 = vmatpush1.bf16.xpose.msra.mxu0 0
      %606 = vmatprep.subr.bf16.mxu0 0
      %607 = vmatpush1.bf16.xpose.msra.mxu0 0
      %608 = vmatprep.subr.bf16.mxu0 0
      %609 = vmatpush1.bf16.xpose.msra.mxu0 0
      %610 = vmatprep.subr.bf16.mxu0 0
      %611 = vmatpush1.bf16.xpose.msra.mxu0 0
      %612 = vmatprep.subr.bf16.mxu0 0
      %613 = vmatpush1.bf16.xpose.msra.mxu0 0
      %614 = vmatprep.subr.bf16.mxu0 0
      %615 = vmatpush1.bf16.xpose.msra.mxu0 0
      %616 = vmatprep.subr.bf16.mxu0 0
      %617 = vmatpush1.bf16.xpose.msra.mxu0 0
      %618 = vmatprep.subr.bf16.mxu0 0
      %619 = vmatpush1.bf16.xpose.msra.mxu0 0
      %620 = vmatprep.subr.bf16.mxu0 0
      %621 = vmatpush1.bf16.xpose.msra.mxu0 0
      %622 = vmatprep.subr.bf16.mxu0 0
      %623 = vmatpush1.bf16.xpose.msra.mxu0 0
      %624 = vmatprep.subr.bf16.mxu0 0
      %625 = vmatpush1.bf16.xpose.msra.mxu0 0
      %626 = vmatprep.subr.bf16.mxu0 0
      %627 = vmatpush1.bf16.xpose.msra.mxu0 0
      %628 = vmatprep.mubr.bf16.mxu0 0
      %629 = vmatmul.mubr.bf16.gmra.mrb[0].mxu0 %v591
      %v630 = vpop.f32.mrb[0].mxu0
      %v631 = vadd.f32 0.0, %v630
      %v632 = vpop.f32.mrb[0].mxu0
      %v633 = vpop.f32.mrb[0].mxu0
      %v634 = vpop.f32.mrb[0].mxu0
      %635 = vdwg.mxu0
      %v636 = vsel %vm450, 65537, 0
      %v637 = vunpack.c.l.b16 %v636
      %vm638 = vcmp.ne.s32.totalorder %v637, 0
      %v639 = vsel %vm638, 1, 0
      %v640 = vlaneseq
      %v641 = vshrl.u32 %v640, 7
      %v642 = vsub.s32 0, %v641
      %v643 = vrot.slane %v639, %v642
      %vm644 = vcmp.eq.s32.totalorder %v643, 1
      %v645 = vsel %vm644, %v631, -1e+10
      %v646 = vsel %vm589, %v645, -inf
      %647 = vmax.xlane.f32.xlu0 %v646
      %v648 = vpop.xlane.xlu0 %647
      %v649 = vsub.f32 %v645, %v648
      %v650 = vmul.f32 %v649, 1.442695
      %v651 = vpow.pop %v650
      %v652 = vsel %vm589, %v651, 0.0
      %653 = vadd.xlane.f32.xlu0 %v652
      %v654 = vpop.xlane.xlu0 %653
      %v655 = vrcp.pop %v654
      %v656 = vmul.f32 %v651, %v655
      %v657 = vpack.c.bf16 %v656, %v656
      %659 = vrot.lane.b32.xlu0 %v588, 96
      %v660 = vpop.permute.xlu0 %659
      %v662 = vsel %vm589, %v657, 0
      %vm664 = vcmask 1043456
      %v666 = vsel %vm664, %v660, 0
      %668 = vmatprep.subr.bf16.mxu0 0
      %669 = vmatpush1.bf16.msra.mxu0 %v666
      %670 = vmatprep.subr.bf16.mxu0 0
      %671 = vmatpush1.bf16.msra.mxu0 0
      %672 = vmatprep.subr.bf16.mxu0 0
      %673 = vmatpush1.bf16.msra.mxu0 0
      %674 = vmatprep.subr.bf16.mxu0 0
      %675 = vmatpush1.bf16.msra.mxu0 0
      %676 = vmatprep.subr.bf16.mxu0 0
      %677 = vmatpush1.bf16.msra.mxu0 0
      %678 = vmatprep.subr.bf16.mxu0 0
      %679 = vmatpush1.bf16.msra.mxu0 0
      %680 = vmatprep.subr.bf16.mxu0 0
      %681 = vmatpush1.bf16.msra.mxu0 0
      %682 = vmatprep.subr.bf16.mxu0 0
      %683 = vmatpush1.bf16.msra.mxu0 0
      %684 = vmatprep.subr.bf16.mxu0 0
      %685 = vmatpush1.bf16.msra.mxu0 0
      %686 = vmatprep.subr.bf16.mxu0 0
      %687 = vmatpush1.bf16.msra.mxu0 0
      %688 = vmatprep.subr.bf16.mxu0 0
      %689 = vmatpush1.bf16.msra.mxu0 0
      %690 = vmatprep.subr.bf16.mxu0 0
      %691 = vmatpush1.bf16.msra.mxu0 0
      %692 = vmatprep.subr.bf16.mxu0 0
      %693 = vmatpush1.bf16.msra.mxu0 0
      %694 = vmatprep.subr.bf16.mxu0 0
      %695 = vmatpush1.bf16.msra.mxu0 0
      %696 = vmatprep.subr.bf16.mxu0 0
      %697 = vmatpush1.bf16.msra.mxu0 0
      %698 = vmatprep.subr.bf16.mxu0 0
      %699 = vmatpush1.bf16.msra.mxu0 0
      %700 = vmatprep.mubr.bf16.mxu0 0
      %701 = vmatmul.mubr.bf16.gmra.mrb[0].mxu0 %v662
      %v702 = vpop.f32.mrb[0].mxu0
      %v703 = vadd.f32 0.0, %v702
      %v704 = vpop.f32.mrb[0].mxu0
      %v705 = vpop.f32.mrb[0].mxu0
      %v706 = vpop.f32.mrb[0].mxu0
      %707 = vdwg.mxu0
      %708 = vst.msk [vmem:[#allocation2] sm:$0xff] %vm589, %v703
      %710 = vrot.lane.b32.xlu0 %v587, 120
      %v711 = vpop.permute.xlu0 %710
      %712 = vrot.lane.b32.xlu0 %v588, 120
      %v713 = vpop.permute.xlu0 %712
      %v715 = vsel %vm589, %v711, 0
      %v718 = vsel %vm589, %v713, 0
      %720 = vmatprep.subr.bf16.mxu0 0
      %721 = vmatpush1.bf16.xpose.msra.mxu0 %v718
      %722 = vmatprep.subr.bf16.mxu0 0
      %723 = vmatpush1.bf16.xpose.msra.mxu0 0
      %724 = vmatprep.subr.bf16.mxu0 0
      %725 = vmatpush1.bf16.xpose.msra.mxu0 0
      %726 = vmatprep.subr.bf16.mxu0 0
      %727 = vmatpush1.bf16.xpose.msra.mxu0 0
      %728 = vmatprep.subr.bf16.mxu0 0
      %729 = vmatpush1.bf16.xpose.msra.mxu0 0
      %730 = vmatprep.subr.bf16.mxu0 0
      %731 = vmatpush1.bf16.xpose.msra.mxu0 0
      %732 = vmatprep.subr.bf16.mxu0 0
      %733 = vmatpush1.bf16.xpose.msra.mxu0 0
      %734 = vmatprep.subr.bf16.mxu0 0
      %735 = vmatpush1.bf16.xpose.msra.mxu0 0
      %736 = vmatprep.subr.bf16.mxu0 0
      %737 = vmatpush1.bf16.xpose.msra.mxu0 0
      %738 = vmatprep.subr.bf16.mxu0 0
      %739 = vmatpush1.bf16.xpose.msra.mxu0 0
      %740 = vmatprep.subr.bf16.mxu0 0
      %741 = vmatpush1.bf16.xpose.msra.mxu0 0
      %742 = vmatprep.subr.bf16.mxu0 0
      %743 = vmatpush1.bf16.xpose.msra.mxu0 0
      %744 = vmatprep.subr.bf16.mxu0 0
      %745 = vmatpush1.bf16.xpose.msra.mxu0 0
      %746 = vmatprep.subr.bf16.mxu0 0
      %747 = vmatpush1.bf16.xpose.msra.mxu0 0
      %748 = vmatprep.subr.bf16.mxu0 0
      %749 = vmatpush1.bf16.xpose.msra.mxu0 0
      %750 = vmatprep.subr.bf16.mxu0 0
      %751 = vmatpush1.bf16.xpose.msra.mxu0 0
      %752 = vmatprep.mubr.bf16.mxu0 0
      %753 = vmatmul.mubr.bf16.gmra.mrb[0].mxu0 %v715
      %v754 = vpop.f32.mrb[0].mxu0
      %v755 = vadd.f32 0.0, %v754
      %v756 = vpop.f32.mrb[0].mxu0
      %v757 = vpop.f32.mrb[0].mxu0
      %v758 = vpop.f32.mrb[0].mxu0
      %759 = vdwg.mxu0
      %v760 = vsel %vm644, %v755, -1e+10
      %v761 = vsel %vm589, %v760, -inf
      %762 = vmax.xlane.f32.xlu0 %v761
      %v763 = vpop.xlane.xlu0 %762
      %v764 = vsub.f32 %v760, %v763
      %v765 = vmul.f32 %v764, 1.442695
      %v766 = vpow.pop %v765
      %v767 = vsel %vm589, %v766, 0.0
      %768 = vadd.xlane.f32.xlu0 %v767
      %v769 = vpop.xlane.xlu0 %768
      %v770 = vrcp.pop %v769
      %v771 = vmul.f32 %v766, %v770
      %v772 = vpack.c.bf16 %v771, %v771
      %773 = vrot.lane.b32.xlu0 %v588, 88
      %v774 = vpop.permute.xlu0 %773
      %v776 = vsel %vm589, %v772, 0
      %v779 = vsel %vm664, %v774, 0
      %781 = vmatprep.subr.bf16.mxu0 0
      %782 = vmatpush1.bf16.msra.mxu0 %v779
      %783 = vmatprep.subr.bf16.mxu0 0
      %784 = vmatpush1.bf16.msra.mxu0 0
      %785 = vmatprep.subr.bf16.mxu0 0
      %786 = vmatpush1.bf16.msra.mxu0 0
      %787 = vmatprep.subr.bf16.mxu0 0
      %788 = vmatpush1.bf16.msra.mxu0 0
      %789 = vmatprep.subr.bf16.mxu0 0
      %790 = vmatpush1.bf16.msra.mxu0 0
      %791 = vmatprep.subr.bf16.mxu0 0
      %792 = vmatpush1.bf16.msra.mxu0 0
      %793 = vmatprep.subr.bf16.mxu0 0
      %794 = vmatpush1.bf16.msra.mxu0 0
      %795 = vmatprep.subr.bf16.mxu0 0
      %796 = vmatpush1.bf16.msra.mxu0 0
      %797 = vmatprep.subr.bf16.mxu0 0
      %798 = vmatpush1.bf16.msra.mxu0 0
      %799 = vmatprep.subr.bf16.mxu0 0
      %800 = vmatpush1.bf16.msra.mxu0 0
      %801 = vmatprep.subr.bf16.mxu0 0
      %802 = vmatpush1.bf16.msra.mxu0 0
      %803 = vmatprep.subr.bf16.mxu0 0
      %804 = vmatpush1.bf16.msra.mxu0 0
      %805 = vmatprep.subr.bf16.mxu0 0
      %806 = vmatpush1.bf16.msra.mxu0 0
      %807 = vmatprep.subr.bf16.mxu0 0
      %808 = vmatpush1.bf16.msra.mxu0 0
      %809 = vmatprep.subr.bf16.mxu0 0
      %810 = vmatpush1.bf16.msra.mxu0 0
      %811 = vmatprep.subr.bf16.mxu0 0
      %812 = vmatpush1.bf16.msra.mxu0 0
      %813 = vmatprep.mubr.bf16.mxu0 0
      %814 = vmatmul.mubr.bf16.gmra.mrb[0].mxu0 %v776
      %v815 = vpop.f32.mrb[0].mxu0
      %v816 = vadd.f32 0.0, %v815
      %v817 = vpop.f32.mrb[0].mxu0
      %v818 = vpop.f32.mrb[0].mxu0
      %v819 = vpop.f32.mrb[0].mxu0
      %820 = vdwg.mxu0
      %822 = vrot.lane.b32.xlu0 %v816, 8
      %v823 = vpop.permute.xlu0 %822
      %vm825 = vcmask 130112
      %826 = vst.msk [vmem:[#allocation2] sm:$0xff] %vm825, %v823
      %827 = vrot.lane.b32.xlu0 %v587, 112
      %v828 = vpop.permute.xlu0 %827
      %829 = vrot.lane.b32.xlu0 %v588, 112
      %v830 = vpop.permute.xlu0 %829
      %v832 = vsel %vm589, %v828, 0
      %v835 = vsel %vm589, %v830, 0
      %837 = vmatprep.subr.bf16.mxu0 0
      %838 = vmatpush1.bf16.xpose.msra.mxu0 %v835
      %839 = vmatprep.subr.bf16.mxu0 0
      %840 = vmatpush1.bf16.xpose.msra.mxu0 0
      %841 = vmatprep.subr.bf16.mxu0 0
      %842 = vmatpush1.bf16.xpose.msra.mxu0 0
      %843 = vmatprep.subr.bf16.mxu0 0
      %844 = vmatpush1.bf16.xpose.msra.mxu0 0
      %845 = vmatprep.subr.bf16.mxu0 0
      %846 = vmatpush1.bf16.xpose.msra.mxu0 0
      %847 = vmatprep.subr.bf16.mxu0 0
      %848 = vmatpush1.bf16.xpose.msra.mxu0 0
      %849 = vmatprep.subr.bf16.mxu0 0
      %850 = vmatpush1.bf16.xpose.msra.mxu0 0
      %851 = vmatprep.subr.bf16.mxu0 0
      %852 = vmatpush1.bf16.xpose.msra.mxu0 0
      %853 = vmatprep.subr.bf16.mxu0 0
      %854 = vmatpush1.bf16.xpose.msra.mxu0 0
      %855 = vmatprep.subr.bf16.mxu0 0
      %856 = vmatpush1.bf16.xpose.msra.mxu0 0
      %857 = vmatprep.subr.bf16.mxu0 0
      %858 = vmatpush1.bf16.xpose.msra.mxu0 0
      %859 = vmatprep.subr.bf16.mxu0 0
      %860 = vmatpush1.bf16.xpose.msra.mxu0 0
      %861 = vmatprep.subr.bf16.mxu0 0
      %862 = vmatpush1.bf16.xpose.msra.mxu0 0
      %863 = vmatprep.subr.bf16.mxu0 0
      %864 = vmatpush1.bf16.xpose.msra.mxu0 0
      %865 = vmatprep.subr.bf16.mxu0 0
      %866 = vmatpush1.bf16.xpose.msra.mxu0 0
      %867 = vmatprep.subr.bf16.mxu0 0
      %868 = vmatpush1.bf16.xpose.msra.mxu0 0
      %869 = vmatprep.mubr.bf16.mxu0 0
      %870 = vmatmul.mubr.bf16.gmra.mrb[0].mxu0 %v832
      %v871 = vpop.f32.mrb[0].mxu0
      %v872 = vadd.f32 0.0, %v871
      %v873 = vpop.f32.mrb[0].mxu0
      %v874 = vpop.f32.mrb[0].mxu0
      %v875 = vpop.f32.mrb[0].mxu0
      %876 = vdwg.mxu0
      %v877 = vsel %vm644, %v872, -1e+10
      %v878 = vsel %vm589, %v877, -inf
      %879 = vmax.xlane.f32.xlu0 %v878
      %v880 = vpop.xlane.xlu0 %879
      %v881 = vsub.f32 %v877, %v880
      %v882 = vmul.f32 %v881, 1.442695
      %v883 = vpow.pop %v882
      %v884 = vsel %vm589, %v883, 0.0
      %885 = vadd.xlane.f32.xlu0 %v884
      %v886 = vpop.xlane.xlu0 %885
      %v887 = vrcp.pop %v886
      %v888 = vmul.f32 %v883, %v887
      %v889 = vpack.c.bf16 %v888, %v888
      %890 = vrot.lane.b32.xlu0 %v588, 80
      %v891 = vpop.permute.xlu0 %890
      %v893 = vsel %vm589, %v889, 0
      %v896 = vsel %vm664, %v891, 0
      %898 = vmatprep.subr.bf16.mxu0 0
      %899 = vmatpush1.bf16.msra.mxu0 %v896
      %900 = vmatprep.subr.bf16.mxu0 0
      %901 = vmatpush1.bf16.msra.mxu0 0
      %902 = vmatprep.subr.bf16.mxu0 0
      %903 = vmatpush1.bf16.msra.mxu0 0
      %904 = vmatprep.subr.bf16.mxu0 0
      %905 = vmatpush1.bf16.msra.mxu0 0
      %906 = vmatprep.subr.bf16.mxu0 0
      %907 = vmatpush1.bf16.msra.mxu0 0
      %908 = vmatprep.subr.bf16.mxu0 0
      %909 = vmatpush1.bf16.msra.mxu0 0
      %910 = vmatprep.subr.bf16.mxu0 0
      %911 = vmatpush1.bf16.msra.mxu0 0
      %912 = vmatprep.subr.bf16.mxu0 0
      %913 = vmatpush1.bf16.msra.mxu0 0
      %914 = vmatprep.subr.bf16.mxu0 0
      %915 = vmatpush1.bf16.msra.mxu0 0
      %916 = vmatprep.subr.bf16.mxu0 0
      %917 = vmatpush1.bf16.msra.mxu0 0
      %918 = vmatprep.subr.bf16.mxu0 0
      %919 = vmatpush1.bf16.msra.mxu0 0
      %920 = vmatprep.subr.bf16.mxu0 0
      %921 = vmatpush1.bf16.msra.mxu0 0
      %922 = vmatprep.subr.bf16.mxu0 0
      %923 = vmatpush1.bf16.msra.mxu0 0
      %924 = vmatprep.subr.bf16.mxu0 0
      %925 = vmatpush1.bf16.msra.mxu0 0
      %926 = vmatprep.subr.bf16.mxu0 0
      %927 = vmatpush1.bf16.msra.mxu0 0
      %928 = vmatprep.subr.bf16.mxu0 0
      %929 = vmatpush1.bf16.msra.mxu0 0
      %930 = vmatprep.mubr.bf16.mxu0 0
      %931 = vmatmul.mubr.bf16.gmra.mrb[0].mxu0 %v893
      %v932 = vpop.f32.mrb[0].mxu0
      %v933 = vadd.f32 0.0, %v932
      %v934 = vpop.f32.mrb[0].mxu0
      %v935 = vpop.f32.mrb[0].mxu0
      %v936 = vpop.f32.mrb[0].mxu0
      %937 = vdwg.mxu0
      %939 = vrot.lane.b32.xlu0 %v933, 16
      %v940 = vpop.permute.xlu0 %939
      %vm942 = vcmask 195712
      %943 = vst.msk [vmem:[#allocation2] sm:$0xff] %vm942, %v940
      %944 = vrot.lane.b32.xlu0 %v587, 104
      %v945 = vpop.permute.xlu0 %944
      %946 = vrot.lane.b32.xlu0 %v588, 104
      %v947 = vpop.permute.xlu0 %946
      %v949 = vsel %vm589, %v945, 0
      %v952 = vsel %vm589, %v947, 0
      %954 = vmatprep.subr.bf16.mxu0 0
      %955 = vmatpush1.bf16.xpose.msra.mxu0 %v952
      %956 = vmatprep.subr.bf16.mxu0 0
      %957 = vmatpush1.bf16.xpose.msra.mxu0 0
      %958 = vmatprep.subr.bf16.mxu0 0
      %959 = vmatpush1.bf16.xpose.msra.mxu0 0
      %960 = vmatprep.subr.bf16.mxu0 0
      %961 = vmatpush1.bf16.xpose.msra.mxu0 0
      %962 = vmatprep.subr.bf16.mxu0 0
      %963 = vmatpush1.bf16.xpose.msra.mxu0 0
      %964 = vmatprep.subr.bf16.mxu0 0
      %965 = vmatpush1.bf16.xpose.msra.mxu0 0
      %966 = vmatprep.subr.bf16.mxu0 0
      %967 = vmatpush1.bf16.xpose.msra.mxu0 0
      %968 = vmatprep.subr.bf16.mxu0 0
      %969 = vmatpush1.bf16.xpose.msra.mxu0 0
      %970 = vmatprep.subr.bf16.mxu0 0
      %971 = vmatpush1.bf16.xpose.msra.mxu0 0
      %972 = vmatprep.subr.bf16.mxu0 0
      %973 = vmatpush1.bf16.xpose.msra.mxu0 0
      %974 = vmatprep.subr.bf16.mxu0 0
      %975 = vmatpush1.bf16.xpose.msra.mxu0 0
      %976 = vmatprep.subr.bf16.mxu0 0
      %977 = vmatpush1.bf16.xpose.msra.mxu0 0
      %978 = vmatprep.subr.bf16.mxu0 0
      %979 = vmatpush1.bf16.xpose.msra.mxu0 0
      %980 = vmatprep.subr.bf16.mxu0 0
      %981 = vmatpush1.bf16.xpose.msra.mxu0 0
      %982 = vmatprep.subr.bf16.mxu0 0
      %983 = vmatpush1.bf16.xpose.msra.mxu0 0
      %984 = vmatprep.subr.bf16.mxu0 0
      %985 = vmatpush1.bf16.xpose.msra.mxu0 0
      %986 = vmatprep.mubr.bf16.mxu0 0
      %987 = vmatmul.mubr.bf16.gmra.mrb[0].mxu0 %v949
      %v988 = vpop.f32.mrb[0].mxu0
      %v989 = vadd.f32 0.0, %v988
      %v990 = vpop.f32.mrb[0].mxu0
      %v991 = vpop.f32.mrb[0].mxu0
      %v992 = vpop.f32.mrb[0].mxu0
      %993 = vdwg.mxu0
      %v994 = vsel %vm644, %v989, -1e+10
      %v995 = vsel %vm589, %v994, -inf
      %996 = vmax.xlane.f32.xlu0 %v995
      %v997 = vpop.xlane.xlu0 %996
      %v998 = vsub.f32 %v994, %v997
      %v999 = vmul.f32 %v998, 1.442695
      %v1000 = vpow.pop %v999
      %v1001 = vsel %vm589, %v1000, 0.0
      %1002 = vadd.xlane.f32.xlu0 %v1001
      %v1003 = vpop.xlane.xlu0 %1002
      %v1004 = vrcp.pop %v1003
      %v1005 = vmul.f32 %v1000, %v1004
      %v1006 = vpack.c.bf16 %v1005, %v1005
      %1007 = vrot.lane.b32.xlu0 %v588, 72
      %v1008 = vpop.permute.xlu0 %1007
      %v1010 = vsel %vm589, %v1006, 0
      %v1013 = vsel %vm664, %v1008, 0
      %1015 = vmatprep.subr.bf16.mxu0 0
      %1016 = vmatpush1.bf16.msra.mxu0 %v1013
      %1017 = vmatprep.subr.bf16.mxu0 0
      %1018 = vmatpush1.bf16.msra.mxu0 0
      %1019 = vmatprep.subr.bf16.mxu0 0
      %1020 = vmatpush1.bf16.msra.mxu0 0
      %1021 = vmatprep.subr.bf16.mxu0 0
      %1022 = vmatpush1.bf16.msra.mxu0 0
      %1023 = vmatprep.subr.bf16.mxu0 0
      %1024 = vmatpush1.bf16.msra.mxu0 0
      %1025 = vmatprep.subr.bf16.mxu0 0
      %1026 = vmatpush1.bf16.msra.mxu0 0
      %1027 = vmatprep.subr.bf16.mxu0 0
      %1028 = vmatpush1.bf16.msra.mxu0 0
      %1029 = vmatprep.subr.bf16.mxu0 0
      %1030 = vmatpush1.bf16.msra.mxu0 0
      %1031 = vmatprep.subr.bf16.mxu0 0
      %1032 = vmatpush1.bf16.msra.mxu0 0
      %1033 = vmatprep.subr.bf16.mxu0 0
      %1034 = vmatpush1.bf16.msra.mxu0 0
      %1035 = vmatprep.subr.bf16.mxu0 0
      %1036 = vmatpush1.bf16.msra.mxu0 0
      %1037 = vmatprep.subr.bf16.mxu0 0
      %1038 = vmatpush1.bf16.msra.mxu0 0
      %1039 = vmatprep.subr.bf16.mxu0 0
      %1040 = vmatpush1.bf16.msra.mxu0 0
      %1041 = vmatprep.subr.bf16.mxu0 0
      %1042 = vmatpush1.bf16.msra.mxu0 0
      %1043 = vmatprep.subr.bf16.mxu0 0
      %1044 = vmatpush1.bf16.msra.mxu0 0
      %1045 = vmatprep.subr.bf16.mxu0 0
      %1046 = vmatpush1.bf16.msra.mxu0 0
      %1047 = vmatprep.mubr.bf16.mxu0 0
      %1048 = vmatmul.mubr.bf16.gmra.mrb[0].mxu0 %v1010
      %v1049 = vpop.f32.mrb[0].mxu0
      %v1050 = vadd.f32 0.0, %v1049
      %v1051 = vpop.f32.mrb[0].mxu0
      %v1052 = vpop.f32.mrb[0].mxu0
      %v1053 = vpop.f32.mrb[0].mxu0
      %1054 = vdwg.mxu0
      %1056 = vrot.lane.b32.xlu0 %v1050, 24
      %v1057 = vpop.permute.xlu0 %1056
      %vm1059 = vcmask 261312
      %1060 = vst.msk [vmem:[#allocation2] sm:$0xff] %vm1059, %v1057
      %v1061 = vld [vmem:[#allocation2] sm:$0xff]
      %v1062 = vpack.c.bf16 %v1061, %v1061
      %v1063 = vld [vmem:[%s7] sm:$0xf]
      %v1064 = vld [vmem:[%s7 + $0x4] sm:$0xf]
      %v1065 = vld [vmem:[%s7 + $0x8] sm:$0xf]
      %v1066 = vld [vmem:[%s7 + $0xc] sm:$0xf]
      %v1067 = vld [vmem:[%s8] sm:$0x1]
      %v1069 = vlaneseq
      %v1070 = vshrl.u32 %v1069, 7
      %v1071 = vsub.s32 0, %v1070
      %v1072 = vrot.slane %v1067, %v1071
      %v1078 = vunpack.c.l.b16 %v1063
      %v1079 = vunpack.c.l.b16 %v1064
      %v1080 = vunpack.c.l.b16 %v1065
      %v1081 = vunpack.c.l.b16 %v1066
      %v1082 = vpack.c.b16 %v1079, %v1078
      %v1083 = vpack.c.b16 %v1081, %v1080
      %v1087 = vsel %vm475, %v1062, 0
      %1089 = vmatprep.subr.bf16.mxu0 0
      %1090 = vmatpush1.bf16.msra.mxu0 %v1082
      %1091 = vmatprep.subr.bf16.mxu0 0
      %1092 = vmatpush1.bf16.msra.mxu0 %v1083
      %1093 = vmatprep.subr.bf16.mxu0 0
      %1094 = vmatpush1.bf16.msra.mxu0 0
      %1095 = vmatprep.subr.bf16.mxu0 0
      %1096 = vmatpush1.bf16.msra.mxu0 0
      %1097 = vmatprep.subr.bf16.mxu0 0
      %1098 = vmatpush1.bf16.msra.mxu0 0
      %1099 = vmatprep.subr.bf16.mxu0 0
      %1100 = vmatpush1.bf16.msra.mxu0 0
      %1101 = vmatprep.subr.bf16.mxu0 0
      %1102 = vmatpush1.bf16.msra.mxu0 0
      %1103 = vmatprep.subr.bf16.mxu0 0
      %1104 = vmatpush1.bf16.msra.mxu0 0
      %1105 = vmatprep.subr.bf16.mxu0 0
      %1106 = vmatpush1.bf16.msra.mxu0 0
      %1107 = vmatprep.subr.bf16.mxu0 0
      %1108 = vmatpush1.bf16.msra.mxu0 0
      %1109 = vmatprep.subr.bf16.mxu0 0
      %1110 = vmatpush1.bf16.msra.mxu0 0
      %1111 = vmatprep.subr.bf16.mxu0 0
      %1112 = vmatpush1.bf16.msra.mxu0 0
      %1113 = vmatprep.subr.bf16.mxu0 0
      %1114 = vmatpush1.bf16.msra.mxu0 0
      %1115 = vmatprep.subr.bf16.mxu0 0
      %1116 = vmatpush1.bf16.msra.mxu0 0
      %1117 = vmatprep.subr.bf16.mxu0 0
      %1118 = vmatpush1.bf16.msra.mxu0 0
      %1119 = vmatprep.subr.bf16.mxu0 0
      %1120 = vmatpush1.bf16.msra.mxu0 0
      %1121 = vmatprep.mubr.bf16.mxu0 0
      %1122 = vmatmul.mubr.bf16.gmra.mrb[0].mxu0 %v1087
      %v1123 = vpop.f32.mrb[0].mxu0
      %v1124 = vadd.f32 %v1072, %v1123
      %v1125 = vpop.f32.mrb[0].mxu0
      %v1126 = vpop.f32.mrb[0].mxu0
      %v1127 = vpop.f32.mrb[0].mxu0
      %1128 = vdwg.mxu0
      %v1129 = vadd.f32 %v447, %v1124
      %v1130 = vsel %vm475, %v1129, 0.0
      %1131 = vadd.xlane.f32.xlu0 %v1130
      %v1132 = vpop.xlane.xlu0 %1131
      %v1133 = vrcp.pop 32.0
      %v1134 = vmul.f32 %v1132, %v1133
      %v1135 = vsub.f32 %v1129, %v1134
      %v1136 = vmul.f32 %v1135, %v1135
      %v1137 = vsel %vm475, %v1136, 0.0
      %1138 = vadd.xlane.f32.xlu0 %v1137
      %v1139 = vpop.xlane.xlu0 %1138
      %v1140 = vmul.f32 %v1139, %v1133
      %v1141 = vadd.f32 %v1140, 1e-05
      %v1142 = vrsqrt.pop %v1141
      %v1143 = vmul.f32 %v1135, %v1142
      %v1144 = vld [vmem:[%s9] sm:$0x1]
      %v1146 = vlaneseq
      %v1147 = vshrl.u32 %v1146, 7
      %v1148 = vsub.s32 0, %v1147
      %v1149 = vrot.slane %v1144, %v1148
      %v1151 = vmul.f32 %v1143, %v1149
      %v1152 = vld [vmem:[%s10] sm:$0x1]
      %v1154 = vlaneseq
      %v1155 = vshrl.u32 %v1154, 7
      %v1156 = vsub.s32 0, %v1155
      %v1157 = vrot.slane %v1152, %v1156
      %v1159 = vadd.f32 %v1151, %v1157
      %1160 = vst.msk [vmem:[%s443] sm:$0xff] %vm475, %v1159
      %p1161 = scmp.lt.s32.totalorder %s26, 1
      %s1162 = scalar_select %p1161, %s26, 1
      %p1163 = scmp.lt.s32.totalorder %s27, 0
      %s1164 = scalar_select %p1163, %s27, 0
      %s1165 = sadd.s32 %s1164, %s1162
      %s1166 = smul.addr %s1165, 8
      %s1167 = scalar_lea.vmem %s11, %s1166
      // Predicated region
      $region65: #{decoder_forward.8} parent=63 // pred_check
        %p1168 = pneg %p302
      $region66: #{decoder_forward.8} parent=63 // pred_check_branch
        %1170 = sbr.rel (%p1168) target = $region68
      $region67: #{decoder_forward.8} parent=63 // pred_region
        _
      $region68: #{decoder_forward.8} parent=63 // pred_fallthru
        _
    $region64: #{decoder_forward.8} parent=5 // pred_fallthru
      _
    %p1171 = scmp.le.s32.totalorder 2, %s17
    // Predicated region
    $region69: #{decoder_forward.8} parent=5 // pred_check
      %p1172 = pneg %p1171
    $region70: #{decoder_forward.8} parent=5 // pred_check_branch
      %1174 = sbr.rel (%p1172) target = $region72
    $region71: #{decoder_forward.8} parent=5 // pred_region
      %s1175 = ssub.s32 %s17, 2
      // Predicated region
      $region73: #{decoder_forward.8} parent=71 // pred_check
        %p1176 = pneg %p308
      $region74: #{decoder_forward.8} parent=71 // pred_check_branch
        %1178 = sbr.rel (%p1176) target = $region76
      $region75: #{decoder_forward.8} parent=71 // pred_region
        %p1179 = scmp.lt.s32.totalorder %s28, 1
        %s1180 = scalar_select %p1179, %s28, 1
        %p1181 = scmp.lt.s32.totalorder %s29, 0
        %s1182 = scalar_select %p1181, %s29, 0
        %s1183 = sadd.s32 %s1182, %s1180
        %s1184 = smul.addr %s1183, 8
        %s1185 = scalar_lea.vmem %s11, %s1184
      $region76: #{decoder_forward.8} parent=71 // pred_fallthru
        _
    $region72: #{decoder_forward.8} parent=5 // pred_fallthru
      _
  $region6: #{decoder_forward.8} parent=0 // loop_footer
    %s21 = sadd.s32 1, %s17
  $region7: #{decoder_forward.8} parent=0 // loop_footer_branch
    %16 = sbr.rel target = $region3
  $region8: #{decoder_forward.8} parent=0 // loop_exit
    _

// kernel: decoder_forward.7
$region0: #{decoder_forward.7}
  #allocation0 [shape = 'u32[]', space=smem, size = 0x4, offset = 0x4, fixed_abs, tag = 'smem constant byte address 0x4 - core index']
  #allocation1 [shape = 'u32[144,128]{1,0:T(1,128)}', space=vmem, size = 0x12000, scoped, tag = 'internal scratch']
  #allocation2 [shape = 'f32[8,32]{1,0:T(8,128)}', space=vmem, size = 0x1000, scoped, tag = 'scratch operand']
  %s0 = inlined_call_operand.vmem [shape: f32[2,8,32], index: 0, kind: input, shape index: {}, may-alias: {0,1}]
  %s1 = inlined_call_operand.vmem [shape: f32[2,8,32], index: 1, kind: input, shape index: {}, may-alias: {0,1}]
  %s2 = inlined_call_operand.vmem [shape: bf16[2,1,8,8], index: 2, kind: input, shape index: {}]
  %s3 = inlined_call_operand.vmem [shape: bf16[32,32], index: 3, kind: input, shape index: {}]
  %s4 = inlined_call_operand.vmem [shape: f32[1,32], index: 4, kind: input, shape index: {}]
  %s5 = inlined_call_operand.vmem [shape: bf16[32,64], index: 5, kind: input, shape index: {}]
  %s6 = inlined_call_operand.vmem [shape: f32[1,64], index: 6, kind: input, shape index: {}]
  %s7 = inlined_call_operand.vmem [shape: bf16[32,32], index: 7, kind: input, shape index: {}]
  %s8 = inlined_call_operand.vmem [shape: f32[1,32], index: 8, kind: input, shape index: {}]
  %s9 = inlined_call_operand.vmem [shape: f32[1,32], index: 9, kind: input, shape index: {}]
  %s10 = inlined_call_operand.vmem [shape: f32[1,32], index: 10, kind: input, shape index: {}]
  %s11 = inlined_call_operand.vmem [shape: f32[2,8,32], index: 11, kind: output, shape index: {}]
  %s12 = sld [smem:[#allocation0]]
  $region77: #{decoder_forward.7} parent=0
    _
  %s14 = ssub.s32 1, %s12
  %s15 = scalar_select 0, %s14, %s12
  loop: start=0, step=1, limit=4
  $region2: #{decoder_forward.7} parent=0 // loop_pre_header
    _
  $region3: #{decoder_forward.7} parent=0 // loop_header
    %s17 = sphi 0, %s21
    %p18 = scmp.ge.s32.totalorder %s17, 4
    %s24 = sphi 0, %s36
    %s25 = sphi 0, %s32
    %s26 = sphi 0, %s24
    %s27 = sphi 0, %s25
    %s28 = sphi 0, %s26
    %s29 = sphi 0, %s27
    %s41 = sphi 0, %s43
    %s44 = sphi 0, %s41
    %s45 = sphi 0, %s44
    %s61 = sphi 0, %s45
    %s67 = sphi 0, %s69
    %s70 = sphi 0, %s67
    %s71 = sphi 0, %s70
    %s87 = sphi 0, %s71
    %s95 = sphi 0, %s97
    %s98 = sphi 0, %s95
    %s99 = sphi 0, %s98
    %s115 = sphi 0, %s99
    %s119 = sphi 0, %s119
    %s121 = sphi 0, %s119
    %s122 = sphi 0, %s121
    %s136 = sphi 0, %s122
    %s140 = sphi 0, %s140
    %s142 = sphi 0, %s140
    %s143 = sphi 0, %s142
    %s157 = sphi 0, %s143
    %s161 = sphi 0, %s161
    %s163 = sphi 0, %s161
    %s164 = sphi 0, %s163
    %s178 = sphi 0, %s164
    %s182 = sphi 0, %s182
    %s184 = sphi 0, %s182
    %s185 = sphi 0, %s184
    %s199 = sphi 0, %s185
    %s203 = sphi 0, %s203
    %s205 = sphi 0, %s203
    %s206 = sphi 0, %s205
    %s220 = sphi 0, %s206
    %s224 = sphi 0, %s224
    %s226 = sphi 0, %s224
    %s227 = sphi 0, %s226
    %s241 = sphi 0, %s227
    %s245 = sphi 0, %s245
    %s247 = sphi 0, %s245
    %s248 = sphi 0, %s247
    %s262 = sphi 0, %s248
    %s266 = sphi 0, %s266
    %s268 = sphi 0, %s266
    %s269 = sphi 0, %s268
    %s283 = sphi 0, %s269
    %s291 = sphi 0, %s293
    %s294 = sphi 0, %s291
    %s295 = sphi 0, %s294
    %s311 = sphi 0, %s295
  $region4: #{decoder_forward.7} parent=0 // loop_header_branch
    %20 = sbr.rel (%p18) target = $region8
  $region5: #{decoder_forward.7} parent=0 // loop_body
    %s22 = ssub.s32 %s17, 1
    %s23 = ssub.s32 %s17, 2
    %s30 = sadd.s32 1, %s25
    %p31 = scmp.ge.s32.totalorder %s30, 1
    %s32 = scalar_select %p31, 0, %s30
    %s33 = sadd.s32 1, %s24
    %s34 = scalar_select %p31, %s33, %s24
    %p35 = scmp.ge.s32.totalorder %s34, 2
    %s36 = scalar_select %p35, 0, %s34
    %s37 = ssub.s32 %s24, %s36
    %s38 = ssub.s32 %s25, %s32
    %s39 = sor.u32 %s37, %s38
    %p40 = scmp.eq.s32.totalorder %s39, 0
    %s42 = sadd.s32 %s41, 1
    %s43 = scalar_select %p40, %s41, %s42
    %p46 = pneg %p40
    %p47 = scmp.eq.s32.totalorder %s17, 1
    %p48 = por %p46, %p47
    %p49 = scmp.ne.s32.totalorder %s41, %s44
    %p50 = scmp.eq.s32.totalorder %s17, 0
    %p51 = por %p49, %p50
    %p52 = scmp.ne.s32.totalorder %s41, %s44
    %p53 = scmp.eq.s32.totalorder %s22, 1
    %p54 = por %p52, %p53
    %p55 = scmp.ne.s32.totalorder %s44, %s45
    %p56 = scmp.eq.s32.totalorder %s22, 0
    %p57 = por %p55, %p56
    %p58 = scmp.ne.s32.totalorder %s44, %s45
    %p59 = scmp.eq.s32.totalorder %s23, 1
    %p60 = por %p58, %p59
    %p62 = scmp.ne.s32.totalorder %s45, %s61
    %p63 = scmp.eq.s32.totalorder %s23, 0
    %p64 = por %p62, %p63
    %s65 = ssub.s32 %s24, %s36
    %p66 = scmp.eq.s32.totalorder %s65, 0
    %s68 = sadd.s32 %s67, 1
    %s69 = scalar_select %p66, %s67, %s68
    %p72 = pneg %p66
    %p73 = scmp.eq.s32.totalorder %s17, 1
    %p74 = por %p72, %p73
    %p75 = scmp.ne.s32.totalorder %s67, %s70
    %p76 = scmp.eq.s32.totalorder %s17, 0
    %p77 = por %p75, %p76
    %p78 = scmp.ne.s32.totalorder %s67, %s70
    %p79 = scmp.eq.s32.totalorder %s22, 1
    %p80 = por %p78, %p79
    %p81 = scmp.ne.s32.totalorder %s70, %s71
    %p82 = scmp.eq.s32.totalorder %s22, 0
    %p83 = por %p81, %p82
    %p84 = scmp.ne.s32.totalorder %s70, %s71
    %p85 = scmp.eq.s32.totalorder %s23, 1
    %p86 = por %p84, %p85
    %p88 = scmp.ne.s32.totalorder %s71, %s87
    %p89 = scmp.eq.s32.totalorder %s23, 0
    %p90 = por %p88, %p89
    %s91 = ssub.s32 %s24, %s36
    %s92 = ssub.s32 %s25, %s32
    %s93 = sor.u32 %s91, %s92
    %p94 = scmp.eq.s32.totalorder %s93, 0
    %s96 = sadd.s32 %s95, 1
    %s97 = scalar_select %p94, %s95, %s96
    %p100 = pneg %p94
    %p101 = scmp.eq.s32.totalorder %s17, 1
    %p102 = por %p100, %p101
    %p103 = scmp.ne.s32.totalorder %s95, %s98
    %p104 = scmp.eq.s32.totalorder %s17, 0
    %p105 = por %p103, %p104
    %p106 = scmp.ne.s32.totalorder %s95, %s98
    %p107 = scmp.eq.s32.totalorder %s22, 1
    %p108 = por %p106, %p107
    %p109 = scmp.ne.s32.totalorder %s98, %s99
    %p110 = scmp.eq.s32.totalorder %s22, 0
    %p111 = por %p109, %p110
    %p112 = scmp.ne.s32.totalorder %s98, %s99
    %p113 = scmp.eq.s32.totalorder %s23, 1
    %p114 = por %p112, %p113
    %p116 = scmp.ne.s32.totalorder %s99, %s115
    %p117 = scmp.eq.s32.totalorder %s23, 0
    %p118 = por %p116, %p117
    %s120 = sadd.s32 %s119, 1
    %p123 = scmp.eq.s32.totalorder %s17, 1
    %p124 = scmp.ne.s32.totalorder %s119, %s121
    %p125 = scmp.eq.s32.totalorder %s17, 0
    %p126 = por %p124, %p125
    %p127 = scmp.ne.s32.totalorder %s119, %s121
    %p128 = scmp.eq.s32.totalorder %s22, 1
    %p129 = por %p127, %p128
    %p130 = scmp.ne.s32.totalorder %s121, %s122
    %p131 = scmp.eq.s32.totalorder %s22, 0
    %p132 = por %p130, %p131
    %p133 = scmp.ne.s32.totalorder %s121, %s122
    %p134 = scmp.eq.s32.totalorder %s23, 1
    %p135 = por %p133, %p134
    %p137 = scmp.ne.s32.totalorder %s122, %s136
    %p138 = scmp.eq.s32.totalorder %s23, 0
    %p139 = por %p137, %p138
    %s141 = sadd.s32 %s140, 1
    %p144 = scmp.eq.s32.totalorder %s17, 1
    %p145 = scmp.ne.s32.totalorder %s140, %s142
    %p146 = scmp.eq.s32.totalorder %s17, 0
    %p147 = por %p145, %p146
    %p148 = scmp.ne.s32.totalorder %s140, %s142
    %p149 = scmp.eq.s32.totalorder %s22, 1
    %p150 = por %p148, %p149
    %p151 = scmp.ne.s32.totalorder %s142, %s143
    %p152 = scmp.eq.s32.totalorder %s22, 0
    %p153 = por %p151, %p152
    %p154 = scmp.ne.s32.totalorder %s142, %s143
    %p155 = scmp.eq.s32.totalorder %s23, 1
    %p156 = por %p154, %p155
    %p158 = scmp.ne.s32.totalorder %s143, %s157
    %p159 = scmp.eq.s32.totalorder %s23, 0
    %p160 = por %p158, %p159
    %s162 = sadd.s32 %s161, 1
    %p165 = scmp.eq.s32.totalorder %s17, 1
    %p166 = scmp.ne.s32.totalorder %s161, %s163
    %p167 = scmp.eq.s32.totalorder %s17, 0
    %p168 = por %p166, %p167
    %p169 = scmp.ne.s32.totalorder %s161, %s163
    %p170 = scmp.eq.s32.totalorder %s22, 1
    %p171 = por %p169, %p170
    %p172 = scmp.ne.s32.totalorder %s163, %s164
    %p173 = scmp.eq.s32.totalorder %s22, 0
    %p174 = por %p172, %p173
    %p175 = scmp.ne.s32.totalorder %s163, %s164
    %p176 = scmp.eq.s32.totalorder %s23, 1
    %p177 = por %p175, %p176
    %p179 = scmp.ne.s32.totalorder %s164, %s178
    %p180 = scmp.eq.s32.totalorder %s23, 0
    %p181 = por %p179, %p180
    %s183 = sadd.s32 %s182, 1
    %p186 = scmp.eq.s32.totalorder %s17, 1
    %p187 = scmp.ne.s32.totalorder %s182, %s184
    %p188 = scmp.eq.s32.totalorder %s17, 0
    %p189 = por %p187, %p188
    %p190 = scmp.ne.s32.totalorder %s182, %s184
    %p191 = scmp.eq.s32.totalorder %s22, 1
    %p192 = por %p190, %p191
    %p193 = scmp.ne.s32.totalorder %s184, %s185
    %p194 = scmp.eq.s32.totalorder %s22, 0
    %p195 = por %p193, %p194
    %p196 = scmp.ne.s32.totalorder %s184, %s185
    %p197 = scmp.eq.s32.totalorder %s23, 1
    %p198 = por %p196, %p197
    %p200 = scmp.ne.s32.totalorder %s185, %s199
    %p201 = scmp.eq.s32.totalorder %s23, 0
    %p202 = por %p200, %p201
    %s204 = sadd.s32 %s203, 1
    %p207 = scmp.eq.s32.totalorder %s17, 1
    %p208 = scmp.ne.s32.totalorder %s203, %s205
    %p209 = scmp.eq.s32.totalorder %s17, 0
    %p210 = por %p208, %p209
    %p211 = scmp.ne.s32.totalorder %s203, %s205
    %p212 = scmp.eq.s32.totalorder %s22, 1
    %p213 = por %p211, %p212
    %p214 = scmp.ne.s32.totalorder %s205, %s206
    %p215 = scmp.eq.s32.totalorder %s22, 0
    %p216 = por %p214, %p215
    %p217 = scmp.ne.s32.totalorder %s205, %s206
    %p218 = scmp.eq.s32.totalorder %s23, 1
    %p219 = por %p217, %p218
    %p221 = scmp.ne.s32.totalorder %s206, %s220
    %p222 = scmp.eq.s32.totalorder %s23, 0
    %p223 = por %p221, %p222
    %s225 = sadd.s32 %s224, 1
    %p228 = scmp.eq.s32.totalorder %s17, 1
    %p229 = scmp.ne.s32.totalorder %s224, %s226
    %p230 = scmp.eq.s32.totalorder %s17, 0
    %p231 = por %p229, %p230
    %p232 = scmp.ne.s32.totalorder %s224, %s226
    %p233 = scmp.eq.s32.totalorder %s22, 1
    %p234 = por %p232, %p233
    %p235 = scmp.ne.s32.totalorder %s226, %s227
    %p236 = scmp.eq.s32.totalorder %s22, 0
    %p237 = por %p235, %p236
    %p238 = scmp.ne.s32.totalorder %s226, %s227
    %p239 = scmp.eq.s32.totalorder %s23, 1
    %p240 = por %p238, %p239
    %p242 = scmp.ne.s32.totalorder %s227, %s241
    %p243 = scmp.eq.s32.totalorder %s23, 0
    %p244 = por %p242, %p243
    %s246 = sadd.s32 %s245, 1
    %p249 = scmp.eq.s32.totalorder %s17, 1
    %p250 = scmp.ne.s32.totalorder %s245, %s247
    %p251 = scmp.eq.s32.totalorder %s17, 0
    %p252 = por %p250, %p251
    %p253 = scmp.ne.s32.totalorder %s245, %s247
    %p254 = scmp.eq.s32.totalorder %s22, 1
    %p255 = por %p253, %p254
    %p256 = scmp.ne.s32.totalorder %s247, %s248
    %p257 = scmp.eq.s32.totalorder %s22, 0
    %p258 = por %p256, %p257
    %p259 = scmp.ne.s32.totalorder %s247, %s248
    %p260 = scmp.eq.s32.totalorder %s23, 1
    %p261 = por %p259, %p260
    %p263 = scmp.ne.s32.totalorder %s248, %s262
    %p264 = scmp.eq.s32.totalorder %s23, 0
    %p265 = por %p263, %p264
    %s267 = sadd.s32 %s266, 1
    %p270 = scmp.eq.s32.totalorder %s17, 1
    %p271 = scmp.ne.s32.totalorder %s266, %s268
    %p272 = scmp.eq.s32.totalorder %s17, 0
    %p273 = por %p271, %p272
    %p274 = scmp.ne.s32.totalorder %s266, %s268
    %p275 = scmp.eq.s32.totalorder %s22, 1
    %p276 = por %p274, %p275
    %p277 = scmp.ne.s32.totalorder %s268, %s269
    %p278 = scmp.eq.s32.totalorder %s22, 0
    %p279 = por %p277, %p278
    %p280 = scmp.ne.s32.totalorder %s268, %s269
    %p281 = scmp.eq.s32.totalorder %s23, 1
    %p282 = por %p280, %p281
    %p284 = scmp.ne.s32.totalorder %s269, %s283
    %p285 = scmp.eq.s32.totalorder %s23, 0
    %p286 = por %p284, %p285
    %s287 = ssub.s32 %s24, %s36
    %s288 = ssub.s32 %s25, %s32
    %s289 = sor.u32 %s287, %s288
    %p290 = scmp.eq.s32.totalorder %s289, 0
    %s292 = sadd.s32 %s291, 1
    %s293 = scalar_select %p290, %s291, %s292
    %p296 = pneg %p290
    %p297 = scmp.eq.s32.totalorder %s17, 1
    %p298 = por %p296, %p297
    %p299 = scmp.ne.s32.totalorder %s291, %s294
    %p300 = scmp.eq.s32.totalorder %s17, 0
    %p301 = por %p299, %p300
    %p302 = scmp.ne.s32.totalorder %s291, %s294
    %p303 = scmp.eq.s32.totalorder %s22, 1
    %p304 = por %p302, %p303
    %p305 = scmp.ne.s32.totalorder %s294, %s295
    %p306 = scmp.eq.s32.totalorder %s22, 0
    %p307 = por %p305, %p306
    %p308 = scmp.ne.s32.totalorder %s294, %s295
    %p309 = scmp.eq.s32.totalorder %s23, 1
    %p310 = por %p308, %p309
    %p312 = scmp.ne.s32.totalorder %s295, %s311
    %p313 = scmp.eq.s32.totalorder %s23, 0
    %p314 = por %p312, %p313
    %p315 = scmp.le.s32.totalorder 1, %s17
    %p316 = scmp.lt.s32.totalorder %s17, 3
    %p317 = pnand %p315, %p316
    %p318 = pneg %p317
    // Predicated region
    $region9: #{decoder_forward.7} parent=5 // pred_check
      _
    $region10: #{decoder_forward.7} parent=5 // pred_check_branch
      %320 = sbr.rel (%p317) target = $region12
    $region11: #{decoder_forward.7} parent=5 // pred_region
      %s321 = ssub.s32 %s17, 1
      // Predicated region
      $region13: #{decoder_forward.7} parent=11 // pred_check
        %p322 = pneg %p132
      $region14: #{decoder_forward.7} parent=11 // pred_check_branch
        %324 = sbr.rel (%p322) target = $region16
      $region15: #{decoder_forward.7} parent=11 // pred_region
        _
      $region16: #{decoder_forward.7} parent=11 // pred_fallthru
        _
      // Predicated region
      $region17: #{decoder_forward.7} parent=11 // pred_check
        %p325 = pneg %p153
      $region18: #{decoder_forward.7} parent=11 // pred_check_branch
        %327 = sbr.rel (%p325) target = $region20
      $region19: #{decoder_forward.7} parent=11 // pred_region
        _
      $region20: #{decoder_forward.7} parent=11 // pred_fallthru
        _
      // Predicated region
      $region21: #{decoder_forward.7} parent=11 // pred_check
        %p328 = pneg %p174
      $region22: #{decoder_forward.7} parent=11 // pred_check_branch
        %330 = sbr.rel (%p328) target = $region24
      $region23: #{decoder_forward.7} parent=11 // pred_region
        _
      $region24: #{decoder_forward.7} parent=11 // pred_fallthru
        _
      // Predicated region
      $region25: #{decoder_forward.7} parent=11 // pred_check
        %p331 = pneg %p195
      $region26: #{decoder_forward.7} parent=11 // pred_check_branch
        %333 = sbr.rel (%p331) target = $region28
      $region27: #{decoder_forward.7} parent=11 // pred_region
        _
      $region28: #{decoder_forward.7} parent=11 // pred_fallthru
        _
      // Predicated region
      $region29: #{decoder_forward.7} parent=11 // pred_check
        %p334 = pneg %p216
      $region30: #{decoder_forward.7} parent=11 // pred_check_branch
        %336 = sbr.rel (%p334) target = $region32
      $region31: #{decoder_forward.7} parent=11 // pred_region
        _
      $region32: #{decoder_forward.7} parent=11 // pred_fallthru
        _
      // Predicated region
      $region33: #{decoder_forward.7} parent=11 // pred_check
        %p337 = pneg %p237
      $region34: #{decoder_forward.7} parent=11 // pred_check_branch
        %339 = sbr.rel (%p337) target = $region36
      $region35: #{decoder_forward.7} parent=11 // pred_region
        _
      $region36: #{decoder_forward.7} parent=11 // pred_fallthru
        _
      // Predicated region
      $region37: #{decoder_forward.7} parent=11 // pred_check
        %p340 = pneg %p258
      $region38: #{decoder_forward.7} parent=11 // pred_check_branch
        %342 = sbr.rel (%p340) target = $region40
      $region39: #{decoder_forward.7} parent=11 // pred_region
        _
      $region40: #{decoder_forward.7} parent=11 // pred_fallthru
        _
      // Predicated region
      $region41: #{decoder_forward.7} parent=11 // pred_check
        %p343 = pneg %p279
      $region42: #{decoder_forward.7} parent=11 // pred_check_branch
        %345 = sbr.rel (%p343) target = $region44
      $region43: #{decoder_forward.7} parent=11 // pred_region
        _
      $region44: #{decoder_forward.7} parent=11 // pred_fallthru
        _
    $region12: #{decoder_forward.7} parent=5 // pred_fallthru
      _
    %p346 = scmp.lt.s32.totalorder %s17, 2
    // Predicated region
    $region45: #{decoder_forward.7} parent=5 // pred_check
      %p347 = pneg %p346
    $region46: #{decoder_forward.7} parent=5 // pred_check_branch
      %349 = sbr.rel (%p347) target = $region48
    $region47: #{decoder_forward.7} parent=5 // pred_region
      // Predicated region
      $region49: #{decoder_forward.7} parent=47 // pred_check
        %p350 = pneg %p51
      $region50: #{decoder_forward.7} parent=47 // pred_check_branch
        %352 = sbr.rel (%p350) target = $region52
      $region51: #{decoder_forward.7} parent=47 // pred_region
        %p353 = scmp.lt.s32.totalorder %s24, 1
        %s354 = scalar_select %p353, %s24, 1
        %p355 = scmp.lt.s32.totalorder %s25, 0
        %s356 = scalar_select %p355, %s25, 0
        %s357 = sadd.s32 %s356, %s354
        %s358 = smul.addr %s357, 8
        %s359 = scalar_lea.vmem %s0, %s358
      $region52: #{decoder_forward.7} parent=47 // pred_fallthru
        _
      // Predicated region
      $region53: #{decoder_forward.7} parent=47 // pred_check
        %p360 = pneg %p77
      $region54: #{decoder_forward.7} parent=47 // pred_check_branch
        %362 = sbr.rel (%p360) target = $region56
      $region55: #{decoder_forward.7} parent=47 // pred_region
        %p363 = scmp.lt.s32.totalorder %s24, 1
        %s364 = scalar_select %p363, %s24, 1
        %s365 = smul.addr %s364, 8
        %s366 = scalar_lea.vmem %s1, %s365
      $region56: #{decoder_forward.7} parent=47 // pred_fallthru
        _
      // Predicated region
      $region57: #{decoder_forward.7} parent=47 // pred_check
        %p367 = pneg %p105
      $region58: #{decoder_forward.7} parent=47 // pred_check_branch
        %369 = sbr.rel (%p367) target = $region60
      $region59: #{decoder_forward.7} parent=47 // pred_region
        %p370 = scmp.lt.s32.totalorder %s24, 1
        %s371 = scalar_select %p370, %s24, 1
        %p372 = scmp.lt.s32.totalorder %s25, 0
        %s373 = scalar_select %p372, %s25, 0
        %s374 = sadd.s32 %s373, %s371
        %s375 = smul.addr %s374, 4
        %s376 = scalar_lea.vmem %s2, %s375
      $region60: #{decoder_forward.7} parent=47 // pred_fallthru
        _
    $region48: #{decoder_forward.7} parent=5 // pred_fallthru
      _
    %p377 = scmp.le.s32.totalorder 1, %s17
    %p378 = scmp.lt.s32.totalorder %s17, 3
    %p379 = pnand %p377, %p378
    %p380 = pneg %p379
    // Predicated region
    $region61: #{decoder_forward.7} parent=5 // pred_check
      _
    $region62: #{decoder_forward.7} parent=5 // pred_check_branch
      %382 = sbr.rel (%p379) target = $region64
    $region63: #{decoder_forward.7} parent=5 // pred_region
      %s383 = ssub.s32 %s17, 1
      %p384 = scmp.lt.s32.totalorder %s26, 1
      %s385 = scalar_select %p384, %s26, 1
      %p386 = scmp.lt.s32.totalorder %s27, 0
      %s387 = scalar_select %p386, %s27, 0
      %s388 = sadd.s32 %s387, %s385
      %s389 = smul.addr %s388, 8
      %s390 = scalar_lea.vmem %s0, %s389
      %p391 = pneg %p57
      %p392 = pneg %p54
      %p393 = scmp.lt.s32.totalorder %s26, 1
      %s394 = scalar_select %p393, %s26, 1
      %s395 = smul.addr %s394, 8
      %s396 = scalar_lea.vmem %s1, %s395
      %p397 = pneg %p83
      %p398 = pneg %p80
      %p399 = scmp.lt.s32.totalorder %s26, 1
      %s400 = scalar_select %p399, %s26, 1
      %p401 = scmp.lt.s32.totalorder %s27, 0
      %s402 = scalar_select %p401, %s27, 0
      %s403 = sadd.s32 %s402, %s400
      %s404 = smul.addr %s403, 4
      %s405 = scalar_lea.vmem %s2, %s404
      %p406 = pneg %p111
      %p407 = pneg %p108
      %p408 = pneg %p132
      %p409 = pneg %p129
      %p410 = pneg %p153
      %p411 = pneg %p150
      %p412 = pneg %p174
      %p413 = pneg %p171
      %p414 = pneg %p195
      %p415 = pneg %p192
      %p416 = pneg %p216
      %p417 = pneg %p213
      %p418 = pneg %p237
      %p419 = pneg %p234
      %p420 = pneg %p258
      %p421 = pneg %p255
      %p422 = pneg %p279
      %p423 = pneg %p276
      %p424 = pneg %p307
      %p425 = pneg %p304
      %p426 = scmp.lt.s32.totalorder %s26, 1
      %s427 = scalar_select %p426, %s26, 1
      %p428 = scmp.lt.s32.totalorder %s27, 0
      %s429 = scalar_select %p428, %s27, 0
      %s430 = sadd.s32 %s429, %s427
      %s431 = smul.addr %s430, 8
      %s432 = scalar_lea.vmem %s11, %s431
      %p433 = scmp.lt.s32.totalorder %s26, 1
      %s434 = scalar_select %p433, %s26, 1
      %p435 = scmp.lt.s32.totalorder %s27, 0
      %s436 = scalar_select %p435, %s27, 0
      %s437 = sadd.s32 %s436, %s434
      %s438 = smul.addr %s437, 8
      %s439 = scalar_lea.vmem %s0, %s438
      %p440 = scmp.lt.s32.totalorder %s26, 1
      %s441 = scalar_select %p440, %s26, 1
      %s442 = smul.addr %s441, 8
      %s443 = scalar_lea.vmem %s1, %s442
      %p444 = scmp.lt.s32.totalorder %s26, 1
      %s445 = scalar_select %p444, %s26, 1
      %p446 = scmp.lt.s32.totalorder %s27, 0
      %s447 = scalar_select %p446, %s27, 0
      %s448 = sadd.s32 %s447, %s445
      %s449 = smul.addr %s448, 4
      %s450 = scalar_lea.vmem %s2, %s449
      %p451 = scmp.lt.s32.totalorder %s26, 1
      %s452 = scalar_select %p451, %s26, 1
      %p453 = scmp.lt.s32.totalorder %s27, 0
      %s454 = scalar_select %p453, %s27, 0
      %s455 = sadd.s32 %s454, %s452
      %s456 = smul.addr %s455, 8
      %s457 = scalar_lea.vmem %s11, %s456
      %v461 = vld [vmem:[%s439] sm:$0xff]
      %v462 = vld [vmem:[%s443] sm:$0xff]
      %v463 = vld [vmem:[%s450] sm:$0xf]
      %vm464 = vcmp.ne.bf16.partialorder %v463, 0
      %v465 = vpack.c.bf16 %v461, %v461
      %v466 = vld [vmem:[%s3] sm:$0xf]
      %v467 = vld [vmem:[%s3 + $0x4] sm:$0xf]
      %v468 = vld [vmem:[%s3 + $0x8] sm:$0xf]
      %v469 = vld [vmem:[%s3 + $0xc] sm:$0xf]
      %v470 = vld [vmem:[%s4] sm:$0x1]
      %v472 = vlaneseq
      %v473 = vshrl.u32 %v472, 7
      %v474 = vsub.s32 0, %v473
      %v475 = vrot.slane %v470, %v474
      %v481 = vunpack.c.l.b16 %v466
      %v482 = vunpack.c.l.b16 %v467
      %v483 = vunpack.c.l.b16 %v468
      %v484 = vunpack.c.l.b16 %v469
      %v485 = vpack.c.b16 %v482, %v481
      %v486 = vpack.c.b16 %v484, %v483
      %vm489 = vcmask 261120
      %v491 = vsel %vm489, %v465, 0
      %493 = vmatprep.subr.bf16.mxu0 0
      %494 = vmatpush1.bf16.msra.mxu0 %v485
      %495 = vmatprep.subr.bf16.mxu0 0
      %496 = vmatpush1.bf16.msra.mxu0 %v486
      %497 = vmatprep.subr.bf16.mxu0 0
      %498 = vmatpush1.bf16.msra.mxu0 0
      %499 = vmatprep.subr.bf16.mxu0 0
      %500 = vmatpush1.bf16.msra.mxu0 0
      %501 = vmatprep.subr.bf16.mxu0 0
      %502 = vmatpush1.bf16.msra.mxu0 0
      %503 = vmatprep.subr.bf16.mxu0 0
      %504 = vmatpush1.bf16.msra.mxu0 0
      %505 = vmatprep.subr.bf16.mxu0 0
      %506 = vmatpush1.bf16.msra.mxu0 0
      %507 = vmatprep.subr.bf16.mxu0 0
      %508 = vmatpush1.bf16.msra.mxu0 0
      %509 = vmatprep.subr.bf16.mxu0 0
      %510 = vmatpush1.bf16.msra.mxu0 0
      %511 = vmatprep.subr.bf16.mxu0 0
      %512 = vmatpush1.bf16.msra.mxu0 0
      %513 = vmatprep.subr.bf16.mxu0 0
      %514 = vmatpush1.bf16.msra.mxu0 0
      %515 = vmatprep.subr.bf16.mxu0 0
      %516 = vmatpush1.bf16.msra.mxu0 0
      %517 = vmatprep.subr.bf16.mxu0 0
      %518 = vmatpush1.bf16.msra.mxu0 0
      %519 = vmatprep.subr.bf16.mxu0 0
      %520 = vmatpush1.bf16.msra.mxu0 0
      %521 = vmatprep.subr.bf16.mxu0 0
      %522 = vmatpush1.bf16.msra.mxu0 0
      %523 = vmatprep.subr.bf16.mxu0 0
      %524 = vmatpush1.bf16.msra.mxu0 0
      %525 = vmatprep.mubr.bf16.mxu0 0
      %526 = vmatmul.mubr.bf16.gmra.mrb[0].mxu0 %v491
      %v527 = vpop.f32.mrb[0].mxu0
      %v528 = vadd.f32 %v475, %v527
      %v529 = vpop.f32.mrb[0].mxu0
      %v530 = vpop.f32.mrb[0].mxu0
      %v531 = vpop.f32.mrb[0].mxu0
      %532 = vdwg.mxu0
      %v533 = vpack.c.bf16 %v462, %v462
      %v534 = vld [vmem:[%s5] sm:$0xf]
      %v535 = vld [vmem:[%s5 + $0x4] sm:$0xf]
      %v536 = vld [vmem:[%s5 + $0x8] sm:$0xf]
      %v537 = vld [vmem:[%s5 + $0xc] sm:$0xf]
      %v538 = vld [vmem:[%s6] sm:$0x1]
      %v540 = vlaneseq
      %v541 = vshrl.u32 %v540, 7
      %v542 = vsub.s32 0, %v541
      %v543 = vrot.slane %v538, %v542
      %v549 = vunpack.c.l.b16 %v534
      %v550 = vunpack.c.l.b16 %v535
      %v551 = vunpack.c.l.b16 %v536
      %v552 = vunpack.c.l.b16 %v537
      %v553 = vpack.c.b16 %v550, %v549
      %v554 = vpack.c.b16 %v552, %v551
      %v558 = vsel %vm489, %v533, 0
      %560 = vmatprep.subr.bf16.mxu0 0
      %561 = vmatpush1.bf16.msra.mxu0 %v553
      %562 = vmatprep.subr.bf16.mxu0 0
      %563 = vmatpush1.bf16.msra.mxu0 %v554
      %564 = vmatprep.subr.bf16.mxu0 0
      %565 = vmatpush1.bf16.msra.mxu0 0
      %566 = vmatprep.subr.bf16.mxu0 0
      %567 = vmatpush1.bf16.msra.mxu0 0
      %568 = vmatprep.subr.bf16.mxu0 0
      %569 = vmatpush1.bf16.msra.mxu0 0
      %570 = vmatprep.subr.bf16.mxu0 0
      %571 = vmatpush1.bf16.msra.mxu0 0
      %572 = vmatprep.subr.bf16.mxu0 0
      %573 = vmatpush1.bf16.msra.mxu0 0
      %574 = vmatprep.subr.bf16.mxu0 0
      %575 = vmatpush1.bf16.msra.mxu0 0
      %576 = vmatprep.subr.bf16.mxu0 0
      %577 = vmatpush1.bf16.msra.mxu0 0
      %578 = vmatprep.subr.bf16.mxu0 0
      %579 = vmatpush1.bf16.msra.mxu0 0
      %580 = vmatprep.subr.bf16.mxu0 0
      %581 = vmatpush1.bf16.msra.mxu0 0
      %582 = vmatprep.subr.bf16.mxu0 0
      %583 = vmatpush1.bf16.msra.mxu0 0
      %584 = vmatprep.subr.bf16.mxu0 0
      %585 = vmatpush1.bf16.msra.mxu0 0
      %586 = vmatprep.subr.bf16.mxu0 0
      %587 = vmatpush1.bf16.msra.mxu0 0
      %588 = vmatprep.subr.bf16.mxu0 0
      %589 = vmatpush1.bf16.msra.mxu0 0
      %590 = vmatprep.subr.bf16.mxu0 0
      %591 = vmatpush1.bf16.msra.mxu0 0
      %592 = vmatprep.mubr.bf16.mxu0 0
      %593 = vmatmul.mubr.bf16.gmra.mrb[0].mxu0 %v558
      %v594 = vpop.f32.mrb[0].mxu0
      %v595 = vadd.f32 %v543, %v594
      %v596 = vpop.f32.mrb[0].mxu0
      %v597 = vpop.f32.mrb[0].mxu0
      %v598 = vpop.f32.mrb[0].mxu0
      %599 = vdwg.mxu0
      %v600 = vmul.f32 %v528, 0.35355338
      %v601 = vpack.c.bf16 %v600, %v600
      %v602 = vpack.c.bf16 %v595, %v595
      %vm603 = vcmask 64512
      %v605 = vsel %vm603, %v601, 0
      %v608 = vsel %vm603, %v602, 0
      %610 = vmatprep.subr.bf16.mxu0 0
      %611 = vmatpush1.bf16.xpose.msra.mxu0 %v608
      %612 = vmatprep.subr.bf16.mxu0 0
      %613 = vmatpush1.bf16.xpose.msra.mxu0 0
      %614 = vmatprep.subr.bf16.mxu0 0
      %615 = vmatpush1.bf16.xpose.msra.mxu0 0
      %616 = vmatprep.subr.bf16.mxu0 0
      %617 = vmatpush1.bf16.xpose.msra.mxu0 0
      %618 = vmatprep.subr.bf16.mxu0 0
      %619 = vmatpush1.bf16.xpose.msra.mxu0 0
      %620 = vmatprep.subr.bf16.mxu0 0
      %621 = vmatpush1.bf16.xpose.msra.mxu0 0
      %622 = vmatprep.subr.bf16.mxu0 0
      %623 = vmatpush1.bf16.xpose.msra.mxu0 0
      %624 = vmatprep.subr.bf16.mxu0 0
      %625 = vmatpush1.bf16.xpose.msra.mxu0 0
      %626 = vmatprep.subr.bf16.mxu0 0
      %627 = vmatpush1.bf16.xpose.msra.mxu0 0
      %628 = vmatprep.subr.bf16.mxu0 0
      %629 = vmatpush1.bf16.xpose.msra.mxu0 0
      %630 = vmatprep.subr.bf16.mxu0 0
      %631 = vmatpush1.bf16.xpose.msra.mxu0 0
      %632 = vmatprep.subr.bf16.mxu0 0
      %633 = vmatpush1.bf16.xpose.msra.mxu0 0
      %634 = vmatprep.subr.bf16.mxu0 0
      %635 = vmatpush1.bf16.xpose.msra.mxu0 0
      %636 = vmatprep.subr.bf16.mxu0 0
      %637 = vmatpush1.bf16.xpose.msra.mxu0 0
      %638 = vmatprep.subr.bf16.mxu0 0
      %639 = vmatpush1.bf16.xpose.msra.mxu0 0
      %640 = vmatprep.subr.bf16.mxu0 0
      %641 = vmatpush1.bf16.xpose.msra.mxu0 0
      %642 = vmatprep.mubr.bf16.mxu0 0
      %643 = vmatmul.mubr.bf16.gmra.mrb[0].mxu0 %v605
      %v644 = vpop.f32.mrb[0].mxu0
      %v645 = vadd.f32 0.0, %v644
      %v646 = vpop.f32.mrb[0].mxu0
      %v647 = vpop.f32.mrb[0].mxu0
      %v648 = vpop.f32.mrb[0].mxu0
      %649 = vdwg.mxu0
      %v650 = vsel %vm464, 65537, 0
      %v651 = vunpack.c.l.b16 %v650
      %vm652 = vcmp.ne.s32.totalorder %v651, 0
      %v653 = vsel %vm652, %v645, -1e+10
      %v654 = vsel %vm603, %v653, -inf
      %655 = vmax.xlane.f32.xlu0 %v654
      %v656 = vpop.xlane.xlu0 %655
      %v657 = vsub.f32 %v653, %v656
      %v658 = vmul.f32 %v657, 1.442695
      %v659 = vpow.pop %v658
      %v660 = vsel %vm603, %v659, 0.0
      %661 = vadd.xlane.f32.xlu0 %v660
      %v662 = vpop.xlane.xlu0 %661
      %v663 = vrcp.pop %v662
      %v664 = vmul.f32 %v659, %v663
      %v665 = vpack.c.bf16 %v664, %v664
      %667 = vrot.lane.b32.xlu0 %v602, 96
      %v668 = vpop.permute.xlu0 %667
      %v670 = vsel %vm603, %v665, 0
      %vm672 = vcmask 1043456
      %v674 = vsel %vm672, %v668, 0
      %676 = vmatprep.subr.bf16.mxu0 0
      %677 = vmatpush1.bf16.msra.mxu0 %v674
      %678 = vmatprep.subr.bf16.mxu0 0
      %679 = vmatpush1.bf16.msra.mxu0 0
      %680 = vmatprep.subr.bf16.mxu0 0
      %681 = vmatpush1.bf16.msra.mxu0 0
      %682 = vmatprep.subr.bf16.mxu0 0
      %683 = vmatpush1.bf16.msra.mxu0 0
      %684 = vmatprep.subr.bf16.mxu0 0
      %685 = vmatpush1.bf16.msra.mxu0 0
      %686 = vmatprep.subr.bf16.mxu0 0
      %687 = vmatpush1.bf16.msra.mxu0 0
      %688 = vmatprep.subr.bf16.mxu0 0
      %689 = vmatpush1.bf16.msra.mxu0 0
      %690 = vmatprep.subr.bf16.mxu0 0
      %691 = vmatpush1.bf16.msra.mxu0 0
      %692 = vmatprep.subr.bf16.mxu0 0
      %693 = vmatpush1.bf16.msra.mxu0 0
      %694 = vmatprep.subr.bf16.mxu0 0
      %695 = vmatpush1.bf16.msra.mxu0 0
      %696 = vmatprep.subr.bf16.mxu0 0
      %697 = vmatpush1.bf16.msra.mxu0 0
      %698 = vmatprep.subr.bf16.mxu0 0
      %699 = vmatpush1.bf16.msra.mxu0 0
      %700 = vmatprep.subr.bf16.mxu0 0
      %701 = vmatpush1.bf16.msra.mxu0 0
      %702 = vmatprep.subr.bf16.mxu0 0
      %703 = vmatpush1.bf16.msra.mxu0 0
      %704 = vmatprep.subr.bf16.mxu0 0
      %705 = vmatpush1.bf16.msra.mxu0 0
      %706 = vmatprep.subr.bf16.mxu0 0
      %707 = vmatpush1.bf16.msra.mxu0 0
      %708 = vmatprep.mubr.bf16.mxu0 0
      %709 = vmatmul.mubr.bf16.gmra.mrb[0].mxu0 %v670
      %v710 = vpop.f32.mrb[0].mxu0
      %v711 = vadd.f32 0.0, %v710
      %v712 = vpop.f32.mrb[0].mxu0
      %v713 = vpop.f32.mrb[0].mxu0
      %v714 = vpop.f32.mrb[0].mxu0
      %715 = vdwg.mxu0
      %716 = vst.msk [vmem:[#allocation2] sm:$0xff] %vm603, %v711
      %718 = vrot.lane.b32.xlu0 %v601, 120
      %v719 = vpop.permute.xlu0 %718
      %720 = vrot.lane.b32.xlu0 %v602, 120
      %v721 = vpop.permute.xlu0 %720
      %v723 = vsel %vm603, %v719, 0
      %v726 = vsel %vm603, %v721, 0
      %728 = vmatprep.subr.bf16.mxu0 0
      %729 = vmatpush1.bf16.xpose.msra.mxu0 %v726
      %730 = vmatprep.subr.bf16.mxu0 0
      %731 = vmatpush1.bf16.xpose.msra.mxu0 0
      %732 = vmatprep.subr.bf16.mxu0 0
      %733 = vmatpush1.bf16.xpose.msra.mxu0 0
      %734 = vmatprep.subr.bf16.mxu0 0
      %735 = vmatpush1.bf16.xpose.msra.mxu0 0
      %736 = vmatprep.subr.bf16.mxu0 0
      %737 = vmatpush1.bf16.xpose.msra.mxu0 0
      %738 = vmatprep.subr.bf16.mxu0 0
      %739 = vmatpush1.bf16.xpose.msra.mxu0 0
      %740 = vmatprep.subr.bf16.mxu0 0
      %741 = vmatpush1.bf16.xpose.msra.mxu0 0
      %742 = vmatprep.subr.bf16.mxu0 0
      %743 = vmatpush1.bf16.xpose.msra.mxu0 0
      %744 = vmatprep.subr.bf16.mxu0 0
      %745 = vmatpush1.bf16.xpose.msra.mxu0 0
      %746 = vmatprep.subr.bf16.mxu0 0
      %747 = vmatpush1.bf16.xpose.msra.mxu0 0
      %748 = vmatprep.subr.bf16.mxu0 0
      %749 = vmatpush1.bf16.xpose.msra.mxu0 0
      %750 = vmatprep.subr.bf16.mxu0 0
      %751 = vmatpush1.bf16.xpose.msra.mxu0 0
      %752 = vmatprep.subr.bf16.mxu0 0
      %753 = vmatpush1.bf16.xpose.msra.mxu0 0
      %754 = vmatprep.subr.bf16.mxu0 0
      %755 = vmatpush1.bf16.xpose.msra.mxu0 0
      %756 = vmatprep.subr.bf16.mxu0 0
      %757 = vmatpush1.bf16.xpose.msra.mxu0 0
      %758 = vmatprep.subr.bf16.mxu0 0
      %759 = vmatpush1.bf16.xpose.msra.mxu0 0
      %760 = vmatprep.mubr.bf16.mxu0 0
      %761 = vmatmul.mubr.bf16.gmra.mrb[0].mxu0 %v723
      %v762 = vpop.f32.mrb[0].mxu0
      %v763 = vadd.f32 0.0, %v762
      %v764 = vpop.f32.mrb[0].mxu0
      %v765 = vpop.f32.mrb[0].mxu0
      %v766 = vpop.f32.mrb[0].mxu0
      %767 = vdwg.mxu0
      %v768 = vsel %vm652, %v763, -1e+10
      %v769 = vsel %vm603, %v768, -inf
      %770 = vmax.xlane.f32.xlu0 %v769
      %v771 = vpop.xlane.xlu0 %770
      %v772 = vsub.f32 %v768, %v771
      %v773 = vmul.f32 %v772, 1.442695
      %v774 = vpow.pop %v773
      %v775 = vsel %vm603, %v774, 0.0
      %776 = vadd.xlane.f32.xlu0 %v775
      %v777 = vpop.xlane.xlu0 %776
      %v778 = vrcp.pop %v777
      %v779 = vmul.f32 %v774, %v778
      %v780 = vpack.c.bf16 %v779, %v779
      %781 = vrot.lane.b32.xlu0 %v602, 88
      %v782 = vpop.permute.xlu0 %781
      %v784 = vsel %vm603, %v780, 0
      %v787 = vsel %vm672, %v782, 0
      %789 = vmatprep.subr.bf16.mxu0 0
      %790 = vmatpush1.bf16.msra.mxu0 %v787
      %791 = vmatprep.subr.bf16.mxu0 0
      %792 = vmatpush1.bf16.msra.mxu0 0
      %793 = vmatprep.subr.bf16.mxu0 0
      %794 = vmatpush1.bf16.msra.mxu0 0
      %795 = vmatprep.subr.bf16.mxu0 0
      %796 = vmatpush1.bf16.msra.mxu0 0
      %797 = vmatprep.subr.bf16.mxu0 0
      %798 = vmatpush1.bf16.msra.mxu0 0
      %799 = vmatprep.subr.bf16.mxu0 0
      %800 = vmatpush1.bf16.msra.mxu0 0
      %801 = vmatprep.subr.bf16.mxu0 0
      %802 = vmatpush1.bf16.msra.mxu0 0
      %803 = vmatprep.subr.bf16.mxu0 0
      %804 = vmatpush1.bf16.msra.mxu0 0
      %805 = vmatprep.subr.bf16.mxu0 0
      %806 = vmatpush1.bf16.msra.mxu0 0
      %807 = vmatprep.subr.bf16.mxu0 0
      %808 = vmatpush1.bf16.msra.mxu0 0
      %809 = vmatprep.subr.bf16.mxu0 0
      %810 = vmatpush1.bf16.msra.mxu0 0
      %811 = vmatprep.subr.bf16.mxu0 0
      %812 = vmatpush1.bf16.msra.mxu0 0
      %813 = vmatprep.subr.bf16.mxu0 0
      %814 = vmatpush1.bf16.msra.mxu0 0
      %815 = vmatprep.subr.bf16.mxu0 0
      %816 = vmatpush1.bf16.msra.mxu0 0
      %817 = vmatprep.subr.bf16.mxu0 0
      %818 = vmatpush1.bf16.msra.mxu0 0
      %819 = vmatprep.subr.bf16.mxu0 0
      %820 = vmatpush1.bf16.msra.mxu0 0
      %821 = vmatprep.mubr.bf16.mxu0 0
      %822 = vmatmul.mubr.bf16.gmra.mrb[0].mxu0 %v784
      %v823 = vpop.f32.mrb[0].mxu0
      %v824 = vadd.f32 0.0, %v823
      %v825 = vpop.f32.mrb[0].mxu0
      %v826 = vpop.f32.mrb[0].mxu0
      %v827 = vpop.f32.mrb[0].mxu0
      %828 = vdwg.mxu0
      %830 = vrot.lane.b32.xlu0 %v824, 8
      %v831 = vpop.permute.xlu0 %830
      %vm833 = vcmask 130112
      %834 = vst.msk [vmem:[#allocation2] sm:$0xff] %vm833, %v831
      %835 = vrot.lane.b32.xlu0 %v601, 112
      %v836 = vpop.permute.xlu0 %835
      %837 = vrot.lane.b32.xlu0 %v602, 112
      %v838 = vpop.permute.xlu0 %837
      %v840 = vsel %vm603, %v836, 0
      %v843 = vsel %vm603, %v838, 0
      %845 = vmatprep.subr.bf16.mxu0 0
      %846 = vmatpush1.bf16.xpose.msra.mxu0 %v843
      %847 = vmatprep.subr.bf16.mxu0 0
      %848 = vmatpush1.bf16.xpose.msra.mxu0 0
      %849 = vmatprep.subr.bf16.mxu0 0
      %850 = vmatpush1.bf16.xpose.msra.mxu0 0
      %851 = vmatprep.subr.bf16.mxu0 0
      %852 = vmatpush1.bf16.xpose.msra.mxu0 0
      %853 = vmatprep.subr.bf16.mxu0 0
      %854 = vmatpush1.bf16.xpose.msra.mxu0 0
      %855 = vmatprep.subr.bf16.mxu0 0
      %856 = vmatpush1.bf16.xpose.msra.mxu0 0
      %857 = vmatprep.subr.bf16.mxu0 0
      %858 = vmatpush1.bf16.xpose.msra.mxu0 0
      %859 = vmatprep.subr.bf16.mxu0 0
      %860 = vmatpush1.bf16.xpose.msra.mxu0 0
      %861 = vmatprep.subr.bf16.mxu0 0
      %862 = vmatpush1.bf16.xpose.msra.mxu0 0
      %863 = vmatprep.subr.bf16.mxu0 0
      %864 = vmatpush1.bf16.xpose.msra.mxu0 0
      %865 = vmatprep.subr.bf16.mxu0 0
      %866 = vmatpush1.bf16.xpose.msra.mxu0 0
      %867 = vmatprep.subr.bf16.mxu0 0
      %868 = vmatpush1.bf16.xpose.msra.mxu0 0
      %869 = vmatprep.subr.bf16.mxu0 0
      %870 = vmatpush1.bf16.xpose.msra.mxu0 0
      %871 = vmatprep.subr.bf16.mxu0 0
      %872 = vmatpush1.bf16.xpose.msra.mxu0 0
      %873 = vmatprep.subr.bf16.mxu0 0
      %874 = vmatpush1.bf16.xpose.msra.mxu0 0
      %875 = vmatprep.subr.bf16.mxu0 0
      %876 = vmatpush1.bf16.xpose.msra.mxu0 0
      %877 = vmatprep.mubr.bf16.mxu0 0
      %878 = vmatmul.mubr.bf16.gmra.mrb[0].mxu0 %v840
      %v879 = vpop.f32.mrb[0].mxu0
      %v880 = vadd.f32 0.0, %v879
      %v881 = vpop.f32.mrb[0].mxu0
      %v882 = vpop.f32.mrb[0].mxu0
      %v883 = vpop.f32.mrb[0].mxu0
      %884 = vdwg.mxu0
      %v885 = vsel %vm652, %v880, -1e+10
      %v886 = vsel %vm603, %v885, -inf
      %887 = vmax.xlane.f32.xlu0 %v886
      %v888 = vpop.xlane.xlu0 %887
      %v889 = vsub.f32 %v885, %v888
      %v890 = vmul.f32 %v889, 1.442695
      %v891 = vpow.pop %v890
      %v892 = vsel %vm603, %v891, 0.0
      %893 = vadd.xlane.f32.xlu0 %v892
      %v894 = vpop.xlane.xlu0 %893
      %v895 = vrcp.pop %v894
      %v896 = vmul.f32 %v891, %v895
      %v897 = vpack.c.bf16 %v896, %v896
      %898 = vrot.lane.b32.xlu0 %v602, 80
      %v899 = vpop.permute.xlu0 %898
      %v901 = vsel %vm603, %v897, 0
      %v904 = vsel %vm672, %v899, 0
      %906 = vmatprep.subr.bf16.mxu0 0
      %907 = vmatpush1.bf16.msra.mxu0 %v904
      %908 = vmatprep.subr.bf16.mxu0 0
      %909 = vmatpush1.bf16.msra.mxu0 0
      %910 = vmatprep.subr.bf16.mxu0 0
      %911 = vmatpush1.bf16.msra.mxu0 0
      %912 = vmatprep.subr.bf16.mxu0 0
      %913 = vmatpush1.bf16.msra.mxu0 0
      %914 = vmatprep.subr.bf16.mxu0 0
      %915 = vmatpush1.bf16.msra.mxu0 0
      %916 = vmatprep.subr.bf16.mxu0 0
      %917 = vmatpush1.bf16.msra.mxu0 0
      %918 = vmatprep.subr.bf16.mxu0 0
      %919 = vmatpush1.bf16.msra.mxu0 0
      %920 = vmatprep.subr.bf16.mxu0 0
      %921 = vmatpush1.bf16.msra.mxu0 0
      %922 = vmatprep.subr.bf16.mxu0 0
      %923 = vmatpush1.bf16.msra.mxu0 0
      %924 = vmatprep.subr.bf16.mxu0 0
      %925 = vmatpush1.bf16.msra.mxu0 0
      %926 = vmatprep.subr.bf16.mxu0 0
      %927 = vmatpush1.bf16.msra.mxu0 0
      %928 = vmatprep.subr.bf16.mxu0 0
      %929 = vmatpush1.bf16.msra.mxu0 0
      %930 = vmatprep.subr.bf16.mxu0 0
      %931 = vmatpush1.bf16.msra.mxu0 0
      %932 = vmatprep.subr.bf16.mxu0 0
      %933 = vmatpush1.bf16.msra.mxu0 0
      %934 = vmatprep.subr.bf16.mxu0 0
      %935 = vmatpush1.bf16.msra.mxu0 0
      %936 = vmatprep.subr.bf16.mxu0 0
      %937 = vmatpush1.bf16.msra.mxu0 0
      %938 = vmatprep.mubr.bf16.mxu0 0
      %939 = vmatmul.mubr.bf16.gmra.mrb[0].mxu0 %v901
      %v940 = vpop.f32.mrb[0].mxu0
      %v941 = vadd.f32 0.0, %v940
      %v942 = vpop.f32.mrb[0].mxu0
      %v943 = vpop.f32.mrb[0].mxu0
      %v944 = vpop.f32.mrb[0].mxu0
      %945 = vdwg.mxu0
      %947 = vrot.lane.b32.xlu0 %v941, 16
      %v948 = vpop.permute.xlu0 %947
      %vm950 = vcmask 195712
      %951 = vst.msk [vmem:[#allocation2] sm:$0xff] %vm950, %v948
      %952 = vrot.lane.b32.xlu0 %v601, 104
      %v953 = vpop.permute.xlu0 %952
      %954 = vrot.lane.b32.xlu0 %v602, 104
      %v955 = vpop.permute.xlu0 %954
      %v957 = vsel %vm603, %v953, 0
      %v960 = vsel %vm603, %v955, 0
      %962 = vmatprep.subr.bf16.mxu0 0
      %963 = vmatpush1.bf16.xpose.msra.mxu0 %v960
      %964 = vmatprep.subr.bf16.mxu0 0
      %965 = vmatpush1.bf16.xpose.msra.mxu0 0
      %966 = vmatprep.subr.bf16.mxu0 0
      %967 = vmatpush1.bf16.xpose.msra.mxu0 0
      %968 = vmatprep.subr.bf16.mxu0 0
      %969 = vmatpush1.bf16.xpose.msra.mxu0 0
      %970 = vmatprep.subr.bf16.mxu0 0
      %971 = vmatpush1.bf16.xpose.msra.mxu0 0
      %972 = vmatprep.subr.bf16.mxu0 0
      %973 = vmatpush1.bf16.xpose.msra.mxu0 0
      %974 = vmatprep.subr.bf16.mxu0 0
      %975 = vmatpush1.bf16.xpose.msra.mxu0 0
      %976 = vmatprep.subr.bf16.mxu0 0
      %977 = vmatpush1.bf16.xpose.msra.mxu0 0
      %978 = vmatprep.subr.bf16.mxu0 0
      %979 = vmatpush1.bf16.xpose.msra.mxu0 0
      %980 = vmatprep.subr.bf16.mxu0 0
      %981 = vmatpush1.bf16.xpose.msra.mxu0 0
      %982 = vmatprep.subr.bf16.mxu0 0
      %983 = vmatpush1.bf16.xpose.msra.mxu0 0
      %984 = vmatprep.subr.bf16.mxu0 0
      %985 = vmatpush1.bf16.xpose.msra.mxu0 0
      %986 = vmatprep.subr.bf16.mxu0 0
      %987 = vmatpush1.bf16.xpose.msra.mxu0 0
      %988 = vmatprep.subr.bf16.mxu0 0
      %989 = vmatpush1.bf16.xpose.msra.mxu0 0
      %990 = vmatprep.subr.bf16.mxu0 0
      %991 = vmatpush1.bf16.xpose.msra.mxu0 0
      %992 = vmatprep.subr.bf16.mxu0 0
      %993 = vmatpush1.bf16.xpose.msra.mxu0 0
      %994 = vmatprep.mubr.bf16.mxu0 0
      %995 = vmatmul.mubr.bf16.gmra.mrb[0].mxu0 %v957
      %v996 = vpop.f32.mrb[0].mxu0
      %v997 = vadd.f32 0.0, %v996
      %v998 = vpop.f32.mrb[0].mxu0
      %v999 = vpop.f32.mrb[0].mxu0
      %v1000 = vpop.f32.mrb[0].mxu0
      %1001 = vdwg.mxu0
      %v1002 = vsel %vm652, %v997, -1e+10
      %v1003 = vsel %vm603, %v1002, -inf
      %1004 = vmax.xlane.f32.xlu0 %v1003
      %v1005 = vpop.xlane.xlu0 %1004
      %v1006 = vsub.f32 %v1002, %v1005
      %v1007 = vmul.f32 %v1006, 1.442695
      %v1008 = vpow.pop %v1007
      %v1009 = vsel %vm603, %v1008, 0.0
      %1010 = vadd.xlane.f32.xlu0 %v1009
      %v1011 = vpop.xlane.xlu0 %1010
      %v1012 = vrcp.pop %v1011
      %v1013 = vmul.f32 %v1008, %v1012
      %v1014 = vpack.c.bf16 %v1013, %v1013
      %1015 = vrot.lane.b32.xlu0 %v602, 72
      %v1016 = vpop.permute.xlu0 %1015
      %v1018 = vsel %vm603, %v1014, 0
      %v1021 = vsel %vm672, %v1016, 0
      %1023 = vmatprep.subr.bf16.mxu0 0
      %1024 = vmatpush1.bf16.msra.mxu0 %v1021
      %1025 = vmatprep.subr.bf16.mxu0 0
      %1026 = vmatpush1.bf16.msra.mxu0 0
      %1027 = vmatprep.subr.bf16.mxu0 0
      %1028 = vmatpush1.bf16.msra.mxu0 0
      %1029 = vmatprep.subr.bf16.mxu0 0
      %1030 = vmatpush1.bf16.msra.mxu0 0
      %1031 = vmatprep.subr.bf16.mxu0 0
      %1032 = vmatpush1.bf16.msra.mxu0 0
      %1033 = vmatprep.subr.bf16.mxu0 0
      %1034 = vmatpush1.bf16.msra.mxu0 0
      %1035 = vmatprep.subr.bf16.mxu0 0
      %1036 = vmatpush1.bf16.msra.mxu0 0
      %1037 = vmatprep.subr.bf16.mxu0 0
      %1038 = vmatpush1.bf16.msra.mxu0 0
      %1039 = vmatprep.subr.bf16.mxu0 0
      %1040 = vmatpush1.bf16.msra.mxu0 0
      %1041 = vmatprep.subr.bf16.mxu0 0
      %1042 = vmatpush1.bf16.msra.mxu0 0
      %1043 = vmatprep.subr.bf16.mxu0 0
      %1044 = vmatpush1.bf16.msra.mxu0 0
      %1045 = vmatprep.subr.bf16.mxu0 0
      %1046 = vmatpush1.bf16.msra.mxu0 0
      %1047 = vmatprep.subr.bf16.mxu0 0
      %1048 = vmatpush1.bf16.msra.mxu0 0
      %1049 = vmatprep.subr.bf16.mxu0 0
      %1050 = vmatpush1.bf16.msra.mxu0 0
      %1051 = vmatprep.subr.bf16.mxu0 0
      %1052 = vmatpush1.bf16.msra.mxu0 0
      %1053 = vmatprep.subr.bf16.mxu0 0
      %1054 = vmatpush1.bf16.msra.mxu0 0
      %1055 = vmatprep.mubr.bf16.mxu0 0
      %1056 = vmatmul.mubr.bf16.gmra.mrb[0].mxu0 %v1018
      %v1057 = vpop.f32.mrb[0].mxu0
      %v1058 = vadd.f32 0.0, %v1057
      %v1059 = vpop.f32.mrb[0].mxu0
      %v1060 = vpop.f32.mrb[0].mxu0
      %v1061 = vpop.f32.mrb[0].mxu0
      %1062 = vdwg.mxu0
      %1064 = vrot.lane.b32.xlu0 %v1058, 24
      %v1065 = vpop.permute.xlu0 %1064
      %vm1067 = vcmask 261312
      %1068 = vst.msk [vmem:[#allocation2] sm:$0xff] %vm1067, %v1065
      %v1069 = vld [vmem:[#allocation2] sm:$0xff]
      %v1070 = vpack.c.bf16 %v1069, %v1069
      %v1071 = vld [vmem:[%s7] sm:$0xf]
      %v1072 = vld [vmem:[%s7 + $0x4] sm:$0xf]
      %v1073 = vld [vmem:[%s7 + $0x8] sm:$0xf]
      %v1074 = vld [vmem:[%s7 + $0xc] sm:$0xf]
      %v1075 = vld [vmem:[%s8] sm:$0x1]
      %v1077 = vlaneseq
      %v1078 = vshrl.u32 %v1077, 7
      %v1079 = vsub.s32 0, %v1078
      %v1080 = vrot.slane %v1075, %v1079
      %v1086 = vunpack.c.l.b16 %v1071
      %v1087 = vunpack.c.l.b16 %v1072
      %v1088 = vunpack.c.l.b16 %v1073
      %v1089 = vunpack.c.l.b16 %v1074
      %v1090 = vpack.c.b16 %v1087, %v1086
      %v1091 = vpack.c.b16 %v1089, %v1088
      %v1095 = vsel %vm489, %v1070, 0
      %1097 = vmatprep.subr.bf16.mxu0 0
      %1098 = vmatpush1.bf16.msra.mxu0 %v1090
      %1099 = vmatprep.subr.bf16.mxu0 0
      %1100 = vmatpush1.bf16.msra.mxu0 %v1091
      %1101 = vmatprep.subr.bf16.mxu0 0
      %1102 = vmatpush1.bf16.msra.mxu0 0
      %1103 = vmatprep.subr.bf16.mxu0 0
      %1104 = vmatpush1.bf16.msra.mxu0 0
      %1105 = vmatprep.subr.bf16.mxu0 0
      %1106 = vmatpush1.bf16.msra.mxu0 0
      %1107 = vmatprep.subr.bf16.mxu0 0
      %1108 = vmatpush1.bf16.msra.mxu0 0
      %1109 = vmatprep.subr.bf16.mxu0 0
      %1110 = vmatpush1.bf16.msra.mxu0 0
      %1111 = vmatprep.subr.bf16.mxu0 0
      %1112 = vmatpush1.bf16.msra.mxu0 0
      %1113 = vmatprep.subr.bf16.mxu0 0
      %1114 = vmatpush1.bf16.msra.mxu0 0
      %1115 = vmatprep.subr.bf16.mxu0 0
      %1116 = vmatpush1.bf16.msra.mxu0 0
      %1117 = vmatprep.subr.bf16.mxu0 0
      %1118 = vmatpush1.bf16.msra.mxu0 0
      %1119 = vmatprep.subr.bf16.mxu0 0
      %1120 = vmatpush1.bf16.msra.mxu0 0
      %1121 = vmatprep.subr.bf16.mxu0 0
      %1122 = vmatpush1.bf16.msra.mxu0 0
      %1123 = vmatprep.subr.bf16.mxu0 0
      %1124 = vmatpush1.bf16.msra.mxu0 0
      %1125 = vmatprep.subr.bf16.mxu0 0
      %1126 = vmatpush1.bf16.msra.mxu0 0
      %1127 = vmatprep.subr.bf16.mxu0 0
      %1128 = vmatpush1.bf16.msra.mxu0 0
      %1129 = vmatprep.mubr.bf16.mxu0 0
      %1130 = vmatmul.mubr.bf16.gmra.mrb[0].mxu0 %v1095
      %v1131 = vpop.f32.mrb[0].mxu0
      %v1132 = vadd.f32 %v1080, %v1131
      %v1133 = vpop.f32.mrb[0].mxu0
      %v1134 = vpop.f32.mrb[0].mxu0
      %v1135 = vpop.f32.mrb[0].mxu0
      %1136 = vdwg.mxu0
      %v1137 = vadd.f32 %v461, %v1132
      %v1138 = vsel %vm489, %v1137, 0.0
      %1139 = vadd.xlane.f32.xlu0 %v1138
      %v1140 = vpop.xlane.xlu0 %1139
      %v1141 = vrcp.pop 32.0
      %v1142 = vmul.f32 %v1140, %v1141
      %v1143 = vsub.f32 %v1137, %v1142
      %v1144 = vmul.f32 %v1143, %v1143
      %v1145 = vsel %vm489, %v1144, 0.0
      %1146 = vadd.xlane.f32.xlu0 %v1145
      %v1147 = vpop.xlane.xlu0 %1146
      %v1148 = vmul.f32 %v1147, %v1141
      %v1149 = vadd.f32 %v1148, 1e-05
      %v1150 = vrsqrt.pop %v1149
      %v1151 = vmul.f32 %v1143, %v1150
      %v1152 = vld [vmem:[%s9] sm:$0x1]
      %v1154 = vlaneseq
      %v1155 = vshrl.u32 %v1154, 7
      %v1156 = vsub.s32 0, %v1155
      %v1157 = vrot.slane %v1152, %v1156
      %v1159 = vmul.f32 %v1151, %v1157
      %v1160 = vld [vmem:[%s10] sm:$0x1]
      %v1162 = vlaneseq
      %v1163 = vshrl.u32 %v1162, 7
      %v1164 = vsub.s32 0, %v1163
      %v1165 = vrot.slane %v1160, %v1164
      %v1167 = vadd.f32 %v1159, %v1165
      %1168 = vst.msk [vmem:[%s457] sm:$0xff] %vm489, %v1167
      %p1169 = scmp.lt.s32.totalorder %s26, 1
      %s1170 = scalar_select %p1169, %s26, 1
      %p1171 = scmp.lt.s32.totalorder %s27, 0
      %s1172 = scalar_select %p1171, %s27, 0
      %s1173 = sadd.s32 %s1172, %s1170
      %s1174 = smul.addr %s1173, 8
      %s1175 = scalar_lea.vmem %s11, %s1174
      // Predicated region
      $region65: #{decoder_forward.7} parent=63 // pred_check
        %p1176 = pneg %p304
      $region66: #{decoder_forward.7} parent=63 // pred_check_branch
        %1178 = sbr.rel (%p1176) target = $region68
      $region67: #{decoder_forward.7} parent=63 // pred_region
        _
      $region68: #{decoder_forward.7} parent=63 // pred_fallthru
        _
    $region64: #{decoder_forward.7} parent=5 // pred_fallthru
      _
    %p1179 = scmp.le.s32.totalorder 2, %s17
    // Predicated region
    $region69: #{decoder_forward.7} parent=5 // pred_check
      %p1180 = pneg %p1179
    $region70: #{decoder_forward.7} parent=5 // pred_check_branch
      %1182 = sbr.rel (%p1180) target = $region72
    $region71: #{decoder_forward.7} parent=5 // pred_region
      %s1183 = ssub.s32 %s17, 2
      // Predicated region
      $region73: #{decoder_forward.7} parent=71 // pred_check
        %p1184 = pneg %p310
      $region74: #{decoder_forward.7} parent=71 // pred_check_branch
        %1186 = sbr.rel (%p1184) target = $region76
      $region75: #{decoder_forward.7} parent=71 // pred_region
        %p1187 = scmp.lt.s32.totalorder %s28, 1
        %s1188 = scalar_select %p1187, %s28, 1
        %p1189 = scmp.lt.s32.totalorder %s29, 0
        %s1190 = scalar_select %p1189, %s29, 0
        %s1191 = sadd.s32 %s1190, %s1188
        %s1192 = smul.addr %s1191, 8
        %s1193 = scalar_lea.vmem %s11, %s1192
      $region76: #{decoder_forward.7} parent=71 // pred_fallthru
        _
    $region72: #{decoder_forward.7} parent=5 // pred_fallthru
      _
  $region6: #{decoder_forward.7} parent=0 // loop_footer
    %s21 = sadd.s32 1, %s17
  $region7: #{decoder_forward.7} parent=0 // loop_footer_branch
    %16 = sbr.rel target = $region3
  $region8: #{decoder_forward.7} parent=0 // loop_exit
    _

// kernel: decoder_forward.11
$region0: #{decoder_forward.11}
  #allocation0 [shape = 'u32[]', space=smem, size = 0x4, offset = 0x4, fixed_abs, tag = 'smem constant byte address 0x4 - core index']
  #allocation1 [shape = 'u32[144,128]{1,0:T(1,128)}', space=vmem, size = 0x12000, scoped, tag = 'internal scratch']
  #allocation2 [shape = 'f32[8,32]{1,0:T(8,128)}', space=vmem, size = 0x1000, scoped, tag = 'scratch operand']
  %s0 = inlined_call_operand.vmem [shape: f32[2,8,32], index: 0, kind: input, shape index: {}]
  %s1 = inlined_call_operand.vmem [shape: f32[2,8,32], index: 1, kind: input, shape index: {}]
  %s2 = inlined_call_operand.vmem [shape: bf16[2,1,1,8], index: 2, kind: input, shape index: {}]
  %s3 = inlined_call_operand.vmem [shape: bf16[32,32], index: 3, kind: input, shape index: {}]
  %s4 = inlined_call_operand.vmem [shape: f32[1,32], index: 4, kind: input, shape index: {}]
  %s5 = inlined_call_operand.vmem [shape: bf16[32,64], index: 5, kind: input, shape index: {}]
  %s6 = inlined_call_operand.vmem [shape: f32[1,64], index: 6, kind: input, shape index: {}]
  %s7 = inlined_call_operand.vmem [shape: bf16[32,32], index: 7, kind: input, shape index: {}]
  %s8 = inlined_call_operand.vmem [shape: f32[1,32], index: 8, kind: input, shape index: {}]
  %s9 = inlined_call_operand.vmem [shape: f32[1,32], index: 9, kind: input, shape index: {}]
  %s10 = inlined_call_operand.vmem [shape: f32[1,32], index: 10, kind: input, shape index: {}]
  %s11 = inlined_call_operand.vmem [shape: f32[2,8,32], index: 11, kind: output, shape index: {0}]
  %s12 = inlined_call_operand.hbm [shape: f32[2,4,8,8], index: 12, kind: output, shape index: {1}]
  %13 = xla_tuple %s11, %s12
  %s14 = sld [smem:[#allocation0]]
  $region85: #{decoder_forward.11} parent=0
    _
  %s16 = ssub.s32 1, %s14
  %s17 = scalar_select 0, %s16, %s14
  $region1: #{decoder_forward.11} parent=0
    #allocation3 [shape = 'u8[32768]{0}', space=vmem, size = 0x8000, scoped, tag = 'output window, operand 1']
    #allocation4 [shape = 's32[2]{0}', space=sflag, size = 0x8, scoped, tag = 'scoped memory for decoder_forward.11']
    %18 = vsyncpa [#allocation4], 0
    %s19 = scalar_lea.sflag [#allocation4], 1
    %20 = vsyncpa %s19, 0
    loop: start=0, step=1, limit=4
    $region2: #{decoder_forward.11} parent=1 // loop_pre_header
      _
    $region3: #{decoder_forward.11} parent=1 // loop_header
      %s22 = sphi 0, %s26
      %p23 = scmp.ge.s32.totalorder %s22, 4
      %s29 = sphi 0, %s41
      %s30 = sphi 0, %s37
      %s31 = sphi 0, %s29
      %s32 = sphi 0, %s30
      %s33 = sphi 0, %s31
      %s34 = sphi 0, %s32
      %s46 = sphi 0, %s48
      %s49 = sphi 0, %s46
      %s50 = sphi 0, %s49
      %s66 = sphi 0, %s50
      %s72 = sphi 0, %s74
      %s75 = sphi 0, %s72
      %s76 = sphi 0, %s75
      %s92 = sphi 0, %s76
      %s98 = sphi 0, %s100
      %s101 = sphi 0, %s98
      %s102 = sphi 0, %s101
      %s118 = sphi 0, %s102
      %s122 = sphi 0, %s122
      %s124 = sphi 0, %s122
      %s125 = sphi 0, %s124
      %s139 = sphi 0, %s125
      %s143 = sphi 0, %s143
      %s145 = sphi 0, %s143
      %s146 = sphi 0, %s145
      %s160 = sphi 0, %s146
      %s164 = sphi 0, %s164
      %s166 = sphi 0, %s164
      %s167 = sphi 0, %s166
      %s181 = sphi 0, %s167
      %s185 = sphi 0, %s185
      %s187 = sphi 0, %s185
      %s188 = sphi 0, %s187
      %s202 = sphi 0, %s188
      %s206 = sphi 0, %s206
      %s208 = sphi 0, %s206
      %s209 = sphi 0, %s208
      %s223 = sphi 0, %s209
      %s227 = sphi 0, %s227
      %s229 = sphi 0, %s227
      %s230 = sphi 0, %s229
      %s244 = sphi 0, %s230
      %s248 = sphi 0, %s248
      %s250 = sphi 0, %s248
      %s251 = sphi 0, %s250
      %s265 = sphi 0, %s251
      %s269 = sphi 0, %s269
      %s271 = sphi 0, %s269
      %s272 = sphi 0, %s271
      %s286 = sphi 0, %s272
      %s294 = sphi 0, %s296
      %s297 = sphi 0, %s294
      %s298 = sphi 0, %s297
      %s314 = sphi 0, %s298
      %s322 = sphi 0, %s324
      %s325 = sphi 0, %s322
      %s326 = sphi 0, %s325
      %s342 = sphi 0, %s326
    $region4: #{decoder_forward.11} parent=1 // loop_header_branch
      %25 = sbr.rel (%p23) target = $region8
    $region5: #{decoder_forward.11} parent=1 // loop_body
      %s27 = ssub.s32 %s22, 1
      %s28 = ssub.s32 %s22, 2
      %s35 = sadd.s32 1, %s30
      %p36 = scmp.ge.s32.totalorder %s35, 1
      %s37 = scalar_select %p36, 0, %s35
      %s38 = sadd.s32 1, %s29
      %s39 = scalar_select %p36, %s38, %s29
      %p40 = scmp.ge.s32.totalorder %s39, 2
      %s41 = scalar_select %p40, 0, %s39
      %s42 = ssub.s32 %s29, %s41
      %s43 = ssub.s32 %s30, %s37
      %s44 = sor.u32 %s42, %s43
      %p45 = scmp.eq.s32.totalorder %s44, 0
      %s47 = sadd.s32 %s46, 1
      %s48 = scalar_select %p45, %s46, %s47
      %p51 = pneg %p45
      %p52 = scmp.eq.s32.totalorder %s22, 1
      %p53 = por %p51, %p52
      %p54 = scmp.ne.s32.totalorder %s46, %s49
      %p55 = scmp.eq.s32.totalorder %s22, 0
      %p56 = por %p54, %p55
      %p57 = scmp.ne.s32.totalorder %s46, %s49
      %p58 = scmp.eq.s32.totalorder %s27, 1
      %p59 = por %p57, %p58
      %p60 = scmp.ne.s32.totalorder %s49, %s50
      %p61 = scmp.eq.s32.totalorder %s27, 0
      %p62 = por %p60, %p61
      %p63 = scmp.ne.s32.totalorder %s49, %s50
      %p64 = scmp.eq.s32.totalorder %s28, 1
      %p65 = por %p63, %p64
      %p67 = scmp.ne.s32.totalorder %s50, %s66
      %p68 = scmp.eq.s32.totalorder %s28, 0
      %p69 = por %p67, %p68
      %s70 = ssub.s32 %s29, %s41
      %p71 = scmp.eq.s32.totalorder %s70, 0
      %s73 = sadd.s32 %s72, 1
      %s74 = scalar_select %p71, %s72, %s73
      %p77 = pneg %p71
      %p78 = scmp.eq.s32.totalorder %s22, 1
      %p79 = por %p77, %p78
      %p80 = scmp.ne.s32.totalorder %s72, %s75
      %p81 = scmp.eq.s32.totalorder %s22, 0
      %p82 = por %p80, %p81
      %p83 = scmp.ne.s32.totalorder %s72, %s75
      %p84 = scmp.eq.s32.totalorder %s27, 1
      %p85 = por %p83, %p84
      %p86 = scmp.ne.s32.totalorder %s75, %s76
      %p87 = scmp.eq.s32.totalorder %s27, 0
      %p88 = por %p86, %p87
      %p89 = scmp.ne.s32.totalorder %s75, %s76
      %p90 = scmp.eq.s32.totalorder %s28, 1
      %p91 = por %p89, %p90
      %p93 = scmp.ne.s32.totalorder %s76, %s92
      %p94 = scmp.eq.s32.totalorder %s28, 0
      %p95 = por %p93, %p94
      %s96 = ssub.s32 %s29, %s41
      %p97 = scmp.eq.s32.totalorder %s96, 0
      %s99 = sadd.s32 %s98, 1
      %s100 = scalar_select %p97, %s98, %s99
      %p103 = pneg %p97
      %p104 = scmp.eq.s32.totalorder %s22, 1
      %p105 = por %p103, %p104
      %p106 = scmp.ne.s32.totalorder %s98, %s101
      %p107 = scmp.eq.s32.totalorder %s22, 0
      %p108 = por %p106, %p107
      %p109 = scmp.ne.s32.totalorder %s98, %s101
      %p110 = scmp.eq.s32.totalorder %s27, 1
      %p111 = por %p109, %p110
      %p112 = scmp.ne.s32.totalorder %s101, %s102
      %p113 = scmp.eq.s32.totalorder %s27, 0
      %p114 = por %p112, %p113
      %p115 = scmp.ne.s32.totalorder %s101, %s102
      %p116 = scmp.eq.s32.totalorder %s28, 1
      %p117 = por %p115, %p116
      %p119 = scmp.ne.s32.totalorder %s102, %s118
      %p120 = scmp.eq.s32.totalorder %s28, 0
      %p121 = por %p119, %p120
      %s123 = sadd.s32 %s122, 1
      %p126 = scmp.eq.s32.totalorder %s22, 1
      %p127 = scmp.ne.s32.totalorder %s122, %s124
      %p128 = scmp.eq.s32.totalorder %s22, 0
      %p129 = por %p127, %p128
      %p130 = scmp.ne.s32.totalorder %s122, %s124
      %p131 = scmp.eq.s32.totalorder %s27, 1
      %p132 = por %p130, %p131
      %p133 = scmp.ne.s32.totalorder %s124, %s125
      %p134 = scmp.eq.s32.totalorder %s27, 0
      %p135 = por %p133, %p134
      %p136 = scmp.ne.s32.totalorder %s124, %s125
      %p137 = scmp.eq.s32.totalorder %s28, 1
      %p138 = por %p136, %p137
      %p140 = scmp.ne.s32.totalorder %s125, %s139
      %p141 = scmp.eq.s32.totalorder %s28, 0
      %p142 = por %p140, %p141
      %s144 = sadd.s32 %s143, 1
      %p147 = scmp.eq.s32.totalorder %s22, 1
      %p148 = scmp.ne.s32.totalorder %s143, %s145
      %p149 = scmp.eq.s32.totalorder %s22, 0
      %p150 = por %p148, %p149
      %p151 = scmp.ne.s32.totalorder %s143, %s145
      %p152 = scmp.eq.s32.totalorder %s27, 1
      %p153 = por %p151, %p152
      %p154 = scmp.ne.s32.totalorder %s145, %s146
      %p155 = scmp.eq.s32.totalorder %s27, 0
      %p156 = por %p154, %p155
      %p157 = scmp.ne.s32.totalorder %s145, %s146
      %p158 = scmp.eq.s32.totalorder %s28, 1
      %p159 = por %p157, %p158
      %p161 = scmp.ne.s32.totalorder %s146, %s160
      %p162 = scmp.eq.s32.totalorder %s28, 0
      %p163 = por %p161, %p162
      %s165 = sadd.s32 %s164, 1
      %p168 = scmp.eq.s32.totalorder %s22, 1
      %p169 = scmp.ne.s32.totalorder %s164, %s166
      %p170 = scmp.eq.s32.totalorder %s22, 0
      %p171 = por %p169, %p170
      %p172 = scmp.ne.s32.totalorder %s164, %s166
      %p173 = scmp.eq.s32.totalorder %s27, 1
      %p174 = por %p172, %p173
      %p175 = scmp.ne.s32.totalorder %s166, %s167
      %p176 = scmp.eq.s32.totalorder %s27, 0
      %p177 = por %p175, %p176
      %p178 = scmp.ne.s32.totalorder %s166, %s167
      %p179 = scmp.eq.s32.totalorder %s28, 1
      %p180 = por %p178, %p179
      %p182 = scmp.ne.s32.totalorder %s167, %s181
      %p183 = scmp.eq.s32.totalorder %s28, 0
      %p184 = por %p182, %p183
      %s186 = sadd.s32 %s185, 1
      %p189 = scmp.eq.s32.totalorder %s22, 1
      %p190 = scmp.ne.s32.totalorder %s185, %s187
      %p191 = scmp.eq.s32.totalorder %s22, 0
      %p192 = por %p190, %p191
      %p193 = scmp.ne.s32.totalorder %s185, %s187
      %p194 = scmp.eq.s32.totalorder %s27, 1
      %p195 = por %p193, %p194
      %p196 = scmp.ne.s32.totalorder %s187, %s188
      %p197 = scmp.eq.s32.totalorder %s27, 0
      %p198 = por %p196, %p197
      %p199 = scmp.ne.s32.totalorder %s187, %s188
      %p200 = scmp.eq.s32.totalorder %s28, 1
      %p201 = por %p199, %p200
      %p203 = scmp.ne.s32.totalorder %s188, %s202
      %p204 = scmp.eq.s32.totalorder %s28, 0
      %p205 = por %p203, %p204
      %s207 = sadd.s32 %s206, 1
      %p210 = scmp.eq.s32.totalorder %s22, 1
      %p211 = scmp.ne.s32.totalorder %s206, %s208
      %p212 = scmp.eq.s32.totalorder %s22, 0
      %p213 = por %p211, %p212
      %p214 = scmp.ne.s32.totalorder %s206, %s208
      %p215 = scmp.eq.s32.totalorder %s27, 1
      %p216 = por %p214, %p215
      %p217 = scmp.ne.s32.totalorder %s208, %s209
      %p218 = scmp.eq.s32.totalorder %s27, 0
      %p219 = por %p217, %p218
      %p220 = scmp.ne.s32.totalorder %s208, %s209
      %p221 = scmp.eq.s32.totalorder %s28, 1
      %p222 = por %p220, %p221
      %p224 = scmp.ne.s32.totalorder %s209, %s223
      %p225 = scmp.eq.s32.totalorder %s28, 0
      %p226 = por %p224, %p225
      %s228 = sadd.s32 %s227, 1
      %p231 = scmp.eq.s32.totalorder %s22, 1
      %p232 = scmp.ne.s32.totalorder %s227, %s229
      %p233 = scmp.eq.s32.totalorder %s22, 0
      %p234 = por %p232, %p233
      %p235 = scmp.ne.s32.totalorder %s227, %s229
      %p236 = scmp.eq.s32.totalorder %s27, 1
      %p237 = por %p235, %p236
      %p238 = scmp.ne.s32.totalorder %s229, %s230
      %p239 = scmp.eq.s32.totalorder %s27, 0
      %p240 = por %p238, %p239
      %p241 = scmp.ne.s32.totalorder %s229, %s230
      %p242 = scmp.eq.s32.totalorder %s28, 1
      %p243 = por %p241, %p242
      %p245 = scmp.ne.s32.totalorder %s230, %s244
      %p246 = scmp.eq.s32.totalorder %s28, 0
      %p247 = por %p245, %p246
      %s249 = sadd.s32 %s248, 1
      %p252 = scmp.eq.s32.totalorder %s22, 1
      %p253 = scmp.ne.s32.totalorder %s248, %s250
      %p254 = scmp.eq.s32.totalorder %s22, 0
      %p255 = por %p253, %p254
      %p256 = scmp.ne.s32.totalorder %s248, %s250
      %p257 = scmp.eq.s32.totalorder %s27, 1
      %p258 = por %p256, %p257
      %p259 = scmp.ne.s32.totalorder %s250, %s251
      %p260 = scmp.eq.s32.totalorder %s27, 0
      %p261 = por %p259, %p260
      %p262 = scmp.ne.s32.totalorder %s250, %s251
      %p263 = scmp.eq.s32.totalorder %s28, 1
      %p264 = por %p262, %p263
      %p266 = scmp.ne.s32.totalorder %s251, %s265
      %p267 = scmp.eq.s32.totalorder %s28, 0
      %p268 = por %p266, %p267
      %s270 = sadd.s32 %s269, 1
      %p273 = scmp.eq.s32.totalorder %s22, 1
      %p274 = scmp.ne.s32.totalorder %s269, %s271
      %p275 = scmp.eq.s32.totalorder %s22, 0
      %p276 = por %p274, %p275
      %p277 = scmp.ne.s32.totalorder %s269, %s271
      %p278 = scmp.eq.s32.totalorder %s27, 1
      %p279 = por %p277, %p278
      %p280 = scmp.ne.s32.totalorder %s271, %s272
      %p281 = scmp.eq.s32.totalorder %s27, 0
      %p282 = por %p280, %p281
      %p283 = scmp.ne.s32.totalorder %s271, %s272
      %p284 = scmp.eq.s32.totalorder %s28, 1
      %p285 = por %p283, %p284
      %p287 = scmp.ne.s32.totalorder %s272, %s286
      %p288 = scmp.eq.s32.totalorder %s28, 0
      %p289 = por %p287, %p288
      %s290 = ssub.s32 %s29, %s41
      %s291 = ssub.s32 %s30, %s37
      %s292 = sor.u32 %s290, %s291
      %p293 = scmp.eq.s32.totalorder %s292, 0
      %s295 = sadd.s32 %s294, 1
      %s296 = scalar_select %p293, %s294, %s295
      %p299 = pneg %p293
      %p300 = scmp.eq.s32.totalorder %s22, 1
      %p301 = por %p299, %p300
      %p302 = scmp.ne.s32.totalorder %s294, %s297
      %p303 = scmp.eq.s32.totalorder %s22, 0
      %p304 = por %p302, %p303
      %p305 = scmp.ne.s32.totalorder %s294, %s297
      %p306 = scmp.eq.s32.totalorder %s27, 1
      %p307 = por %p305, %p306
      %p308 = scmp.ne.s32.totalorder %s297, %s298
      %p309 = scmp.eq.s32.totalorder %s27, 0
      %p310 = por %p308, %p309
      %p311 = scmp.ne.s32.totalorder %s297, %s298
      %p312 = scmp.eq.s32.totalorder %s28, 1
      %p313 = por %p311, %p312
      %p315 = scmp.ne.s32.totalorder %s298, %s314
      %p316 = scmp.eq.s32.totalorder %s28, 0
      %p317 = por %p315, %p316
      %s318 = ssub.s32 %s29, %s41
      %s319 = ssub.s32 %s30, %s37
      %s320 = sor.u32 %s318, %s319
      %p321 = scmp.eq.s32.totalorder %s320, 0
      %s323 = sadd.s32 %s322, 1
      %s324 = scalar_select %p321, %s322, %s323
      %p327 = pneg %p321
      %p328 = scmp.eq.s32.totalorder %s22, 1
      %p329 = por %p327, %p328
      %p330 = scmp.ne.s32.totalorder %s322, %s325
      %p331 = scmp.eq.s32.totalorder %s22, 0
      %p332 = por %p330, %p331
      %p333 = scmp.ne.s32.totalorder %s322, %s325
      %p334 = scmp.eq.s32.totalorder %s27, 1
      %p335 = por %p333, %p334
      %p336 = scmp.ne.s32.totalorder %s325, %s326
      %p337 = scmp.eq.s32.totalorder %s27, 0
      %p338 = por %p336, %p337
      %p339 = scmp.ne.s32.totalorder %s325, %s326
      %p340 = scmp.eq.s32.totalorder %s28, 1
      %p341 = por %p339, %p340
      %p343 = scmp.ne.s32.totalorder %s326, %s342
      %p344 = scmp.eq.s32.totalorder %s28, 0
      %p345 = por %p343, %p344
      %p346 = scmp.le.s32.totalorder 1, %s22
      %p347 = scmp.lt.s32.totalorder %s22, 3
      %p348 = pnand %p346, %p347
      %p349 = pneg %p348
      // Predicated region
      $region9: #{decoder_forward.11} parent=5 // pred_check
        _
      $region10: #{decoder_forward.11} parent=5 // pred_check_branch
        %351 = sbr.rel (%p348) target = $region12
      $region11: #{decoder_forward.11} parent=5 // pred_region
        %s352 = ssub.s32 %s22, 1
        // Predicated region
        $region13: #{decoder_forward.11} parent=11 // pred_check
          %p353 = pneg %p135
        $region14: #{decoder_forward.11} parent=11 // pred_check_branch
          %355 = sbr.rel (%p353) target = $region16
        $region15: #{decoder_forward.11} parent=11 // pred_region
          _
        $region16: #{decoder_forward.11} parent=11 // pred_fallthru
          _
        // Predicated region
        $region17: #{decoder_forward.11} parent=11 // pred_check
          %p356 = pneg %p156
        $region18: #{decoder_forward.11} parent=11 // pred_check_branch
          %358 = sbr.rel (%p356) target = $region20
        $region19: #{decoder_forward.11} parent=11 // pred_region
          _
        $region20: #{decoder_forward.11} parent=11 // pred_fallthru
          _
        // Predicated region
        $region21: #{decoder_forward.11} parent=11 // pred_check
          %p359 = pneg %p177
        $region22: #{decoder_forward.11} parent=11 // pred_check_branch
          %361 = sbr.rel (%p359) target = $region24
        $region23: #{decoder_forward.11} parent=11 // pred_region
          _
        $region24: #{decoder_forward.11} parent=11 // pred_fallthru
          _
        // Predicated region
        $region25: #{decoder_forward.11} parent=11 // pred_check
          %p362 = pneg %p198
        $region26: #{decoder_forward.11} parent=11 // pred_check_branch
          %364 = sbr.rel (%p362) target = $region28
        $region27: #{decoder_forward.11} parent=11 // pred_region
          _
        $region28: #{decoder_forward.11} parent=11 // pred_fallthru
          _
        // Predicated region
        $region29: #{decoder_forward.11} parent=11 // pred_check
          %p365 = pneg %p219
        $region30: #{decoder_forward.11} parent=11 // pred_check_branch
          %367 = sbr.rel (%p365) target = $region32
        $region31: #{decoder_forward.11} parent=11 // pred_region
          _
        $region32: #{decoder_forward.11} parent=11 // pred_fallthru
          _
        // Predicated region
        $region33: #{decoder_forward.11} parent=11 // pred_check
          %p368 = pneg %p240
        $region34: #{decoder_forward.11} parent=11 // pred_check_branch
          %370 = sbr.rel (%p368) target = $region36
        $region35: #{decoder_forward.11} parent=11 // pred_region
          _
        $region36: #{decoder_forward.11} parent=11 // pred_fallthru
          _
        // Predicated region
        $region37: #{decoder_forward.11} parent=11 // pred_check
          %p371 = pneg %p261
        $region38: #{decoder_forward.11} parent=11 // pred_check_branch
          %373 = sbr.rel (%p371) target = $region40
        $region39: #{decoder_forward.11} parent=11 // pred_region
          _
        $region40: #{decoder_forward.11} parent=11 // pred_fallthru
          _
        // Predicated region
        $region41: #{decoder_forward.11} parent=11 // pred_check
          %p374 = pneg %p282
        $region42: #{decoder_forward.11} parent=11 // pred_check_branch
          %376 = sbr.rel (%p374) target = $region44
        $region43: #{decoder_forward.11} parent=11 // pred_region
          _
        $region44: #{decoder_forward.11} parent=11 // pred_fallthru
          _
      $region12: #{decoder_forward.11} parent=5 // pred_fallthru
        _
      %p377 = scmp.lt.s32.totalorder %s22, 2
      // Predicated region
      $region45: #{decoder_forward.11} parent=5 // pred_check
        %p378 = pneg %p377
      $region46: #{decoder_forward.11} parent=5 // pred_check_branch
        %380 = sbr.rel (%p378) target = $region48
      $region47: #{decoder_forward.11} parent=5 // pred_region
        // Predicated region
        $region49: #{decoder_forward.11} parent=47 // pred_check
          %p381 = pneg %p56
        $region50: #{decoder_forward.11} parent=47 // pred_check_branch
          %383 = sbr.rel (%p381) target = $region52
        $region51: #{decoder_forward.11} parent=47 // pred_region
          %p384 = scmp.lt.s32.totalorder %s29, 1
          %s385 = scalar_select %p384, %s29, 1
          %p386 = scmp.lt.s32.totalorder %s30, 0
          %s387 = scalar_select %p386, %s30, 0
          %s388 = sadd.s32 %s387, %s385
          %s389 = smul.addr %s388, 8
          %s390 = scalar_lea.vmem %s0, %s389
        $region52: #{decoder_forward.11} parent=47 // pred_fallthru
          _
        // Predicated region
        $region53: #{decoder_forward.11} parent=47 // pred_check
          %p391 = pneg %p82
        $region54: #{decoder_forward.11} parent=47 // pred_check_branch
          %393 = sbr.rel (%p391) target = $region56
        $region55: #{decoder_forward.11} parent=47 // pred_region
          %p394 = scmp.lt.s32.totalorder %s29, 1
          %s395 = scalar_select %p394, %s29, 1
          %s396 = smul.addr %s395, 8
          %s397 = scalar_lea.vmem %s1, %s396
        $region56: #{decoder_forward.11} parent=47 // pred_fallthru
          _
        // Predicated region
        $region57: #{decoder_forward.11} parent=47 // pred_check
          %p398 = pneg %p108
        $region58: #{decoder_forward.11} parent=47 // pred_check_branch
          %400 = sbr.rel (%p398) target = $region60
        $region59: #{decoder_forward.11} parent=47 // pred_region
          %p401 = scmp.lt.s32.totalorder %s29, 1
          %s402 = scalar_select %p401, %s29, 1
          %s403 = scalar_lea.vmem %s2, %s402
        $region60: #{decoder_forward.11} parent=47 // pred_fallthru
          _
      $region48: #{decoder_forward.11} parent=5 // pred_fallthru
        _
      %p404 = scmp.le.s32.totalorder 1, %s22
      %p405 = scmp.lt.s32.totalorder %s22, 3
      %p406 = pnand %p404, %p405
      %p407 = pneg %p406
      // Predicated region
      $region61: #{decoder_forward.11} parent=5 // pred_check
        _
      $region62: #{decoder_forward.11} parent=5 // pred_check_branch
        %409 = sbr.rel (%p406) target = $region64
      $region63: #{decoder_forward.11} parent=5 // pred_region
        %s410 = ssub.s32 %s22, 1
        %p411 = scmp.lt.s32.totalorder %s31, 1
        %s412 = scalar_select %p411, %s31, 1
        %p413 = scmp.lt.s32.totalorder %s32, 0
        %s414 = scalar_select %p413, %s32, 0
        %s415 = sadd.s32 %s414, %s412
        %s416 = smul.addr %s415, 8
        %s417 = scalar_lea.vmem %s0, %s416
        %p418 = pneg %p62
        %p419 = pneg %p59
        %p420 = scmp.lt.s32.totalorder %s31, 1
        %s421 = scalar_select %p420, %s31, 1
        %s422 = smul.addr %s421, 8
        %s423 = scalar_lea.vmem %s1, %s422
        %p424 = pneg %p88
        %p425 = pneg %p85
        %p426 = scmp.lt.s32.totalorder %s31, 1
        %s427 = scalar_select %p426, %s31, 1
        %s428 = scalar_lea.vmem %s2, %s427
        %p429 = pneg %p114
        %p430 = pneg %p111
        %p431 = pneg %p135
        %p432 = pneg %p132
        %p433 = pneg %p156
        %p434 = pneg %p153
        %p435 = pneg %p177
        %p436 = pneg %p174
        %p437 = pneg %p198
        %p438 = pneg %p195
        %p439 = pneg %p219
        %p440 = pneg %p216
        %p441 = pneg %p240
        %p442 = pneg %p237
        %p443 = pneg %p261
        %p444 = pneg %p258
        %p445 = pneg %p282
        %p446 = pneg %p279
        %p447 = pneg %p310
        %p448 = pneg %p307
        %p449 = scmp.lt.s32.totalorder %s31, 1
        %s450 = scalar_select %p449, %s31, 1
        %p451 = scmp.lt.s32.totalorder %s32, 0
        %s452 = scalar_select %p451, %s32, 0
        %s453 = sadd.s32 %s452, %s450
        %s454 = smul.addr %s453, 8
        %s455 = scalar_lea.vmem %s11, %s454
        %p456 = pneg %p338
        %p457 = pneg %p335
        %s458 = sand.u32 %s325, 1
        %s459 = scalar_lea.sflag [#allocation4], %s458
        %s460 = sand.u32 %s325, 1
        %s461 = smul.addr %s460, 32
        %s462 = scalar_lea.vmem [#allocation3], %s461
        %p463 = scmp.lt.s32.totalorder %s31, 1
        %s464 = scalar_select %p463, %s31, 1
        %p465 = scmp.lt.s32.totalorder %s32, 0
        %s466 = scalar_select %p465, %s32, 0
        %s467 = sadd.s32 %s466, %s464
        %s468 = smul.addr %s467, 8
        %s469 = scalar_lea.vmem %s0, %s468
        %p470 = scmp.lt.s32.totalorder %s31, 1
        %s471 = scalar_select %p470, %s31, 1
        %s472 = smul.addr %s471, 8
        %s473 = scalar_lea.vmem %s1, %s472
        %p474 = scmp.lt.s32.totalorder %s31, 1
        %s475 = scalar_select %p474, %s31, 1
        %s476 = scalar_lea.vmem %s2, %s475
        %p477 = scmp.lt.s32.totalorder %s31, 1
        %s478 = scalar_select %p477, %s31, 1
        %p479 = scmp.lt.s32.totalorder %s32, 0
        %s480 = scalar_select %p479, %s32, 0
        %s481 = sadd.s32 %s480, %s478
        %s482 = smul.addr %s481, 8
        %s483 = scalar_lea.vmem %s11, %s482
        %v487 = vld [vmem:[%s469] sm:$0xff]
        %v488 = vld [vmem:[%s473] sm:$0xff]
        %v489 = vld [vmem:[%s476] sm:$0x1]
        %vm490 = vcmp.ne.bf16.partialorder %v489, 0
        %v491 = vpack.c.bf16 %v487, %v487
        %v492 = vld [vmem:[%s3] sm:$0xf]
        %v493 = vld [vmem:[%s3 + $0x4] sm:$0xf]
        %v494 = vld [vmem:[%s3 + $0x8] sm:$0xf]
        %v495 = vld [vmem:[%s3 + $0xc] sm:$0xf]
        %v496 = vld [vmem:[%s4] sm:$0x1]
        %v498 = vlaneseq
        %v499 = vshrl.u32 %v498, 7
        %v500 = vsub.s32 0, %v499
        %v501 = vrot.slane %v496, %v500
        %v507 = vunpack.c.l.b16 %v492
        %v508 = vunpack.c.l.b16 %v493
        %v509 = vunpack.c.l.b16 %v494
        %v510 = vunpack.c.l.b16 %v495
        %v511 = vpack.c.b16 %v508, %v507
        %v512 = vpack.c.b16 %v510, %v509
        %vm515 = vcmask 261120
        %v517 = vsel %vm515, %v491, 0
        %519 = vmatprep.subr.bf16.mxu0 0
        %520 = vmatpush1.bf16.msra.mxu0 %v511
        %521 = vmatprep.subr.bf16.mxu0 0
        %522 = vmatpush1.bf16.msra.mxu0 %v512
        %523 = vmatprep.subr.bf16.mxu0 0
        %524 = vmatpush1.bf16.msra.mxu0 0
        %525 = vmatprep.subr.bf16.mxu0 0
        %526 = vmatpush1.bf16.msra.mxu0 0
        %527 = vmatprep.subr.bf16.mxu0 0
        %528 = vmatpush1.bf16.msra.mxu0 0
        %529 = vmatprep.subr.bf16.mxu0 0
        %530 = vmatpush1.bf16.msra.mxu0 0
        %531 = vmatprep.subr.bf16.mxu0 0
        %532 = vmatpush1.bf16.msra.mxu0 0
        %533 = vmatprep.subr.bf16.mxu0 0
        %534 = vmatpush1.bf16.msra.mxu0 0
        %535 = vmatprep.subr.bf16.mxu0 0
        %536 = vmatpush1.bf16.msra.mxu0 0
        %537 = vmatprep.subr.bf16.mxu0 0
        %538 = vmatpush1.bf16.msra.mxu0 0
        %539 = vmatprep.subr.bf16.mxu0 0
        %540 = vmatpush1.bf16.msra.mxu0 0
        %541 = vmatprep.subr.bf16.mxu0 0
        %542 = vmatpush1.bf16.msra.mxu0 0
        %543 = vmatprep.subr.bf16.mxu0 0
        %544 = vmatpush1.bf16.msra.mxu0 0
        %545 = vmatprep.subr.bf16.mxu0 0
        %546 = vmatpush1.bf16.msra.mxu0 0
        %547 = vmatprep.subr.bf16.mxu0 0
        %548 = vmatpush1.bf16.msra.mxu0 0
        %549 = vmatprep.subr.bf16.mxu0 0
        %550 = vmatpush1.bf16.msra.mxu0 0
        %551 = vmatprep.mubr.bf16.mxu0 0
        %552 = vmatmul.mubr.bf16.gmra.mrb[0].mxu0 %v517
        %v553 = vpop.f32.mrb[0].mxu0
        %v554 = vadd.f32 %v501, %v553
        %v555 = vpop.f32.mrb[0].mxu0
        %v556 = vpop.f32.mrb[0].mxu0
        %v557 = vpop.f32.mrb[0].mxu0
        %558 = vdwg.mxu0
        %v559 = vpack.c.bf16 %v488, %v488
        %v560 = vld [vmem:[%s5] sm:$0xf]
        %v561 = vld [vmem:[%s5 + $0x4] sm:$0xf]
        %v562 = vld [vmem:[%s5 + $0x8] sm:$0xf]
        %v563 = vld [vmem:[%s5 + $0xc] sm:$0xf]
        %v564 = vld [vmem:[%s6] sm:$0x1]
        %v566 = vlaneseq
        %v567 = vshrl.u32 %v566, 7
        %v568 = vsub.s32 0, %v567
        %v569 = vrot.slane %v564, %v568
        %v575 = vunpack.c.l.b16 %v560
        %v576 = vunpack.c.l.b16 %v561
        %v577 = vunpack.c.l.b16 %v562
        %v578 = vunpack.c.l.b16 %v563
        %v579 = vpack.c.b16 %v576, %v575
        %v580 = vpack.c.b16 %v578, %v577
        %v584 = vsel %vm515, %v559, 0
        %586 = vmatprep.subr.bf16.mxu0 0
        %587 = vmatpush1.bf16.msra.mxu0 %v579
        %588 = vmatprep.subr.bf16.mxu0 0
        %589 = vmatpush1.bf16.msra.mxu0 %v580
        %590 = vmatprep.subr.bf16.mxu0 0
        %591 = vmatpush1.bf16.msra.mxu0 0
        %592 = vmatprep.subr.bf16.mxu0 0
        %593 = vmatpush1.bf16.msra.mxu0 0
        %594 = vmatprep.subr.bf16.mxu0 0
        %595 = vmatpush1.bf16.msra.mxu0 0
        %596 = vmatprep.subr.bf16.mxu0 0
        %597 = vmatpush1.bf16.msra.mxu0 0
        %598 = vmatprep.subr.bf16.mxu0 0
        %599 = vmatpush1.bf16.msra.mxu0 0
        %600 = vmatprep.subr.bf16.mxu0 0
        %601 = vmatpush1.bf16.msra.mxu0 0
        %602 = vmatprep.subr.bf16.mxu0 0
        %603 = vmatpush1.bf16.msra.mxu0 0
        %604 = vmatprep.subr.bf16.mxu0 0
        %605 = vmatpush1.bf16.msra.mxu0 0
        %606 = vmatprep.subr.bf16.mxu0 0
        %607 = vmatpush1.bf16.msra.mxu0 0
        %608 = vmatprep.subr.bf16.mxu0 0
        %609 = vmatpush1.bf16.msra.mxu0 0
        %610 = vmatprep.subr.bf16.mxu0 0
        %611 = vmatpush1.bf16.msra.mxu0 0
        %612 = vmatprep.subr.bf16.mxu0 0
        %613 = vmatpush1.bf16.msra.mxu0 0
        %614 = vmatprep.subr.bf16.mxu0 0
        %615 = vmatpush1.bf16.msra.mxu0 0
        %616 = vmatprep.subr.bf16.mxu0 0
        %617 = vmatpush1.bf16.msra.mxu0 0
        %618 = vmatprep.mubr.bf16.mxu0 0
        %619 = vmatmul.mubr.bf16.gmra.mrb[0].mxu0 %v584
        %v620 = vpop.f32.mrb[0].mxu0
        %v621 = vadd.f32 %v569, %v620
        %v622 = vpop.f32.mrb[0].mxu0
        %v623 = vpop.f32.mrb[0].mxu0
        %v624 = vpop.f32.mrb[0].mxu0
        %625 = vdwg.mxu0
        %v626 = vmul.f32 %v554, 0.35355338
        %v627 = vpack.c.bf16 %v626, %v626
        %v628 = vpack.c.bf16 %v621, %v621
        %vm629 = vcmask 64512
        %v631 = vsel %vm629, %v627, 0
        %v634 = vsel %vm629, %v628, 0
        %636 = vmatprep.subr.bf16.mxu0 0
        %637 = vmatpush1.bf16.xpose.msra.mxu0 %v634
        %638 = vmatprep.subr.bf16.mxu0 0
        %639 = vmatpush1.bf16.xpose.msra.mxu0 0
        %640 = vmatprep.subr.bf16.mxu0 0
        %641 = vmatpush1.bf16.xpose.msra.mxu0 0
        %642 = vmatprep.subr.bf16.mxu0 0
        %643 = vmatpush1.bf16.xpose.msra.mxu0 0
        %644 = vmatprep.subr.bf16.mxu0 0
        %645 = vmatpush1.bf16.xpose.msra.mxu0 0
        %646 = vmatprep.subr.bf16.mxu0 0
        %647 = vmatpush1.bf16.xpose.msra.mxu0 0
        %648 = vmatprep.subr.bf16.mxu0 0
        %649 = vmatpush1.bf16.xpose.msra.mxu0 0
        %650 = vmatprep.subr.bf16.mxu0 0
        %651 = vmatpush1.bf16.xpose.msra.mxu0 0
        %652 = vmatprep.subr.bf16.mxu0 0
        %653 = vmatpush1.bf16.xpose.msra.mxu0 0
        %654 = vmatprep.subr.bf16.mxu0 0
        %655 = vmatpush1.bf16.xpose.msra.mxu0 0
        %656 = vmatprep.subr.bf16.mxu0 0
        %657 = vmatpush1.bf16.xpose.msra.mxu0 0
        %658 = vmatprep.subr.bf16.mxu0 0
        %659 = vmatpush1.bf16.xpose.msra.mxu0 0
        %660 = vmatprep.subr.bf16.mxu0 0
        %661 = vmatpush1.bf16.xpose.msra.mxu0 0
        %662 = vmatprep.subr.bf16.mxu0 0
        %663 = vmatpush1.bf16.xpose.msra.mxu0 0
        %664 = vmatprep.subr.bf16.mxu0 0
        %665 = vmatpush1.bf16.xpose.msra.mxu0 0
        %666 = vmatprep.subr.bf16.mxu0 0
        %667 = vmatpush1.bf16.xpose.msra.mxu0 0
        %668 = vmatprep.mubr.bf16.mxu0 0
        %669 = vmatmul.mubr.bf16.gmra.mrb[0].mxu0 %v631
        %v670 = vpop.f32.mrb[0].mxu0
        %v671 = vadd.f32 0.0, %v670
        %v672 = vpop.f32.mrb[0].mxu0
        %v673 = vpop.f32.mrb[0].mxu0
        %v674 = vpop.f32.mrb[0].mxu0
        %675 = vdwg.mxu0
        %v676 = vsel %vm490, 65537, 0
        %v677 = vunpack.c.l.b16 %v676
        %vm678 = vcmp.ne.s32.totalorder %v677, 0
        %v679 = vsel %vm678, 1, 0
        %v680 = vlaneseq
        %v681 = vshrl.u32 %v680, 7
        %v682 = vsub.s32 0, %v681
        %v683 = vrot.slane %v679, %v682
        %vm684 = vcmp.eq.s32.totalorder %v683, 1
        %v685 = vsel %vm684, %v671, -1e+10
        %v686 = vsel %vm629, %v685, -inf
        %687 = vmax.xlane.f32.xlu0 %v686
        %v688 = vpop.xlane.xlu0 %687
        %v689 = vsub.f32 %v685, %v688
        %v690 = vmul.f32 %v689, 1.442695
        %v691 = vpow.pop %v690
        %v692 = vsel %vm629, %v691, 0.0
        %693 = vadd.xlane.f32.xlu0 %v692
        %v694 = vpop.xlane.xlu0 %693
        %v695 = vrcp.pop %v694
        %v696 = vmul.f32 %v691, %v695
        %697 = vst.msk [vmem:[%s462] sm:$0xff] %vm629, %v696
        %v698 = vpack.c.bf16 %v696, %v696
        %700 = vrot.lane.b32.xlu0 %v628, 96
        %v701 = vpop.permute.xlu0 %700
        %v703 = vsel %vm629, %v698, 0
        %vm705 = vcmask 1043456
        %v707 = vsel %vm705, %v701, 0
        %709 = vmatprep.subr.bf16.mxu0 0
        %710 = vmatpush1.bf16.msra.mxu0 %v707
        %711 = vmatprep.subr.bf16.mxu0 0
        %712 = vmatpush1.bf16.msra.mxu0 0
        %713 = vmatprep.subr.bf16.mxu0 0
        %714 = vmatpush1.bf16.msra.mxu0 0
        %715 = vmatprep.subr.bf16.mxu0 0
        %716 = vmatpush1.bf16.msra.mxu0 0
        %717 = vmatprep.subr.bf16.mxu0 0
        %718 = vmatpush1.bf16.msra.mxu0 0
        %719 = vmatprep.subr.bf16.mxu0 0
        %720 = vmatpush1.bf16.msra.mxu0 0
        %721 = vmatprep.subr.bf16.mxu0 0
        %722 = vmatpush1.bf16.msra.mxu0 0
        %723 = vmatprep.subr.bf16.mxu0 0
        %724 = vmatpush1.bf16.msra.mxu0 0
        %725 = vmatprep.subr.bf16.mxu0 0
        %726 = vmatpush1.bf16.msra.mxu0 0
        %727 = vmatprep.subr.bf16.mxu0 0
        %728 = vmatpush1.bf16.msra.mxu0 0
        %729 = vmatprep.subr.bf16.mxu0 0
        %730 = vmatpush1.bf16.msra.mxu0 0
        %731 = vmatprep.subr.bf16.mxu0 0
        %732 = vmatpush1.bf16.msra.mxu0 0
        %733 = vmatprep.subr.bf16.mxu0 0
        %734 = vmatpush1.bf16.msra.mxu0 0
        %735 = vmatprep.subr.bf16.mxu0 0
        %736 = vmatpush1.bf16.msra.mxu0 0
        %737 = vmatprep.subr.bf16.mxu0 0
        %738 = vmatpush1.bf16.msra.mxu0 0
        %739 = vmatprep.subr.bf16.mxu0 0
        %740 = vmatpush1.bf16.msra.mxu0 0
        %741 = vmatprep.mubr.bf16.mxu0 0
        %742 = vmatmul.mubr.bf16.gmra.mrb[0].mxu0 %v703
        %v743 = vpop.f32.mrb[0].mxu0
        %v744 = vadd.f32 0.0, %v743
        %v745 = vpop.f32.mrb[0].mxu0
        %v746 = vpop.f32.mrb[0].mxu0
        %v747 = vpop.f32.mrb[0].mxu0
        %748 = vdwg.mxu0
        %749 = vst.msk [vmem:[#allocation2] sm:$0xff] %vm629, %v744
        %751 = vrot.lane.b32.xlu0 %v627, 120
        %v752 = vpop.permute.xlu0 %751
        %753 = vrot.lane.b32.xlu0 %v628, 120
        %v754 = vpop.permute.xlu0 %753
        %v756 = vsel %vm629, %v752, 0
        %v759 = vsel %vm629, %v754, 0
        %761 = vmatprep.subr.bf16.mxu0 0
        %762 = vmatpush1.bf16.xpose.msra.mxu0 %v759
        %763 = vmatprep.subr.bf16.mxu0 0
        %764 = vmatpush1.bf16.xpose.msra.mxu0 0
        %765 = vmatprep.subr.bf16.mxu0 0
        %766 = vmatpush1.bf16.xpose.msra.mxu0 0
        %767 = vmatprep.subr.bf16.mxu0 0
        %768 = vmatpush1.bf16.xpose.msra.mxu0 0
        %769 = vmatprep.subr.bf16.mxu0 0
        %770 = vmatpush1.bf16.xpose.msra.mxu0 0
        %771 = vmatprep.subr.bf16.mxu0 0
        %772 = vmatpush1.bf16.xpose.msra.mxu0 0
        %773 = vmatprep.subr.bf16.mxu0 0
        %774 = vmatpush1.bf16.xpose.msra.mxu0 0
        %775 = vmatprep.subr.bf16.mxu0 0
        %776 = vmatpush1.bf16.xpose.msra.mxu0 0
        %777 = vmatprep.subr.bf16.mxu0 0
        %778 = vmatpush1.bf16.xpose.msra.mxu0 0
        %779 = vmatprep.subr.bf16.mxu0 0
        %780 = vmatpush1.bf16.xpose.msra.mxu0 0
        %781 = vmatprep.subr.bf16.mxu0 0
        %782 = vmatpush1.bf16.xpose.msra.mxu0 0
        %783 = vmatprep.subr.bf16.mxu0 0
        %784 = vmatpush1.bf16.xpose.msra.mxu0 0
        %785 = vmatprep.subr.bf16.mxu0 0
        %786 = vmatpush1.bf16.xpose.msra.mxu0 0
        %787 = vmatprep.subr.bf16.mxu0 0
        %788 = vmatpush1.bf16.xpose.msra.mxu0 0
        %789 = vmatprep.subr.bf16.mxu0 0
        %790 = vmatpush1.bf16.xpose.msra.mxu0 0
        %791 = vmatprep.subr.bf16.mxu0 0
        %792 = vmatpush1.bf16.xpose.msra.mxu0 0
        %793 = vmatprep.mubr.bf16.mxu0 0
        %794 = vmatmul.mubr.bf16.gmra.mrb[0].mxu0 %v756
        %v795 = vpop.f32.mrb[0].mxu0
        %v796 = vadd.f32 0.0, %v795
        %v797 = vpop.f32.mrb[0].mxu0
        %v798 = vpop.f32.mrb[0].mxu0
        %v799 = vpop.f32.mrb[0].mxu0
        %800 = vdwg.mxu0
        %v801 = vsel %vm684, %v796, -1e+10
        %v802 = vsel %vm629, %v801, -inf
        %803 = vmax.xlane.f32.xlu0 %v802
        %v804 = vpop.xlane.xlu0 %803
        %v805 = vsub.f32 %v801, %v804
        %v806 = vmul.f32 %v805, 1.442695
        %v807 = vpow.pop %v806
        %v808 = vsel %vm629, %v807, 0.0
        %809 = vadd.xlane.f32.xlu0 %v808
        %v810 = vpop.xlane.xlu0 %809
        %v811 = vrcp.pop %v810
        %v812 = vmul.f32 %v807, %v811
        %s813 = scalar_lea.vmem %s462, 8 [#allocation3]
        %814 = vst.msk [vmem:[%s813] sm:$0xff] %vm629, %v812
        %v815 = vpack.c.bf16 %v812, %v812
        %816 = vrot.lane.b32.xlu0 %v628, 88
        %v817 = vpop.permute.xlu0 %816
        %v819 = vsel %vm629, %v815, 0
        %v822 = vsel %vm705, %v817, 0
        %824 = vmatprep.subr.bf16.mxu0 0
        %825 = vmatpush1.bf16.msra.mxu0 %v822
        %826 = vmatprep.subr.bf16.mxu0 0
        %827 = vmatpush1.bf16.msra.mxu0 0
        %828 = vmatprep.subr.bf16.mxu0 0
        %829 = vmatpush1.bf16.msra.mxu0 0
        %830 = vmatprep.subr.bf16.mxu0 0
        %831 = vmatpush1.bf16.msra.mxu0 0
        %832 = vmatprep.subr.bf16.mxu0 0
        %833 = vmatpush1.bf16.msra.mxu0 0
        %834 = vmatprep.subr.bf16.mxu0 0
        %835 = vmatpush1.bf16.msra.mxu0 0
        %836 = vmatprep.subr.bf16.mxu0 0
        %837 = vmatpush1.bf16.msra.mxu0 0
        %838 = vmatprep.subr.bf16.mxu0 0
        %839 = vmatpush1.bf16.msra.mxu0 0
        %840 = vmatprep.subr.bf16.mxu0 0
        %841 = vmatpush1.bf16.msra.mxu0 0
        %842 = vmatprep.subr.bf16.mxu0 0
        %843 = vmatpush1.bf16.msra.mxu0 0
        %844 = vmatprep.subr.bf16.mxu0 0
        %845 = vmatpush1.bf16.msra.mxu0 0
        %846 = vmatprep.subr.bf16.mxu0 0
        %847 = vmatpush1.bf16.msra.mxu0 0
        %848 = vmatprep.subr.bf16.mxu0 0
        %849 = vmatpush1.bf16.msra.mxu0 0
        %850 = vmatprep.subr.bf16.mxu0 0
        %851 = vmatpush1.bf16.msra.mxu0 0
        %852 = vmatprep.subr.bf16.mxu0 0
        %853 = vmatpush1.bf16.msra.mxu0 0
        %854 = vmatprep.subr.bf16.mxu0 0
        %855 = vmatpush1.bf16.msra.mxu0 0
        %856 = vmatprep.mubr.bf16.mxu0 0
        %857 = vmatmul.mubr.bf16.gmra.mrb[0].mxu0 %v819
        %v858 = vpop.f32.mrb[0].mxu0
        %v859 = vadd.f32 0.0, %v858
        %v860 = vpop.f32.mrb[0].mxu0
        %v861 = vpop.f32.mrb[0].mxu0
        %v862 = vpop.f32.mrb[0].mxu0
        %863 = vdwg.mxu0
        %865 = vrot.lane.b32.xlu0 %v859, 8
        %v866 = vpop.permute.xlu0 %865
        %vm868 = vcmask 130112
        %869 = vst.msk [vmem:[#allocation2] sm:$0xff] %vm868, %v866
        %870 = vrot.lane.b32.xlu0 %v627, 112
        %v871 = vpop.permute.xlu0 %870
        %872 = vrot.lane.b32.xlu0 %v628, 112
        %v873 = vpop.permute.xlu0 %872
        %v875 = vsel %vm629, %v871, 0
        %v878 = vsel %vm629, %v873, 0
        %880 = vmatprep.subr.bf16.mxu0 0
        %881 = vmatpush1.bf16.xpose.msra.mxu0 %v878
        %882 = vmatprep.subr.bf16.mxu0 0
        %883 = vmatpush1.bf16.xpose.msra.mxu0 0
        %884 = vmatprep.subr.bf16.mxu0 0
        %885 = vmatpush1.bf16.xpose.msra.mxu0 0
        %886 = vmatprep.subr.bf16.mxu0 0
        %887 = vmatpush1.bf16.xpose.msra.mxu0 0
        %888 = vmatprep.subr.bf16.mxu0 0
        %889 = vmatpush1.bf16.xpose.msra.mxu0 0
        %890 = vmatprep.subr.bf16.mxu0 0
        %891 = vmatpush1.bf16.xpose.msra.mxu0 0
        %892 = vmatprep.subr.bf16.mxu0 0
        %893 = vmatpush1.bf16.xpose.msra.mxu0 0
        %894 = vmatprep.subr.bf16.mxu0 0
        %895 = vmatpush1.bf16.xpose.msra.mxu0 0
        %896 = vmatprep.subr.bf16.mxu0 0
        %897 = vmatpush1.bf16.xpose.msra.mxu0 0
        %898 = vmatprep.subr.bf16.mxu0 0
        %899 = vmatpush1.bf16.xpose.msra.mxu0 0
        %900 = vmatprep.subr.bf16.mxu0 0
        %901 = vmatpush1.bf16.xpose.msra.mxu0 0
        %902 = vmatprep.subr.bf16.mxu0 0
        %903 = vmatpush1.bf16.xpose.msra.mxu0 0
        %904 = vmatprep.subr.bf16.mxu0 0
        %905 = vmatpush1.bf16.xpose.msra.mxu0 0
        %906 = vmatprep.subr.bf16.mxu0 0
        %907 = vmatpush1.bf16.xpose.msra.mxu0 0
        %908 = vmatprep.subr.bf16.mxu0 0
        %909 = vmatpush1.bf16.xpose.msra.mxu0 0
        %910 = vmatprep.subr.bf16.mxu0 0
        %911 = vmatpush1.bf16.xpose.msra.mxu0 0
        %912 = vmatprep.mubr.bf16.mxu0 0
        %913 = vmatmul.mubr.bf16.gmra.mrb[0].mxu0 %v875
        %v914 = vpop.f32.mrb[0].mxu0
        %v915 = vadd.f32 0.0, %v914
        %v916 = vpop.f32.mrb[0].mxu0
        %v917 = vpop.f32.mrb[0].mxu0
        %v918 = vpop.f32.mrb[0].mxu0
        %919 = vdwg.mxu0
        %v920 = vsel %vm684, %v915, -1e+10
        %v921 = vsel %vm629, %v920, -inf
        %922 = vmax.xlane.f32.xlu0 %v921
        %v923 = vpop.xlane.xlu0 %922
        %v924 = vsub.f32 %v920, %v923
        %v925 = vmul.f32 %v924, 1.442695
        %v926 = vpow.pop %v925
        %v927 = vsel %vm629, %v926, 0.0
        %928 = vadd.xlane.f32.xlu0 %v927
        %v929 = vpop.xlane.xlu0 %928
        %v930 = vrcp.pop %v929
        %v931 = vmul.f32 %v926, %v930
        %s932 = scalar_lea.vmem %s462, 16 [#allocation3]
        %933 = vst.msk [vmem:[%s932] sm:$0xff] %vm629, %v931
        %v934 = vpack.c.bf16 %v931, %v931
        %935 = vrot.lane.b32.xlu0 %v628, 80
        %v936 = vpop.permute.xlu0 %935
        %v938 = vsel %vm629, %v934, 0
        %v941 = vsel %vm705, %v936, 0
        %943 = vmatprep.subr.bf16.mxu0 0
        %944 = vmatpush1.bf16.msra.mxu0 %v941
        %945 = vmatprep.subr.bf16.mxu0 0
        %946 = vmatpush1.bf16.msra.mxu0 0
        %947 = vmatprep.subr.bf16.mxu0 0
        %948 = vmatpush1.bf16.msra.mxu0 0
        %949 = vmatprep.subr.bf16.mxu0 0
        %950 = vmatpush1.bf16.msra.mxu0 0
        %951 = vmatprep.subr.bf16.mxu0 0
        %952 = vmatpush1.bf16.msra.mxu0 0
        %953 = vmatprep.subr.bf16.mxu0 0
        %954 = vmatpush1.bf16.msra.mxu0 0
        %955 = vmatprep.subr.bf16.mxu0 0
        %956 = vmatpush1.bf16.msra.mxu0 0
        %957 = vmatprep.subr.bf16.mxu0 0
        %958 = vmatpush1.bf16.msra.mxu0 0
        %959 = vmatprep.subr.bf16.mxu0 0
        %960 = vmatpush1.bf16.msra.mxu0 0
        %961 = vmatprep.subr.bf16.mxu0 0
        %962 = vmatpush1.bf16.msra.mxu0 0
        %963 = vmatprep.subr.bf16.mxu0 0
        %964 = vmatpush1.bf16.msra.mxu0 0
        %965 = vmatprep.subr.bf16.mxu0 0
        %966 = vmatpush1.bf16.msra.mxu0 0
        %967 = vmatprep.subr.bf16.mxu0 0
        %968 = vmatpush1.bf16.msra.mxu0 0
        %969 = vmatprep.subr.bf16.mxu0 0
        %970 = vmatpush1.bf16.msra.mxu0 0
        %971 = vmatprep.subr.bf16.mxu0 0
        %972 = vmatpush1.bf16.msra.mxu0 0
        %973 = vmatprep.subr.bf16.mxu0 0
        %974 = vmatpush1.bf16.msra.mxu0 0
        %975 = vmatprep.mubr.bf16.mxu0 0
        %976 = vmatmul.mubr.bf16.gmra.mrb[0].mxu0 %v938
        %v977 = vpop.f32.mrb[0].mxu0
        %v978 = vadd.f32 0.0, %v977
        %v979 = vpop.f32.mrb[0].mxu0
        %v980 = vpop.f32.mrb[0].mxu0
        %v981 = vpop.f32.mrb[0].mxu0
        %982 = vdwg.mxu0
        %984 = vrot.lane.b32.xlu0 %v978, 16
        %v985 = vpop.permute.xlu0 %984
        %vm987 = vcmask 195712
        %988 = vst.msk [vmem:[#allocation2] sm:$0xff] %vm987, %v985
        %989 = vrot.lane.b32.xlu0 %v627, 104
        %v990 = vpop.permute.xlu0 %989
        %991 = vrot.lane.b32.xlu0 %v628, 104
        %v992 = vpop.permute.xlu0 %991
        %v994 = vsel %vm629, %v990, 0
        %v997 = vsel %vm629, %v992, 0
        %999 = vmatprep.subr.bf16.mxu0 0
        %1000 = vmatpush1.bf16.xpose.msra.mxu0 %v997
        %1001 = vmatprep.subr.bf16.mxu0 0
        %1002 = vmatpush1.bf16.xpose.msra.mxu0 0
        %1003 = vmatprep.subr.bf16.mxu0 0
        %1004 = vmatpush1.bf16.xpose.msra.mxu0 0
        %1005 = vmatprep.subr.bf16.mxu0 0
        %1006 = vmatpush1.bf16.xpose.msra.mxu0 0
        %1007 = vmatprep.subr.bf16.mxu0 0
        %1008 = vmatpush1.bf16.xpose.msra.mxu0 0
        %1009 = vmatprep.subr.bf16.mxu0 0
        %1010 = vmatpush1.bf16.xpose.msra.mxu0 0
        %1011 = vmatprep.subr.bf16.mxu0 0
        %1012 = vmatpush1.bf16.xpose.msra.mxu0 0
        %1013 = vmatprep.subr.bf16.mxu0 0
        %1014 = vmatpush1.bf16.xpose.msra.mxu0 0
        %1015 = vmatprep.subr.bf16.mxu0 0
        %1016 = vmatpush1.bf16.xpose.msra.mxu0 0
        %1017 = vmatprep.subr.bf16.mxu0 0
        %1018 = vmatpush1.bf16.xpose.msra.mxu0 0
        %1019 = vmatprep.subr.bf16.mxu0 0
        %1020 = vmatpush1.bf16.xpose.msra.mxu0 0
        %1021 = vmatprep.subr.bf16.mxu0 0
        %1022 = vmatpush1.bf16.xpose.msra.mxu0 0
        %1023 = vmatprep.subr.bf16.mxu0 0
        %1024 = vmatpush1.bf16.xpose.msra.mxu0 0
        %1025 = vmatprep.subr.bf16.mxu0 0
        %1026 = vmatpush1.bf16.xpose.msra.mxu0 0
        %1027 = vmatprep.subr.bf16.mxu0 0
        %1028 = vmatpush1.bf16.xpose.msra.mxu0 0
        %1029 = vmatprep.subr.bf16.mxu0 0
        %1030 = vmatpush1.bf16.xpose.msra.mxu0 0
        %1031 = vmatprep.mubr.bf16.mxu0 0
        %1032 = vmatmul.mubr.bf16.gmra.mrb[0].mxu0 %v994
        %v1033 = vpop.f32.mrb[0].mxu0
        %v1034 = vadd.f32 0.0, %v1033
        %v1035 = vpop.f32.mrb[0].mxu0
        %v1036 = vpop.f32.mrb[0].mxu0
        %v1037 = vpop.f32.mrb[0].mxu0
        %1038 = vdwg.mxu0
        %v1039 = vsel %vm684, %v1034, -1e+10
        %v1040 = vsel %vm629, %v1039, -inf
        %1041 = vmax.xlane.f32.xlu0 %v1040
        %v1042 = vpop.xlane.xlu0 %1041
        %v1043 = vsub.f32 %v1039, %v1042
        %v1044 = vmul.f32 %v1043, 1.442695
        %v1045 = vpow.pop %v1044
        %v1046 = vsel %vm629, %v1045, 0.0
        %1047 = vadd.xlane.f32.xlu0 %v1046
        %v1048 = vpop.xlane.xlu0 %1047
        %v1049 = vrcp.pop %v1048
        %v1050 = vmul.f32 %v1045, %v1049
        %s1051 = scalar_lea.vmem %s462, 24 [#allocation3]
        %1052 = vst.msk [vmem:[%s1051] sm:$0xff] %vm629, %v1050
        %v1053 = vpack.c.bf16 %v1050, %v1050
        %1054 = vrot.lane.b32.xlu0 %v628, 72
        %v1055 = vpop.permute.xlu0 %1054
        %v1057 = vsel %vm629, %v1053, 0
        %v1060 = vsel %vm705, %v1055, 0
        %1062 = vmatprep.subr.bf16.mxu0 0
        %1063 = vmatpush1.bf16.msra.mxu0 %v1060
        %1064 = vmatprep.subr.bf16.mxu0 0
        %1065 = vmatpush1.bf16.msra.mxu0 0
        %1066 = vmatprep.subr.bf16.mxu0 0
        %1067 = vmatpush1.bf16.msra.mxu0 0
        %1068 = vmatprep.subr.bf16.mxu0 0
        %1069 = vmatpush1.bf16.msra.mxu0 0
        %1070 = vmatprep.subr.bf16.mxu0 0
        %1071 = vmatpush1.bf16.msra.mxu0 0
        %1072 = vmatprep.subr.bf16.mxu0 0
        %1073 = vmatpush1.bf16.msra.mxu0 0
        %1074 = vmatprep.subr.bf16.mxu0 0
        %1075 = vmatpush1.bf16.msra.mxu0 0
        %1076 = vmatprep.subr.bf16.mxu0 0
        %1077 = vmatpush1.bf16.msra.mxu0 0
        %1078 = vmatprep.subr.bf16.mxu0 0
        %1079 = vmatpush1.bf16.msra.mxu0 0
        %1080 = vmatprep.subr.bf16.mxu0 0
        %1081 = vmatpush1.bf16.msra.mxu0 0
        %1082 = vmatprep.subr.bf16.mxu0 0
        %1083 = vmatpush1.bf16.msra.mxu0 0
        %1084 = vmatprep.subr.bf16.mxu0 0
        %1085 = vmatpush1.bf16.msra.mxu0 0
        %1086 = vmatprep.subr.bf16.mxu0 0
        %1087 = vmatpush1.bf16.msra.mxu0 0
        %1088 = vmatprep.subr.bf16.mxu0 0
        %1089 = vmatpush1.bf16.msra.mxu0 0
        %1090 = vmatprep.subr.bf16.mxu0 0
        %1091 = vmatpush1.bf16.msra.mxu0 0
        %1092 = vmatprep.subr.bf16.mxu0 0
        %1093 = vmatpush1.bf16.msra.mxu0 0
        %1094 = vmatprep.mubr.bf16.mxu0 0
        %1095 = vmatmul.mubr.bf16.gmra.mrb[0].mxu0 %v1057
        %v1096 = vpop.f32.mrb[0].mxu0
        %v1097 = vadd.f32 0.0, %v1096
        %v1098 = vpop.f32.mrb[0].mxu0
        %v1099 = vpop.f32.mrb[0].mxu0
        %v1100 = vpop.f32.mrb[0].mxu0
        %1101 = vdwg.mxu0
        %1103 = vrot.lane.b32.xlu0 %v1097, 24
        %v1104 = vpop.permute.xlu0 %1103
        %vm1106 = vcmask 261312
        %1107 = vst.msk [vmem:[#allocation2] sm:$0xff] %vm1106, %v1104
        %v1108 = vld [vmem:[#allocation2] sm:$0xff]
        %v1109 = vpack.c.bf16 %v1108, %v1108
        %v1110 = vld [vmem:[%s7] sm:$0xf]
        %v1111 = vld [vmem:[%s7 + $0x4] sm:$0xf]
        %v1112 = vld [vmem:[%s7 + $0x8] sm:$0xf]
        %v1113 = vld [vmem:[%s7 + $0xc] sm:$0xf]
        %v1114 = vld [vmem:[%s8] sm:$0x1]
        %v1116 = vlaneseq
        %v1117 = vshrl.u32 %v1116, 7
        %v1118 = vsub.s32 0, %v1117
        %v1119 = vrot.slane %v1114, %v1118
        %v1125 = vunpack.c.l.b16 %v1110
        %v1126 = vunpack.c.l.b16 %v1111
        %v1127 = vunpack.c.l.b16 %v1112
        %v1128 = vunpack.c.l.b16 %v1113
        %v1129 = vpack.c.b16 %v1126, %v1125
        %v1130 = vpack.c.b16 %v1128, %v1127
        %v1134 = vsel %vm515, %v1109, 0
        %1136 = vmatprep.subr.bf16.mxu0 0
        %1137 = vmatpush1.bf16.msra.mxu0 %v1129
        %1138 = vmatprep.subr.bf16.mxu0 0
        %1139 = vmatpush1.bf16.msra.mxu0 %v1130
        %1140 = vmatprep.subr.bf16.mxu0 0
        %1141 = vmatpush1.bf16.msra.mxu0 0
        %1142 = vmatprep.subr.bf16.mxu0 0
        %1143 = vmatpush1.bf16.msra.mxu0 0
        %1144 = vmatprep.subr.bf16.mxu0 0
        %1145 = vmatpush1.bf16.msra.mxu0 0
        %1146 = vmatprep.subr.bf16.mxu0 0
        %1147 = vmatpush1.bf16.msra.mxu0 0
        %1148 = vmatprep.subr.bf16.mxu0 0
        %1149 = vmatpush1.bf16.msra.mxu0 0
        %1150 = vmatprep.subr.bf16.mxu0 0
        %1151 = vmatpush1.bf16.msra.mxu0 0
        %1152 = vmatprep.subr.bf16.mxu0 0
        %1153 = vmatpush1.bf16.msra.mxu0 0
        %1154 = vmatprep.subr.bf16.mxu0 0
        %1155 = vmatpush1.bf16.msra.mxu0 0
        %1156 = vmatprep.subr.bf16.mxu0 0
        %1157 = vmatpush1.bf16.msra.mxu0 0
        %1158 = vmatprep.subr.bf16.mxu0 0
        %1159 = vmatpush1.bf16.msra.mxu0 0
        %1160 = vmatprep.subr.bf16.mxu0 0
        %1161 = vmatpush1.bf16.msra.mxu0 0
        %1162 = vmatprep.subr.bf16.mxu0 0
        %1163 = vmatpush1.bf16.msra.mxu0 0
        %1164 = vmatprep.subr.bf16.mxu0 0
        %1165 = vmatpush1.bf16.msra.mxu0 0
        %1166 = vmatprep.subr.bf16.mxu0 0
        %1167 = vmatpush1.bf16.msra.mxu0 0
        %1168 = vmatprep.mubr.bf16.mxu0 0
        %1169 = vmatmul.mubr.bf16.gmra.mrb[0].mxu0 %v1134
        %v1170 = vpop.f32.mrb[0].mxu0
        %v1171 = vadd.f32 %v1119, %v1170
        %v1172 = vpop.f32.mrb[0].mxu0
        %v1173 = vpop.f32.mrb[0].mxu0
        %v1174 = vpop.f32.mrb[0].mxu0
        %1175 = vdwg.mxu0
        %v1176 = vadd.f32 %v487, %v1171
        %v1177 = vsel %vm515, %v1176, 0.0
        %1178 = vadd.xlane.f32.xlu0 %v1177
        %v1179 = vpop.xlane.xlu0 %1178
        %v1180 = vrcp.pop 32.0
        %v1181 = vmul.f32 %v1179, %v1180
        %v1182 = vsub.f32 %v1176, %v1181
        %v1183 = vmul.f32 %v1182, %v1182
        %v1184 = vsel %vm515, %v1183, 0.0
        %1185 = vadd.xlane.f32.xlu0 %v1184
        %v1186 = vpop.xlane.xlu0 %1185
        %v1187 = vmul.f32 %v1186, %v1180
        %v1188 = vadd.f32 %v1187, 1e-05
        %v1189 = vrsqrt.pop %v1188
        %v1190 = vmul.f32 %v1182, %v1189
        %v1191 = vld [vmem:[%s9] sm:$0x1]
        %v1193 = vlaneseq
        %v1194 = vshrl.u32 %v1193, 7
        %v1195 = vsub.s32 0, %v1194
        %v1196 = vrot.slane %v1191, %v1195
        %v1198 = vmul.f32 %v1190, %v1196
        %v1199 = vld [vmem:[%s10] sm:$0x1]
        %v1201 = vlaneseq
        %v1202 = vshrl.u32 %v1201, 7
        %v1203 = vsub.s32 0, %v1202
        %v1204 = vrot.slane %v1199, %v1203
        %v1206 = vadd.f32 %v1198, %v1204
        %1207 = vst.msk [vmem:[%s483] sm:$0xff] %vm515, %v1206
        %p1208 = scmp.lt.s32.totalorder %s31, 1
        %s1209 = scalar_select %p1208, %s31, 1
        %p1210 = scmp.lt.s32.totalorder %s32, 0
        %s1211 = scalar_select %p1210, %s32, 0
        %s1212 = sadd.s32 %s1211, %s1209
        %s1213 = smul.addr %s1212, 8
        %s1214 = scalar_lea.vmem %s11, %s1213
        %s1215 = sand.u32 %s325, 1
        %s1216 = scalar_lea.sflag [#allocation4], %s1215
        %s1217 = sand.u32 %s325, 1
        %s1218 = smul.addr %s1217, 32
        %s1219 = scalar_lea.vmem [#allocation3], %s1218
        // Predicated region
        $region65: #{decoder_forward.11} parent=63 // pred_check
          %p1220 = pneg %p307
        $region66: #{decoder_forward.11} parent=63 // pred_check_branch
          %1222 = sbr.rel (%p1220) target = $region68
        $region67: #{decoder_forward.11} parent=63 // pred_region
          _
        $region68: #{decoder_forward.11} parent=63 // pred_fallthru
          _
        // Predicated region
        $region69: #{decoder_forward.11} parent=63 // pred_check
          %p1223 = pneg %p335
        $region70: #{decoder_forward.11} parent=63 // pred_check_branch
          %1225 = sbr.rel (%p1223) target = $region72
        $region71: #{decoder_forward.11} parent=63 // pred_region
          %s1227 = ssub.s32 512, 512
          %1228 = vsyncadd %s1216, %s1227
          %s1229 = smul.addr %s31, 4
          %s1230 = sadd.s32 %s32, %s1229
          %s1231 = smul.addr %s1230, 128
          %s1232 = scalar_lea.hbm %s12, %s1231
          %s1233 = sshll.u32 %s1219, 4
          %s1234 = int_to_ptr.vmem [resolvable:$true] %s1233
          %1239 = dma.vmem_to_hbm [thread:$0]  %s1234, 512, %s1232, %s1216, 128, 128, 8
        $region72: #{decoder_forward.11} parent=63 // pred_fallthru
          _
      $region64: #{decoder_forward.11} parent=5 // pred_fallthru
        _
      %p1240 = scmp.le.s32.totalorder 2, %s22
      // Predicated region
      $region73: #{decoder_forward.11} parent=5 // pred_check
        %p1241 = pneg %p1240
      $region74: #{decoder_forward.11} parent=5 // pred_check_branch
        %1243 = sbr.rel (%p1241) target = $region76
      $region75: #{decoder_forward.11} parent=5 // pred_region
        %s1244 = ssub.s32 %s22, 2
        // Predicated region
        $region77: #{decoder_forward.11} parent=75 // pred_check
          %p1245 = pneg %p313
        $region78: #{decoder_forward.11} parent=75 // pred_check_branch
          %1247 = sbr.rel (%p1245) target = $region80
        $region79: #{decoder_forward.11} parent=75 // pred_region
          %p1248 = scmp.lt.s32.totalorder %s33, 1
          %s1249 = scalar_select %p1248, %s33, 1
          %p1250 = scmp.lt.s32.totalorder %s34, 0
          %s1251 = scalar_select %p1250, %s34, 0
          %s1252 = sadd.s32 %s1251, %s1249
          %s1253 = smul.addr %s1252, 8
          %s1254 = scalar_lea.vmem %s11, %s1253
        $region80: #{decoder_forward.11} parent=75 // pred_fallthru
          _
        // Predicated region
        $region81: #{decoder_forward.11} parent=75 // pred_check
          %p1255 = pneg %p341
        $region82: #{decoder_forward.11} parent=75 // pred_check_branch
          %1257 = sbr.rel (%p1255) target = $region84
        $region83: #{decoder_forward.11} parent=75 // pred_region
          %s1258 = sand.u32 %s326, 1
          %s1259 = scalar_lea.sflag [#allocation4], %s1258
          %s1260 = sand.u32 %s326, 1
          %s1261 = smul.addr %s1260, 32
          %s1262 = scalar_lea.vmem [#allocation3], %s1261
          %1263 = dma.done %s1259, 512
        $region84: #{decoder_forward.11} parent=75 // pred_fallthru
          _
      $region76: #{decoder_forward.11} parent=5 // pred_fallthru
        _
    $region6: #{decoder_forward.11} parent=1 // loop_footer
      %s26 = sadd.s32 1, %s22
    $region7: #{decoder_forward.11} parent=1 // loop_footer_branch
      %21 = sbr.rel target = $region3
    $region8: #{decoder_forward.11} parent=1 // loop_exit
      _
    %1264 = vsyncpa [#allocation4], 1
    %s1265 = scalar_lea.sflag [#allocation4], 1
    %1266 = vsyncpa %s1265, 1

// kernel: decoder_forward.13
$region0: #{decoder_forward.13}
  #allocation0 [shape = 'u32[]', space=smem, size = 0x4, offset = 0x4, fixed_abs, tag = 'smem constant byte address 0x4 - core index']
  #allocation1 [shape = 'u32[144,128]{1,0:T(1,128)}', space=vmem, size = 0x12000, scoped, tag = 'internal scratch']
  %s0 = inlined_call_operand.vmem [shape: f32[16,32], index: 0, kind: input, shape index: {}]
  %s1 = inlined_call_operand.vmem [shape: bf16[32,128], index: 1, kind: input, shape index: {}]
  %s2 = inlined_call_operand.vmem [shape: f32[1,128], index: 2, kind: input, shape index: {}]
  %s3 = inlined_call_operand.vmem [shape: f32[16,128], index: 3, kind: output, shape index: {}]
  %s4 = sld [smem:[#allocation0]]
  $region22: #{decoder_forward.13} parent=0
    _
  %s6 = ssub.s32 1, %s4
  %s7 = scalar_select 0, %s6, %s4
  // Predicated region
  $region2: #{decoder_forward.13} parent=0 // pred_check
    _
  $region3: #{decoder_forward.13} parent=0 // pred_check_branch
    %9 = sbr.rel (0) target = $region5
  $region4: #{decoder_forward.13} parent=0 // pred_region
    _
  $region5: #{decoder_forward.13} parent=0 // pred_fallthru
    _
  // Predicated region
  $region6: #{decoder_forward.13} parent=0 // pred_check
    _
  $region7: #{decoder_forward.13} parent=0 // pred_check_branch
    %11 = sbr.rel (0) target = $region9
  $region8: #{decoder_forward.13} parent=0 // pred_region
    _
  $region9: #{decoder_forward.13} parent=0 // pred_fallthru
    _
  // Predicated region
  $region10: #{decoder_forward.13} parent=0 // pred_check
    _
  $region11: #{decoder_forward.13} parent=0 // pred_check_branch
    %13 = sbr.rel (0) target = $region13
  $region12: #{decoder_forward.13} parent=0 // pred_region
    _
  $region13: #{decoder_forward.13} parent=0 // pred_fallthru
    _
  %v15 = vld [vmem:[%s0] sm:$0xff]
  %v16 = vld [vmem:[%s0 + $0x8] sm:$0xff]
  %v17 = vpack.c.bf16 %v16, %v15
  %v18 = vld [vmem:[%s1] sm:$0xf]
  %v19 = vld [vmem:[%s1 + $0x4] sm:$0xf]
  %v20 = vld [vmem:[%s1 + $0x8] sm:$0xf]
  %v21 = vld [vmem:[%s1 + $0xc] sm:$0xf]
  %v22 = vld [vmem:[%s2] sm:$0x1]
  %v24 = vlaneseq
  %v25 = vshrl.u32 %v24, 7
  %v26 = vsub.s32 0, %v25
  %v27 = vrot.slane %v22, %v26
  %v33 = vunpack.c.l.b16 %v18
  %v34 = vunpack.c.l.b16 %v19
  %v35 = vunpack.c.l.b16 %v20
  %v36 = vunpack.c.l.b16 %v21
  %v37 = vpack.c.b16 %v34, %v33
  %v38 = vpack.c.b16 %v36, %v35
  %vm41 = vcmask 261120
  %v43 = vsel %vm41, %v17, 0
  %45 = vmatprep.subr.bf16.mxu0 0
  %46 = vmatpush1.bf16.msra.mxu0 %v37
  %47 = vmatprep.subr.bf16.mxu0 0
  %48 = vmatpush1.bf16.msra.mxu0 %v38
  %49 = vmatprep.subr.bf16.mxu0 0
  %50 = vmatpush1.bf16.msra.mxu0 0
  %51 = vmatprep.subr.bf16.mxu0 0
  %52 = vmatpush1.bf16.msra.mxu0 0
  %53 = vmatprep.subr.bf16.mxu0 0
  %54 = vmatpush1.bf16.msra.mxu0 0
  %55 = vmatprep.subr.bf16.mxu0 0
  %56 = vmatpush1.bf16.msra.mxu0 0
  %57 = vmatprep.subr.bf16.mxu0 0
  %58 = vmatpush1.bf16.msra.mxu0 0
  %59 = vmatprep.subr.bf16.mxu0 0
  %60 = vmatpush1.bf16.msra.mxu0 0
  %61 = vmatprep.subr.bf16.mxu0 0
  %62 = vmatpush1.bf16.msra.mxu0 0
  %63 = vmatprep.subr.bf16.mxu0 0
  %64 = vmatpush1.bf16.msra.mxu0 0
  %65 = vmatprep.subr.bf16.mxu0 0
  %66 = vmatpush1.bf16.msra.mxu0 0
  %67 = vmatprep.subr.bf16.mxu0 0
  %68 = vmatpush1.bf16.msra.mxu0 0
  %69 = vmatprep.subr.bf16.mxu0 0
  %70 = vmatpush1.bf16.msra.mxu0 0
  %71 = vmatprep.subr.bf16.mxu0 0
  %72 = vmatpush1.bf16.msra.mxu0 0
  %73 = vmatprep.subr.bf16.mxu0 0
  %74 = vmatpush1.bf16.msra.mxu0 0
  %75 = vmatprep.subr.bf16.mxu0 0
  %76 = vmatpush1.bf16.msra.mxu0 0
  %77 = vmatprep.mubr.bf16.mxu0 0
  %78 = vmatmul.mubr.bf16.gmra.mrb[0].mxu0 %v43
  %v79 = vpop.f32.mrb[0].mxu0
  %v80 = vadd.f32 %v27, %v79
  %v81 = vpop.f32.mrb[0].mxu0
  %v82 = vpop.f32.mrb[0].mxu0
  %v83 = vadd.f32 %v27, %v82
  %v84 = vpop.f32.mrb[0].mxu0
  %85 = vdwg.mxu0
  %86 = vst [vmem:[%s3] sm:$0xff] %v80
  %87 = vst [vmem:[%s3 + $0x8] sm:$0xff] %v83
  // Predicated region
  $region14: #{decoder_forward.13} parent=0 // pred_check
    _
  $region15: #{decoder_forward.13} parent=0 // pred_check_branch
    %89 = sbr.rel (0) target = $region17
  $region16: #{decoder_forward.13} parent=0 // pred_region
    _
  $region17: #{decoder_forward.13} parent=0 // pred_fallthru
    _
  // Predicated region
  $region18: #{decoder_forward.13} parent=0 // pred_check
    _
  $region19: #{decoder_forward.13} parent=0 // pred_check_branch
    %91 = sbr.rel (0) target = $region21
  $region20: #{decoder_forward.13} parent=0 // pred_region
    _
  $region21: #{decoder_forward.13} parent=0 // pred_fallthru
    _

</llo_original>
